<compile_context>
chip_gen: v6e
topology: v6e:2x2x1
jax: 0.10.0
libtpu: 0.0.40
codegen_flags: <defaults>
</compile_context>

<pallas_src>
import jax
import jax.numpy as jnp
from jax.experimental import pallas as pl
from jax.experimental.pallas import tpu as pltpu


# ----------------------------- architecture ------------------------------- #

NUM_CLASSES = 10
IMAGE_WIDTH = 16
NUM_LAYERS = 2
FIRST_FILTERS = 16
BATCH = 2

C_IN = 3
C1 = FIRST_FILTERS            # 16
C2 = 2 * FIRST_FILTERS        # 32
H0 = IMAGE_WIDTH              # 16  conv1 spatial
H1 = H0 // 2                  # 8   after pool1 / conv2 spatial
H2 = H0 // 4                  # 4   after pool2
FEAT = C2 * H2 * H2           # 512 flattened features
HIDDEN = 512
NC_PAD = 128                  # fc2 output padded to a full lane group


# ------------------------------ Pallas kernel ------------------------------ #

def _conv3x3_relu_pool(x_nhwc, xp_ref, pat_ref, w_ref, b_ref, H, Cin, Cout):
    """One sample: 3x3 conv (stride 1, pad 1) + ReLU + 2x2/2 max-pool.

    x_nhwc : (H, H, Cin) f32 value
    xp_ref : (H+2, H+2, Cin) f32 VMEM scratch (halo-padded input)
    pat_ref: (H*H, 9*Cin)   f32 VMEM scratch (im2col patch matrix)
    w_ref  : (9*Cin, Cout)  bf16 weights, rows in (ky, kx, cin) order
    b_ref  : (1, Cout)      f32 bias
    returns: (H//2, H//2, Cout) f32 value
    """
    # In-kernel halo padding.
    xp_ref[...] = jnp.zeros_like(xp_ref)
    xp_ref[1:H + 1, 1:H + 1, :] = x_nhwc
    xp = xp_ref[...]

    # im2col patch matrix (column order matches the (ky, kx, cin) weight rows).
    for dy in range(3):
        for dx in range(3):
            k = dy * 3 + dx
            pat_ref[:, k * Cin:(k + 1) * Cin] = (
                xp[dy:dy + H, dx:dx + H, :].reshape(H * H, Cin))

    # Single MXU dot (bf16 operands, f32 accumulation) + bias + ReLU.
    acc = jnp.dot(pat_ref[...].astype(jnp.bfloat16), w_ref[...],
                  preferred_element_type=jnp.float32)            # (H*H, Cout)
    acc = jnp.maximum(acc + b_ref[...], 0.0)

    # 2x2 max-pool, stride 2, register-resident (lane dim Cout kept fixed).
    acc = acc.reshape(H * H // 2, 2, Cout)                       # pair over w
    acc = jnp.maximum(acc[:, 0, :], acc[:, 1, :])                # (H*H/2, Cout)
    acc = acc.reshape(H // 2, 2, H // 2, Cout)                   # pair over h
    return jnp.maximum(acc[:, 0, :, :], acc[:, 1, :, :])         # (H/2, H/2, Cout)


def simple_cnn_kernel(x_ref, w1_ref, b1_ref, w2_ref, b2_ref,
                      fc1w_ref, fc1b_ref, fc2w_ref, fc2b_ref,
                      out_ref,
                      xp1_ref, pat1_ref, xp2_ref, pat2_ref, flat_ref):
    """Full forward pass for one sample (grid is over the batch)."""
    # Feature extractor.
    p1 = _conv3x3_relu_pool(x_ref[0], xp1_ref, pat1_ref, w1_ref, b1_ref,
                            H0, C_IN, C1)                        # (8, 8, 16)
    p2 = _conv3x3_relu_pool(p1, xp2_ref, pat2_ref, w2_ref, b2_ref,
                            H1, C1, C2)                          # (4, 4, 32)

    # Dropout(0.2) is identity at inference.
    # TODO(synk): training-mode dropout (pltpu.prng_random_bits masking) not implemented.

    # Flatten in NHWC order (fc1 weight rows were permuted to match at init).
    p2 = p2.reshape(H2 * H2, C2)                                 # (16, 32)
    for r in range(H2 * H2):
        flat_ref[:, r * C2:(r + 1) * C2] = p2[r:r + 1, :]

    # Classifier: Linear -> ReLU -> (Dropout 0.45: identity) -> Linear.
    h = jnp.dot(flat_ref[...].astype(jnp.bfloat16), fc1w_ref[...],
                preferred_element_type=jnp.float32) + fc1b_ref[...]
    h = jnp.maximum(h, 0.0)                                      # (1, 512)
    out_ref[0] = (jnp.dot(h.astype(jnp.bfloat16), fc2w_ref[...],
                          preferred_element_type=jnp.float32)
                  + fc2b_ref[...])                               # (1, 128)


# ------------------------------- JAX wrapper ------------------------------- #

def simple_cnn_forward(params, x_nchw):
    w1, b1, w2, b2, fc1w, fc1b, fc2w, fc2b = params
    N = x_nchw.shape[0]
    x = jnp.transpose(x_nchw, (0, 2, 3, 1)).astype(jnp.float32)  # NCHW -> NHWC

    grid_spec = pltpu.PrefetchScalarGridSpec(
        num_scalar_prefetch=0,
        grid=(N,),
        in_specs=[
            pl.BlockSpec((1, H0, H0, C_IN), lambda n: (n, 0, 0, 0)),
            pl.BlockSpec((9 * C_IN, C1), lambda n: (0, 0)),
            pl.BlockSpec((1, C1), lambda n: (0, 0)),
            pl.BlockSpec((9 * C1, C2), lambda n: (0, 0)),
            pl.BlockSpec((1, C2), lambda n: (0, 0)),
            pl.BlockSpec((FEAT, HIDDEN), lambda n: (0, 0)),
            pl.BlockSpec((1, HIDDEN), lambda n: (0, 0)),
            pl.BlockSpec((HIDDEN, NC_PAD), lambda n: (0, 0)),
            pl.BlockSpec((1, NC_PAD), lambda n: (0, 0)),
        ],
        out_specs=pl.BlockSpec((1, 1, NC_PAD), lambda n: (n, 0, 0)),
        scratch_shapes=[
            pltpu.VMEM((H0 + 2, H0 + 2, C_IN), jnp.float32),     # padded input, layer 1
            pltpu.VMEM((H0 * H0, 9 * C_IN), jnp.float32),        # im2col patches, layer 1
            pltpu.VMEM((H1 + 2, H1 + 2, C1), jnp.float32),       # padded input, layer 2
            pltpu.VMEM((H1 * H1, 9 * C1), jnp.float32),          # im2col patches, layer 2
            pltpu.VMEM((1, FEAT), jnp.float32),                  # flattened features
        ],
    )

    out = pl.pallas_call(
        simple_cnn_kernel,
        out_shape=jax.ShapeDtypeStruct((N, 1, NC_PAD), jnp.float32),
        grid_spec=grid_spec,
        compiler_params=pltpu.CompilerParams(
            dimension_semantics=("parallel",)),                  # v7x: 2 TCs
    )(x, w1, b1, w2, b2, fc1w, fc1b, fc2w, fc2b)

    return out.reshape(N, NC_PAD)[:, :NUM_CLASSES]


def init_params(key):
    """Deterministic synthetic parameters in kernel layout.

    Conv weights are (9*Cin, Cout): torch's (Cout, Cin, 3, 3) permuted to
    (ky, kx, Cin, Cout) and flattened over (ky, kx, Cin).
    fc1 weight is (FEAT, 512) with rows in NHWC-flatten order, i.e. torch's
    fc1.weight.T with rows permuted from (C, H, W) to (H, W, C) order.
    fc2 weight/bias are zero-padded from NUM_CLASSES to NC_PAD output columns.
    """
    ks = jax.random.split(key, 8)
    w1 = (jax.random.normal(ks[0], (9 * C_IN, C1), jnp.float32) * 0.05
          ).astype(jnp.bfloat16)
    b1 = jax.random.normal(ks[1], (1, C1), jnp.float32) * 0.05
    w2 = (jax.random.normal(ks[2], (9 * C1, C2), jnp.float32) * 0.05
          ).astype(jnp.bfloat16)
    b2 = jax.random.normal(ks[3], (1, C2), jnp.float32) * 0.05
    fc1w = (jax.random.normal(ks[4], (FEAT, HIDDEN), jnp.float32) * 0.02
            ).astype(jnp.bfloat16)
    fc1b = jax.random.normal(ks[5], (1, HIDDEN), jnp.float32) * 0.02
    fc2w_raw = jax.random.normal(ks[6], (HIDDEN, NUM_CLASSES), jnp.float32) * 0.02
    fc2b_raw = jax.random.normal(ks[7], (1, NUM_CLASSES), jnp.float32) * 0.02
    fc2w = (jnp.zeros((HIDDEN, NC_PAD), jnp.float32)
            .at[:, :NUM_CLASSES].set(fc2w_raw).astype(jnp.bfloat16))
    fc2b = jnp.zeros((1, NC_PAD), jnp.float32).at[:, :NUM_CLASSES].set(fc2b_raw)
    return (w1, b1, w2, b2, fc1w, fc1b, fc2w, fc2b)


def reference_forward(params, x_nchw):
    """Pure-JAX reference using the same bf16-operand / f32-accumulate recipe."""
    w1, b1, w2, b2, fc1w, fc1b, fc2w, fc2b = params
    x = jnp.transpose(x_nchw, (0, 2, 3, 1)).astype(jnp.float32)
    for (w, b) in ((w1, b1), (w2, b2)):
        N, H, _, Cin = x.shape
        Cout = w.shape[1]
        xp = jnp.pad(x, ((0, 0), (1, 1), (1, 1), (0, 0)))
        cols = [xp[:, dy:dy + H, dx:dx + H, :]
                for dy in range(3) for dx in range(3)]
        patches = jnp.concatenate(cols, axis=-1).reshape(N * H * H, 9 * Cin)
        y = jnp.dot(patches.astype(jnp.bfloat16), w,
                    preferred_element_type=jnp.float32)
        y = jnp.maximum(y + b, 0.0).reshape(N, H, H, Cout)
        x = y.reshape(N, H // 2, 2, H // 2, 2, Cout).max(axis=(2, 4))
    flat = x.reshape(x.shape[0], -1)     # NHWC flatten (matches fc1w row order)
    h = jnp.maximum(jnp.dot(flat.astype(jnp.bfloat16), fc1w,
                            preferred_element_type=jnp.float32) + fc1b, 0.0)
    logits = jnp.dot(h.astype(jnp.bfloat16), fc2w,
                     preferred_element_type=jnp.float32) + fc2b
    return logits[:, :NUM_CLASSES]


if __name__ == "__main__":
    assert IMAGE_WIDTH % (2 ** NUM_LAYERS) == 0, "pooling needs even spatial dims"

    key = jax.random.PRNGKey(0)
    pkey, xkey = jax.random.split(key)
    params = init_params(pkey)
    x = jax.random.normal(xkey, (BATCH, C_IN, IMAGE_WIDTH, IMAGE_WIDTH), jnp.float32)

    fwd = jax.jit(simple_cnn_forward)
    out = jax.block_until_ready(fwd(params, x))
    assert out.shape == (BATCH, NUM_CLASSES), out.shape
    assert out.dtype == jnp.float32

    ref = jax.block_until_ready(jax.jit(reference_forward)(params, x))
    err = float(jnp.max(jnp.abs(out - ref)))
    assert err < 5e-2, f"max abs error vs reference: {err}"

    print("KERNEL_OK")
</pallas_src>

<mosaic_0001>
module attributes {stable_mosaic.version = 11 : i64} {
  func.func @simple_cnn_kernel(%arg0: i32, %arg1: memref<1x16x16x3xf32, #tpu.memory_space<vmem>>, %arg2: memref<27x16xbf16, #tpu.memory_space<vmem>>, %arg3: memref<1x16xf32, #tpu.memory_space<vmem>>, %arg4: memref<144x32xbf16, #tpu.memory_space<vmem>>, %arg5: memref<1x32xf32, #tpu.memory_space<vmem>>, %arg6: memref<512x512xbf16, #tpu.memory_space<vmem>>, %arg7: memref<1x512xf32, #tpu.memory_space<vmem>>, %arg8: memref<512x128xbf16, #tpu.memory_space<vmem>>, %arg9: memref<1x128xf32, #tpu.memory_space<vmem>>, %arg10: memref<1x1x128xf32, #tpu.memory_space<vmem>>, %arg11: memref<18x18x3xf32, #tpu.memory_space<vmem>>, %arg12: memref<256x27xf32, #tpu.memory_space<vmem>>, %arg13: memref<10x10x16xf32, #tpu.memory_space<vmem>>, %arg14: memref<64x144xf32, #tpu.memory_space<vmem>>, %arg15: memref<1x512xf32, #tpu.memory_space<vmem>>) attributes {dimension_semantics = [#tpu.dimension_semantics<parallel>], iteration_bounds = array<i64: 2>, scalar_prefetch = 0 : i64, scratch_operands = 5 : i64, tpu.core_type = #tpu.core_type<tc>, window_params = [{transform_indices = @transform_0, window_bounds = array<i64: 1, 16, 16, 3>}, {pipeline_mode = #tpu.pipeline_mode<synchronous>, transform_indices = @transform_1, window_bounds = array<i64: 27, 16>}, {pipeline_mode = #tpu.pipeline_mode<synchronous>, transform_indices = @transform_2, window_bounds = array<i64: 1, 16>}, {pipeline_mode = #tpu.pipeline_mode<synchronous>, transform_indices = @transform_3, window_bounds = array<i64: 144, 32>}, {pipeline_mode = #tpu.pipeline_mode<synchronous>, transform_indices = @transform_4, window_bounds = array<i64: 1, 32>}, {pipeline_mode = #tpu.pipeline_mode<synchronous>, transform_indices = @transform_5, window_bounds = array<i64: 512, 512>}, {pipeline_mode = #tpu.pipeline_mode<synchronous>, transform_indices = @transform_6, window_bounds = array<i64: 1, 512>}, {pipeline_mode = #tpu.pipeline_mode<synchronous>, transform_indices = @transform_7, window_bounds = array<i64: 512, 128>}, {pipeline_mode = #tpu.pipeline_mode<synchronous>, transform_indices = @transform_8, window_bounds = array<i64: 1, 128>}, {transform_indices = @transform_9, window_bounds = array<i64: 1, 1, 128>}]} {
    %c0 = arith.constant 0 : index
    %c0_0 = arith.constant 0 : index
    %c0_1 = arith.constant 0 : index
    %c0_2 = arith.constant 0 : index
    %0 = vector.load %arg1[%c0, %c0_0, %c0_1, %c0_2] : memref<1x16x16x3xf32, #tpu.memory_space<vmem>>, vector<1x16x16x3xf32>
    %1 = vector.shape_cast %0 : vector<1x16x16x3xf32> to vector<16x16x3xf32>
    %cst = arith.constant 0.000000e+00 : f32
    %2 = vector.broadcast %cst : f32 to vector<18x18x3xf32>
    %c0_3 = arith.constant 0 : index
    %c0_4 = arith.constant 0 : index
    %c0_5 = arith.constant 0 : index
    %3 = vector.load %arg11[%c0_3, %c0_4, %c0_5] : memref<18x18x3xf32, #tpu.memory_space<vmem>>, vector<18x18x3xf32>
    tpu.vector_store %arg11[%c0_3, %c0_4, %c0_5], %2 {strides = array<i32>} : memref<18x18x3xf32, #tpu.memory_space<vmem>>, vector<18x18x3xf32>,
    %c1 = arith.constant 1 : index
    %c1_6 = arith.constant 1 : index
    %c0_7 = arith.constant 0 : index
    %4 = vector.load %arg11[%c1, %c1_6, %c0_7] : memref<18x18x3xf32, #tpu.memory_space<vmem>>, vector<16x16x3xf32>
    tpu.vector_store %arg11[%c1, %c1_6, %c0_7], %1 {strides = array<i32>} : memref<18x18x3xf32, #tpu.memory_space<vmem>>, vector<16x16x3xf32>,
    %c0_8 = arith.constant 0 : index
    %c0_9 = arith.constant 0 : index
    %c0_10 = arith.constant 0 : index
    %5 = vector.load %arg11[%c0_8, %c0_9, %c0_10] : memref<18x18x3xf32, #tpu.memory_space<vmem>>, vector<18x18x3xf32>
    %6 = vector.extract_strided_slice %5 {offsets = [0, 0, 0], sizes = [16, 16, 3], strides = [1, 1, 1]} : vector<18x18x3xf32> to vector<16x16x3xf32>
    %7 = vector.shape_cast %6 : vector<16x16x3xf32> to vector<256x3xf32>
    %c0_11 = arith.constant 0 : index
    %c0_12 = arith.constant 0 : index
    %8 = vector.load %arg12[%c0_11, %c0_12] : memref<256x27xf32, #tpu.memory_space<vmem>>, vector<256x3xf32>
    tpu.vector_store %arg12[%c0_11, %c0_12], %7 {strides = array<i32>} : memref<256x27xf32, #tpu.memory_space<vmem>>, vector<256x3xf32>,
    %9 = vector.extract_strided_slice %5 {offsets = [0, 1, 0], sizes = [16, 16, 3], strides = [1, 1, 1]} : vector<18x18x3xf32> to vector<16x16x3xf32>
    %10 = vector.shape_cast %9 : vector<16x16x3xf32> to vector<256x3xf32>
    %c0_13 = arith.constant 0 : index
    %c3 = arith.constant 3 : index
    %11 = vector.load %arg12[%c0_13, %c3] : memref<256x27xf32, #tpu.memory_space<vmem>>, vector<256x3xf32>
    tpu.vector_store %arg12[%c0_13, %c3], %10 {strides = array<i32>} : memref<256x27xf32, #tpu.memory_space<vmem>>, vector<256x3xf32>,
    %12 = vector.extract_strided_slice %5 {offsets = [0, 2, 0], sizes = [16, 16, 3], strides = [1, 1, 1]} : vector<18x18x3xf32> to vector<16x16x3xf32>
    %13 = vector.shape_cast %12 : vector<16x16x3xf32> to vector<256x3xf32>
    %c0_14 = arith.constant 0 : index
    %c6 = arith.constant 6 : index
    %14 = vector.load %arg12[%c0_14, %c6] : memref<256x27xf32, #tpu.memory_space<vmem>>, vector<256x3xf32>
    tpu.vector_store %arg12[%c0_14, %c6], %13 {strides = array<i32>} : memref<256x27xf32, #tpu.memory_space<vmem>>, vector<256x3xf32>,
    %15 = vector.extract_strided_slice %5 {offsets = [1, 0, 0], sizes = [16, 16, 3], strides = [1, 1, 1]} : vector<18x18x3xf32> to vector<16x16x3xf32>
    %16 = vector.shape_cast %15 : vector<16x16x3xf32> to vector<256x3xf32>
    %c0_15 = arith.constant 0 : index
    %c9 = arith.constant 9 : index
    %17 = vector.load %arg12[%c0_15, %c9] : memref<256x27xf32, #tpu.memory_space<vmem>>, vector<256x3xf32>
    tpu.vector_store %arg12[%c0_15, %c9], %16 {strides = array<i32>} : memref<256x27xf32, #tpu.memory_space<vmem>>, vector<256x3xf32>,
    %18 = vector.extract_strided_slice %5 {offsets = [1, 1, 0], sizes = [16, 16, 3], strides = [1, 1, 1]} : vector<18x18x3xf32> to vector<16x16x3xf32>
    %19 = vector.shape_cast %18 : vector<16x16x3xf32> to vector<256x3xf32>
    %c0_16 = arith.constant 0 : index
    %c12 = arith.constant 12 : index
    %20 = vector.load %arg12[%c0_16, %c12] : memref<256x27xf32, #tpu.memory_space<vmem>>, vector<256x3xf32>
    tpu.vector_store %arg12[%c0_16, %c12], %19 {strides = array<i32>} : memref<256x27xf32, #tpu.memory_space<vmem>>, vector<256x3xf32>,
    %21 = vector.extract_strided_slice %5 {offsets = [1, 2, 0], sizes = [16, 16, 3], strides = [1, 1, 1]} : vector<18x18x3xf32> to vector<16x16x3xf32>
    %22 = vector.shape_cast %21 : vector<16x16x3xf32> to vector<256x3xf32>
    %c0_17 = arith.constant 0 : index
    %c15 = arith.constant 15 : index
    %23 = vector.load %arg12[%c0_17, %c15] : memref<256x27xf32, #tpu.memory_space<vmem>>, vector<256x3xf32>
    tpu.vector_store %arg12[%c0_17, %c15], %22 {strides = array<i32>} : memref<256x27xf32, #tpu.memory_space<vmem>>, vector<256x3xf32>,
    %24 = vector.extract_strided_slice %5 {offsets = [2, 0, 0], sizes = [16, 16, 3], strides = [1, 1, 1]} : vector<18x18x3xf32> to vector<16x16x3xf32>
    %25 = vector.shape_cast %24 : vector<16x16x3xf32> to vector<256x3xf32>
    %c0_18 = arith.constant 0 : index
    %c18 = arith.constant 18 : index
    %26 = vector.load %arg12[%c0_18, %c18] : memref<256x27xf32, #tpu.memory_space<vmem>>, vector<256x3xf32>
    tpu.vector_store %arg12[%c0_18, %c18], %25 {strides = array<i32>} : memref<256x27xf32, #tpu.memory_space<vmem>>, vector<256x3xf32>,
    %27 = vector.extract_strided_slice %5 {offsets = [2, 1, 0], sizes = [16, 16, 3], strides = [1, 1, 1]} : vector<18x18x3xf32> to vector<16x16x3xf32>
    %28 = vector.shape_cast %27 : vector<16x16x3xf32> to vector<256x3xf32>
    %c0_19 = arith.constant 0 : index
    %c21 = arith.constant 21 : index
    %29 = vector.load %arg12[%c0_19, %c21] : memref<256x27xf32, #tpu.memory_space<vmem>>, vector<256x3xf32>
    tpu.vector_store %arg12[%c0_19, %c21], %28 {strides = array<i32>} : memref<256x27xf32, #tpu.memory_space<vmem>>, vector<256x3xf32>,
    %30 = vector.extract_strided_slice %5 {offsets = [2, 2, 0], sizes = [16, 16, 3], strides = [1, 1, 1]} : vector<18x18x3xf32> to vector<16x16x3xf32>
    %31 = vector.shape_cast %30 : vector<16x16x3xf32> to vector<256x3xf32>
    %c0_20 = arith.constant 0 : index
    %c24 = arith.constant 24 : index
    %32 = vector.load %arg12[%c0_20, %c24] : memref<256x27xf32, #tpu.memory_space<vmem>>, vector<256x3xf32>
    tpu.vector_store %arg12[%c0_20, %c24], %31 {strides = array<i32>} : memref<256x27xf32, #tpu.memory_space<vmem>>, vector<256x3xf32>,
    %c0_21 = arith.constant 0 : index
    %c0_22 = arith.constant 0 : index
    %33 = vector.load %arg12[%c0_21, %c0_22] : memref<256x27xf32, #tpu.memory_space<vmem>>, vector<256x27xf32>
    %34 = arith.truncf %33 : vector<256x27xf32> to vector<256x27xbf16>
    %c0_23 = arith.constant 0 : index
    %c0_24 = arith.constant 0 : index
    %35 = vector.load %arg2[%c0_23, %c0_24] : memref<27x16xbf16, #tpu.memory_space<vmem>>, vector<27x16xbf16>
    %cst_25 = arith.constant dense<0.000000e+00> : vector<256x16xf32>
    %36 = tpu.matmul %34, %35, %cst_25 {dimension_numbers = #tpu.dot_dimension_numbers<[1], [0], [0], [1], [0, 0, 1, 1], [], []>} : vector<256x27xbf16>, vector<27x16xbf16>, vector<256x16xf32> -> vector<256x16xf32>
    %c0_26 = arith.constant 0 : index
    %c0_27 = arith.constant 0 : index
    %37 = vector.load %arg3[%c0_26, %c0_27] : memref<1x16xf32, #tpu.memory_space<vmem>>, vector<1x16xf32>
    %38 = vector.broadcast %37 : vector<1x16xf32> to vector<256x16xf32>
    %39 = arith.addf %36, %38 : vector<256x16xf32>
    %cst_28 = arith.constant 0.000000e+00 : f32
    %40 = vector.broadcast %cst_28 : f32 to vector<256x16xf32>
    %41 = arith.maximumf %39, %40 : vector<256x16xf32>
    %42 = vector.shape_cast %41 : vector<256x16xf32> to vector<128x2x16xf32>
    %43 = vector.extract_strided_slice %42 {offsets = [0, 0, 0], sizes = [128, 1, 16], strides = [1, 1, 1]} : vector<128x2x16xf32> to vector<128x1x16xf32>
    %44 = vector.shape_cast %43 : vector<128x1x16xf32> to vector<128x16xf32>
    %45 = vector.extract_strided_slice %42 {offsets = [0, 1, 0], sizes = [128, 1, 16], strides = [1, 1, 1]} : vector<128x2x16xf32> to vector<128x1x16xf32>
    %46 = vector.shape_cast %45 : vector<128x1x16xf32> to vector<128x16xf32>
    %47 = arith.maximumf %44, %46 : vector<128x16xf32>
    %48 = vector.shape_cast %47 : vector<128x16xf32> to vector<8x2x8x16xf32>
    %49 = vector.extract_strided_slice %48 {offsets = [0, 0, 0, 0], sizes = [8, 1, 8, 16], strides = [1, 1, 1, 1]} : vector<8x2x8x16xf32> to vector<8x1x8x16xf32>
    %50 = vector.shape_cast %49 : vector<8x1x8x16xf32> to vector<8x8x16xf32>
    %51 = vector.extract_strided_slice %48 {offsets = [0, 1, 0, 0], sizes = [8, 1, 8, 16], strides = [1, 1, 1, 1]} : vector<8x2x8x16xf32> to vector<8x1x8x16xf32>
    %52 = vector.shape_cast %51 : vector<8x1x8x16xf32> to vector<8x8x16xf32>
    %53 = arith.maximumf %50, %52 : vector<8x8x16xf32>
    %cst_29 = arith.constant 0.000000e+00 : f32
    %54 = vector.broadcast %cst_29 : f32 to vector<10x10x16xf32>
    %c0_30 = arith.constant 0 : index
    %c0_31 = arith.constant 0 : index
    %c0_32 = arith.constant 0 : index
    %55 = vector.load %arg13[%c0_30, %c0_31, %c0_32] : memref<10x10x16xf32, #tpu.memory_space<vmem>>, vector<10x10x16xf32>
    tpu.vector_store %arg13[%c0_30, %c0_31, %c0_32], %54 {strides = array<i32>} : memref<10x10x16xf32, #tpu.memory_space<vmem>>, vector<10x10x16xf32>,
    %c1_33 = arith.constant 1 : index
    %c1_34 = arith.constant 1 : index
    %c0_35 = arith.constant 0 : index
    %56 = vector.load %arg13[%c1_33, %c1_34, %c0_35] : memref<10x10x16xf32, #tpu.memory_space<vmem>>, vector<8x8x16xf32>
    tpu.vector_store %arg13[%c1_33, %c1_34, %c0_35], %53 {strides = array<i32>} : memref<10x10x16xf32, #tpu.memory_space<vmem>>, vector<8x8x16xf32>,
    %c0_36 = arith.constant 0 : index
    %c0_37 = arith.constant 0 : index
    %c0_38 = arith.constant 0 : index
    %57 = vector.load %arg13[%c0_36, %c0_37, %c0_38] : memref<10x10x16xf32, #tpu.memory_space<vmem>>, vector<10x10x16xf32>
    %58 = vector.extract_strided_slice %57 {offsets = [0, 0, 0], sizes = [8, 8, 16], strides = [1, 1, 1]} : vector<10x10x16xf32> to vector<8x8x16xf32>
    %59 = vector.shape_cast %58 : vector<8x8x16xf32> to vector<64x16xf32>
    %c0_39 = arith.constant 0 : index
    %c0_40 = arith.constant 0 : index
    %60 = vector.load %arg14[%c0_39, %c0_40] : memref<64x144xf32, #tpu.memory_space<vmem>>, vector<64x16xf32>
    tpu.vector_store %arg14[%c0_39, %c0_40], %59 {strides = array<i32>} : memref<64x144xf32, #tpu.memory_space<vmem>>, vector<64x16xf32>,
    %61 = vector.extract_strided_slice %57 {offsets = [0, 1, 0], sizes = [8, 8, 16], strides = [1, 1, 1]} : vector<10x10x16xf32> to vector<8x8x16xf32>
    %62 = vector.shape_cast %61 : vector<8x8x16xf32> to vector<64x16xf32>
    %c0_41 = arith.constant 0 : index
    %c16 = arith.constant 16 : index
    %63 = vector.load %arg14[%c0_41, %c16] : memref<64x144xf32, #tpu.memory_space<vmem>>, vector<64x16xf32>
    tpu.vector_store %arg14[%c0_41, %c16], %62 {strides = array<i32>} : memref<64x144xf32, #tpu.memory_space<vmem>>, vector<64x16xf32>,
    %64 = vector.extract_strided_slice %57 {offsets = [0, 2, 0], sizes = [8, 8, 16], strides = [1, 1, 1]} : vector<10x10x16xf32> to vector<8x8x16xf32>
    %65 = vector.shape_cast %64 : vector<8x8x16xf32> to vector<64x16xf32>
    %c0_42 = arith.constant 0 : index
    %c32 = arith.constant 32 : index
    %66 = vector.load %arg14[%c0_42, %c32] : memref<64x144xf32, #tpu.memory_space<vmem>>, vector<64x16xf32>
    tpu.vector_store %arg14[%c0_42, %c32], %65 {strides = array<i32>} : memref<64x144xf32, #tpu.memory_space<vmem>>, vector<64x16xf32>,
    %67 = vector.extract_strided_slice %57 {offsets = [1, 0, 0], sizes = [8, 8, 16], strides = [1, 1, 1]} : vector<10x10x16xf32> to vector<8x8x16xf32>
    %68 = vector.shape_cast %67 : vector<8x8x16xf32> to vector<64x16xf32>
    %c0_43 = arith.constant 0 : index
    %c48 = arith.constant 48 : index
    %69 = vector.load %arg14[%c0_43, %c48] : memref<64x144xf32, #tpu.memory_space<vmem>>, vector<64x16xf32>
    tpu.vector_store %arg14[%c0_43, %c48], %68 {strides = array<i32>} : memref<64x144xf32, #tpu.memory_space<vmem>>, vector<64x16xf32>,
    %70 = vector.extract_strided_slice %57 {offsets = [1, 1, 0], sizes = [8, 8, 16], strides = [1, 1, 1]} : vector<10x10x16xf32> to vector<8x8x16xf32>
    %71 = vector.shape_cast %70 : vector<8x8x16xf32> to vector<64x16xf32>
    %c0_44 = arith.constant 0 : index
    %c64 = arith.constant 64 : index
    %72 = vector.load %arg14[%c0_44, %c64] : memref<64x144xf32, #tpu.memory_space<vmem>>, vector<64x16xf32>
    tpu.vector_store %arg14[%c0_44, %c64], %71 {strides = array<i32>} : memref<64x144xf32, #tpu.memory_space<vmem>>, vector<64x16xf32>,
    %73 = vector.extract_strided_slice %57 {offsets = [1, 2, 0], sizes = [8, 8, 16], strides = [1, 1, 1]} : vector<10x10x16xf32> to vector<8x8x16xf32>
    %74 = vector.shape_cast %73 : vector<8x8x16xf32> to vector<64x16xf32>
    %c0_45 = arith.constant 0 : index
    %c80 = arith.constant 80 : index
    %75 = vector.load %arg14[%c0_45, %c80] : memref<64x144xf32, #tpu.memory_space<vmem>>, vector<64x16xf32>
    tpu.vector_store %arg14[%c0_45, %c80], %74 {strides = array<i32>} : memref<64x144xf32, #tpu.memory_space<vmem>>, vector<64x16xf32>,
    %76 = vector.extract_strided_slice %57 {offsets = [2, 0, 0], sizes = [8, 8, 16], strides = [1, 1, 1]} : vector<10x10x16xf32> to vector<8x8x16xf32>
    %77 = vector.shape_cast %76 : vector<8x8x16xf32> to vector<64x16xf32>
    %c0_46 = arith.constant 0 : index
    %c96 = arith.constant 96 : index
    %78 = vector.load %arg14[%c0_46, %c96] : memref<64x144xf32, #tpu.memory_space<vmem>>, vector<64x16xf32>
    tpu.vector_store %arg14[%c0_46, %c96], %77 {strides = array<i32>} : memref<64x144xf32, #tpu.memory_space<vmem>>, vector<64x16xf32>,
    %79 = vector.extract_strided_slice %57 {offsets = [2, 1, 0], sizes = [8, 8, 16], strides = [1, 1, 1]} : vector<10x10x16xf32> to vector<8x8x16xf32>
    %80 = vector.shape_cast %79 : vector<8x8x16xf32> to vector<64x16xf32>
    %c0_47 = arith.constant 0 : index
    %c112 = arith.constant 112 : index
    %81 = vector.load %arg14[%c0_47, %c112] : memref<64x144xf32, #tpu.memory_space<vmem>>, vector<64x16xf32>
    tpu.vector_store %arg14[%c0_47, %c112], %80 {strides = array<i32>} : memref<64x144xf32, #tpu.memory_space<vmem>>, vector<64x16xf32>,
    %82 = vector.extract_strided_slice %57 {offsets = [2, 2, 0], sizes = [8, 8, 16], strides = [1, 1, 1]} : vector<10x10x16xf32> to vector<8x8x16xf32>
    %83 = vector.shape_cast %82 : vector<8x8x16xf32> to vector<64x16xf32>
    %c0_48 = arith.constant 0 : index
    %c128 = arith.constant 128 : index
    %84 = vector.load %arg14[%c0_48, %c128] : memref<64x144xf32, #tpu.memory_space<vmem>>, vector<64x16xf32>
    tpu.vector_store %arg14[%c0_48, %c128], %83 {strides = array<i32>} : memref<64x144xf32, #tpu.memory_space<vmem>>, vector<64x16xf32>,
    %c0_49 = arith.constant 0 : index
    %c0_50 = arith.constant 0 : index
    %85 = vector.load %arg14[%c0_49, %c0_50] : memref<64x144xf32, #tpu.memory_space<vmem>>, vector<64x144xf32>
    %86 = arith.truncf %85 : vector<64x144xf32> to vector<64x144xbf16>
    %c0_51 = arith.constant 0 : index
    %c0_52 = arith.constant 0 : index
    %87 = vector.load %arg4[%c0_51, %c0_52] : memref<144x32xbf16, #tpu.memory_space<vmem>>, vector<144x32xbf16>
    %cst_53 = arith.constant dense<0.000000e+00> : vector<64x32xf32>
    %88 = tpu.matmul %86, %87, %cst_53 {dimension_numbers = #tpu.dot_dimension_numbers<[1], [0], [0], [1], [0, 0, 1, 1], [], []>} : vector<64x144xbf16>, vector<144x32xbf16>, vector<64x32xf32> -> vector<64x32xf32>
    %c0_54 = arith.constant 0 : index
    %c0_55 = arith.constant 0 : index
    %89 = vector.load %arg5[%c0_54, %c0_55] : memref<1x32xf32, #tpu.memory_space<vmem>>, vector<1x32xf32>
    %90 = vector.broadcast %89 : vector<1x32xf32> to vector<64x32xf32>
    %91 = arith.addf %88, %90 : vector<64x32xf32>
    %cst_56 = arith.constant 0.000000e+00 : f32
    %92 = vector.broadcast %cst_56 : f32 to vector<64x32xf32>
    %93 = arith.maximumf %91, %92 : vector<64x32xf32>
    %94 = vector.shape_cast %93 : vector<64x32xf32> to vector<32x2x32xf32>
    %95 = vector.extract_strided_slice %94 {offsets = [0, 0, 0], sizes = [32, 1, 32], strides = [1, 1, 1]} : vector<32x2x32xf32> to vector<32x1x32xf32>
    %96 = vector.shape_cast %95 : vector<32x1x32xf32> to vector<32x32xf32>
    %97 = vector.extract_strided_slice %94 {offsets = [0, 1, 0], sizes = [32, 1, 32], strides = [1, 1, 1]} : vector<32x2x32xf32> to vector<32x1x32xf32>
    %98 = vector.shape_cast %97 : vector<32x1x32xf32> to vector<32x32xf32>
    %99 = arith.maximumf %96, %98 : vector<32x32xf32>
    %100 = vector.shape_cast %99 : vector<32x32xf32> to vector<4x2x4x32xf32>
    %101 = vector.extract_strided_slice %100 {offsets = [0, 0, 0, 0], sizes = [4, 1, 4, 32], strides = [1, 1, 1, 1]} : vector<4x2x4x32xf32> to vector<4x1x4x32xf32>
    %102 = vector.shape_cast %101 : vector<4x1x4x32xf32> to vector<4x4x32xf32>
    %103 = vector.extract_strided_slice %100 {offsets = [0, 1, 0, 0], sizes = [4, 1, 4, 32], strides = [1, 1, 1, 1]} : vector<4x2x4x32xf32> to vector<4x1x4x32xf32>
    %104 = vector.shape_cast %103 : vector<4x1x4x32xf32> to vector<4x4x32xf32>
    %105 = arith.maximumf %102, %104 : vector<4x4x32xf32>
    %106 = vector.shape_cast %105 : vector<4x4x32xf32> to vector<16x32xf32>
    %107 = vector.extract_strided_slice %106 {offsets = [0, 0], sizes = [1, 32], strides = [1, 1]} : vector<16x32xf32> to vector<1x32xf32>
    %c0_57 = arith.constant 0 : index
    %c0_58 = arith.constant 0 : index
    %108 = vector.load %arg15[%c0_57, %c0_58] : memref<1x512xf32, #tpu.memory_space<vmem>>, vector<1x32xf32>
    tpu.vector_store %arg15[%c0_57, %c0_58], %107 {strides = array<i32>} : memref<1x512xf32, #tpu.memory_space<vmem>>, vector<1x32xf32>,
    %109 = vector.extract_strided_slice %106 {offsets = [1, 0], sizes = [1, 32], strides = [1, 1]} : vector<16x32xf32> to vector<1x32xf32>
    %c0_59 = arith.constant 0 : index
    %c32_60 = arith.constant 32 : index
    %110 = vector.load %arg15[%c0_59, %c32_60] : memref<1x512xf32, #tpu.memory_space<vmem>>, vector<1x32xf32>
    tpu.vector_store %arg15[%c0_59, %c32_60], %109 {strides = array<i32>} : memref<1x512xf32, #tpu.memory_space<vmem>>, vector<1x32xf32>,
    %111 = vector.extract_strided_slice %106 {offsets = [2, 0], sizes = [1, 32], strides = [1, 1]} : vector<16x32xf32> to vector<1x32xf32>
    %c0_61 = arith.constant 0 : index
    %c64_62 = arith.constant 64 : index
    %112 = vector.load %arg15[%c0_61, %c64_62] : memref<1x512xf32, #tpu.memory_space<vmem>>, vector<1x32xf32>
    tpu.vector_store %arg15[%c0_61, %c64_62], %111 {strides = array<i32>} : memref<1x512xf32, #tpu.memory_space<vmem>>, vector<1x32xf32>,
    %113 = vector.extract_strided_slice %106 {offsets = [3, 0], sizes = [1, 32], strides = [1, 1]} : vector<16x32xf32> to vector<1x32xf32>
    %c0_63 = arith.constant 0 : index
    %c96_64 = arith.constant 96 : index
    %114 = vector.load %arg15[%c0_63, %c96_64] : memref<1x512xf32, #tpu.memory_space<vmem>>, vector<1x32xf32>
    tpu.vector_store %arg15[%c0_63, %c96_64], %113 {strides = array<i32>} : memref<1x512xf32, #tpu.memory_space<vmem>>, vector<1x32xf32>,
    %115 = vector.extract_strided_slice %106 {offsets = [4, 0], sizes = [1, 32], strides = [1, 1]} : vector<16x32xf32> to vector<1x32xf32>
    %c0_65 = arith.constant 0 : index
    %c128_66 = arith.constant 128 : index
    %116 = vector.load %arg15[%c0_65, %c128_66] : memref<1x512xf32, #tpu.memory_space<vmem>>, vector<1x32xf32>
    tpu.vector_store %arg15[%c0_65, %c128_66], %115 {strides = array<i32>} : memref<1x512xf32, #tpu.memory_space<vmem>>, vector<1x32xf32>,
    %117 = vector.extract_strided_slice %106 {offsets = [5, 0], sizes = [1, 32], strides = [1, 1]} : vector<16x32xf32> to vector<1x32xf32>
    %c0_67 = arith.constant 0 : index
    %c160 = arith.constant 160 : index
    %118 = vector.load %arg15[%c0_67, %c160] : memref<1x512xf32, #tpu.memory_space<vmem>>, vector<1x32xf32>
    tpu.vector_store %arg15[%c0_67, %c160], %117 {strides = array<i32>} : memref<1x512xf32, #tpu.memory_space<vmem>>, vector<1x32xf32>,
    %119 = vector.extract_strided_slice %106 {offsets = [6, 0], sizes = [1, 32], strides = [1, 1]} : vector<16x32xf32> to vector<1x32xf32>
    %c0_68 = arith.constant 0 : index
    %c192 = arith.constant 192 : index
    %120 = vector.load %arg15[%c0_68, %c192] : memref<1x512xf32, #tpu.memory_space<vmem>>, vector<1x32xf32>
    tpu.vector_store %arg15[%c0_68, %c192], %119 {strides = array<i32>} : memref<1x512xf32, #tpu.memory_space<vmem>>, vector<1x32xf32>,
    %121 = vector.extract_strided_slice %106 {offsets = [7, 0], sizes = [1, 32], strides = [1, 1]} : vector<16x32xf32> to vector<1x32xf32>
    %c0_69 = arith.constant 0 : index
    %c224 = arith.constant 224 : index
    %122 = vector.load %arg15[%c0_69, %c224] : memref<1x512xf32, #tpu.memory_space<vmem>>, vector<1x32xf32>
    tpu.vector_store %arg15[%c0_69, %c224], %121 {strides = array<i32>} : memref<1x512xf32, #tpu.memory_space<vmem>>, vector<1x32xf32>,
    %123 = vector.extract_strided_slice %106 {offsets = [8, 0], sizes = [1, 32], strides = [1, 1]} : vector<16x32xf32> to vector<1x32xf32>
    %c0_70 = arith.constant 0 : index
    %c256 = arith.constant 256 : index
    %124 = vector.load %arg15[%c0_70, %c256] : memref<1x512xf32, #tpu.memory_space<vmem>>, vector<1x32xf32>
    tpu.vector_store %arg15[%c0_70, %c256], %123 {strides = array<i32>} : memref<1x512xf32, #tpu.memory_space<vmem>>, vector<1x32xf32>,
    %125 = vector.extract_strided_slice %106 {offsets = [9, 0], sizes = [1, 32], strides = [1, 1]} : vector<16x32xf32> to vector<1x32xf32>
    %c0_71 = arith.constant 0 : index
    %c288 = arith.constant 288 : index
    %126 = vector.load %arg15[%c0_71, %c288] : memref<1x512xf32, #tpu.memory_space<vmem>>, vector<1x32xf32>
    tpu.vector_store %arg15[%c0_71, %c288], %125 {strides = array<i32>} : memref<1x512xf32, #tpu.memory_space<vmem>>, vector<1x32xf32>,
    %127 = vector.extract_strided_slice %106 {offsets = [10, 0], sizes = [1, 32], strides = [1, 1]} : vector<16x32xf32> to vector<1x32xf32>
    %c0_72 = arith.constant 0 : index
    %c320 = arith.constant 320 : index
    %128 = vector.load %arg15[%c0_72, %c320] : memref<1x512xf32, #tpu.memory_space<vmem>>, vector<1x32xf32>
    tpu.vector_store %arg15[%c0_72, %c320], %127 {strides = array<i32>} : memref<1x512xf32, #tpu.memory_space<vmem>>, vector<1x32xf32>,
    %129 = vector.extract_strided_slice %106 {offsets = [11, 0], sizes = [1, 32], strides = [1, 1]} : vector<16x32xf32> to vector<1x32xf32>
    %c0_73 = arith.constant 0 : index
    %c352 = arith.constant 352 : index
    %130 = vector.load %arg15[%c0_73, %c352] : memref<1x512xf32, #tpu.memory_space<vmem>>, vector<1x32xf32>
    tpu.vector_store %arg15[%c0_73, %c352], %129 {strides = array<i32>} : memref<1x512xf32, #tpu.memory_space<vmem>>, vector<1x32xf32>,
    %131 = vector.extract_strided_slice %106 {offsets = [12, 0], sizes = [1, 32], strides = [1, 1]} : vector<16x32xf32> to vector<1x32xf32>
    %c0_74 = arith.constant 0 : index
    %c384 = arith.constant 384 : index
    %132 = vector.load %arg15[%c0_74, %c384] : memref<1x512xf32, #tpu.memory_space<vmem>>, vector<1x32xf32>
    tpu.vector_store %arg15[%c0_74, %c384], %131 {strides = array<i32>} : memref<1x512xf32, #tpu.memory_space<vmem>>, vector<1x32xf32>,
    %133 = vector.extract_strided_slice %106 {offsets = [13, 0], sizes = [1, 32], strides = [1, 1]} : vector<16x32xf32> to vector<1x32xf32>
    %c0_75 = arith.constant 0 : index
    %c416 = arith.constant 416 : index
    %134 = vector.load %arg15[%c0_75, %c416] : memref<1x512xf32, #tpu.memory_space<vmem>>, vector<1x32xf32>
    tpu.vector_store %arg15[%c0_75, %c416], %133 {strides = array<i32>} : memref<1x512xf32, #tpu.memory_space<vmem>>, vector<1x32xf32>,
    %135 = vector.extract_strided_slice %106 {offsets = [14, 0], sizes = [1, 32], strides = [1, 1]} : vector<16x32xf32> to vector<1x32xf32>
    %c0_76 = arith.constant 0 : index
    %c448 = arith.constant 448 : index
    %136 = vector.load %arg15[%c0_76, %c448] : memref<1x512xf32, #tpu.memory_space<vmem>>, vector<1x32xf32>
    tpu.vector_store %arg15[%c0_76, %c448], %135 {strides = array<i32>} : memref<1x512xf32, #tpu.memory_space<vmem>>, vector<1x32xf32>,
    %137 = vector.extract_strided_slice %106 {offsets = [15, 0], sizes = [1, 32], strides = [1, 1]} : vector<16x32xf32> to vector<1x32xf32>
    %c0_77 = arith.constant 0 : index
    %c480 = arith.constant 480 : index
    %138 = vector.load %arg15[%c0_77, %c480] : memref<1x512xf32, #tpu.memory_space<vmem>>, vector<1x32xf32>
    tpu.vector_store %arg15[%c0_77, %c480], %137 {strides = array<i32>} : memref<1x512xf32, #tpu.memory_space<vmem>>, vector<1x32xf32>,
    %c0_78 = arith.constant 0 : index
    %c0_79 = arith.constant 0 : index
    %139 = vector.load %arg15[%c0_78, %c0_79] : memref<1x512xf32, #tpu.memory_space<vmem>>, vector<1x512xf32>
    %140 = arith.truncf %139 : vector<1x512xf32> to vector<1x512xbf16>
    %c0_80 = arith.constant 0 : index
    %c0_81 = arith.constant 0 : index
    %141 = vector.load %arg6[%c0_80, %c0_81] : memref<512x512xbf16, #tpu.memory_space<vmem>>, vector<512x512xbf16>
    %cst_82 = arith.constant dense<0.000000e+00> : vector<1x512xf32>
    %142 = tpu.matmul %140, %141, %cst_82 {dimension_numbers = #tpu.dot_dimension_numbers<[1], [0], [0], [1], [0, 0, 1, 1], [], []>} : vector<1x512xbf16>, vector<512x512xbf16>, vector<1x512xf32> -> vector<1x512xf32>
    %c0_83 = arith.constant 0 : index
    %c0_84 = arith.constant 0 : index
    %143 = vector.load %arg7[%c0_83, %c0_84] : memref<1x512xf32, #tpu.memory_space<vmem>>, vector<1x512xf32>
    %144 = arith.addf %142, %143 : vector<1x512xf32>
    %cst_85 = arith.constant 0.000000e+00 : f32
    %145 = vector.broadcast %cst_85 : f32 to vector<1x512xf32>
    %146 = arith.maximumf %144, %145 : vector<1x512xf32>
    %147 = arith.truncf %146 : vector<1x512xf32> to vector<1x512xbf16>
    %c0_86 = arith.constant 0 : index
    %c0_87 = arith.constant 0 : index
    %148 = vector.load %arg8[%c0_86, %c0_87] : memref<512x128xbf16, #tpu.memory_space<vmem>>, vector<512x128xbf16>
    %cst_88 = arith.constant dense<0.000000e+00> : vector<1x128xf32>
    %149 = tpu.matmul %147, %148, %cst_88 {dimension_numbers = #tpu.dot_dimension_numbers<[1], [0], [0], [1], [0, 0, 1, 1], [], []>} : vector<1x512xbf16>, vector<512x128xbf16>, vector<1x128xf32> -> vector<1x128xf32>
    %c0_89 = arith.constant 0 : index
    %c0_90 = arith.constant 0 : index
    %150 = vector.load %arg9[%c0_89, %c0_90] : memref<1x128xf32, #tpu.memory_space<vmem>>, vector<1x128xf32>
    %151 = arith.addf %149, %150 : vector<1x128xf32>
    %c0_91 = arith.constant 0 : index
    %c0_92 = arith.constant 0 : index
    %c0_93 = arith.constant 0 : index
    %152 = vector.load %arg10[%c0_91, %c0_92, %c0_93] : memref<1x1x128xf32, #tpu.memory_space<vmem>>, vector<1x1x128xf32>
    %153 = vector.shape_cast %152 : vector<1x1x128xf32> to vector<1x128xf32>
    %154 = vector.shape_cast %151 : vector<1x128xf32> to vector<1x1x128xf32>
    tpu.vector_store %arg10[%c0_91, %c0_92, %c0_93], %154 {strides = array<i32>} : memref<1x1x128xf32, #tpu.memory_space<vmem>>, vector<1x1x128xf32>,
    return
  }
  func.func @transform_0(%arg0: i32) -> (i32, i32, i32, i32) {
    %c0_i32 = arith.constant 0 : i32
    %c0_i32_0 = arith.constant 0 : i32
    %c0_i32_1 = arith.constant 0 : i32
    %c0_i32_2 = arith.constant 0 : i32
    return %arg0, %c0_i32, %c0_i32_0, %c0_i32_1 : i32, i32, i32, i32
  }
  func.func @transform_1(%arg0: i32) -> (i32, i32) {
    %c0_i32 = arith.constant 0 : i32
    %c0_i32_0 = arith.constant 0 : i32
    %c0_i32_1 = arith.constant 0 : i32
    return %c0_i32, %c0_i32_0 : i32, i32
  }
  func.func @transform_2(%arg0: i32) -> (i32, i32) {
    %c0_i32 = arith.constant 0 : i32
    %c0_i32_0 = arith.constant 0 : i32
    %c0_i32_1 = arith.constant 0 : i32
    return %c0_i32, %c0_i32_0 : i32, i32
  }
  func.func @transform_3(%arg0: i32) -> (i32, i32) {
    %c0_i32 = arith.constant 0 : i32
    %c0_i32_0 = arith.constant 0 : i32
    %c0_i32_1 = arith.constant 0 : i32
    return %c0_i32, %c0_i32_0 : i32, i32
  }
  func.func @transform_4(%arg0: i32) -> (i32, i32) {
    %c0_i32 = arith.constant 0 : i32
    %c0_i32_0 = arith.constant 0 : i32
    %c0_i32_1 = arith.constant 0 : i32
    return %c0_i32, %c0_i32_0 : i32, i32
  }
  func.func @transform_5(%arg0: i32) -> (i32, i32) {
    %c0_i32 = arith.constant 0 : i32
    %c0_i32_0 = arith.constant 0 : i32
    %c0_i32_1 = arith.constant 0 : i32
    return %c0_i32, %c0_i32_0 : i32, i32
  }
  func.func @transform_6(%arg0: i32) -> (i32, i32) {
    %c0_i32 = arith.constant 0 : i32
    %c0_i32_0 = arith.constant 0 : i32
    %c0_i32_1 = arith.constant 0 : i32
    return %c0_i32, %c0_i32_0 : i32, i32
  }
  func.func @transform_7(%arg0: i32) -> (i32, i32) {
    %c0_i32 = arith.constant 0 : i32
    %c0_i32_0 = arith.constant 0 : i32
    %c0_i32_1 = arith.constant 0 : i32
    return %c0_i32, %c0_i32_0 : i32, i32
  }
  func.func @transform_8(%arg0: i32) -> (i32, i32) {
    %c0_i32 = arith.constant 0 : i32
    %c0_i32_0 = arith.constant 0 : i32
    %c0_i32_1 = arith.constant 0 : i32
    return %c0_i32, %c0_i32_0 : i32, i32
  }
  func.func @transform_9(%arg0: i32) -> (i32, i32, i32) {
    %c0_i32 = arith.constant 0 : i32
    %c0_i32_0 = arith.constant 0 : i32
    %c0_i32_1 = arith.constant 0 : i32
    return %arg0, %c0_i32, %c0_i32_0 : i32, i32, i32
  }
}

</mosaic_0001>

<llo_original>
// kernel: simple_cnn_forward.1
$region0: #{simple_cnn_forward.1}
  #allocation0 [shape = 'u32[]', space=smem, size = 0x4, offset = 0x4, fixed_abs, tag = 'smem constant byte address 0x4 - core index']
  #allocation1 [shape = 'u32[144,128]{1,0:T(1,128)}', space=vmem, size = 0x12000, scoped, tag = 'internal scratch']
  #allocation2 [shape = 'f32[18,18,3]{2,1,0:T(8,128)}', space=vmem, size = 0x36000, scoped, tag = 'scratch operand']
  #allocation3 [shape = 'f32[256,27]{1,0:T(8,128)}', space=vmem, size = 0x20000, scoped, tag = 'scratch operand']
  #allocation4 [shape = 'f32[10,10,16]{2,1,0:T(8,128)}', space=vmem, size = 0x14000, scoped, tag = 'scratch operand']
  #allocation5 [shape = 'f32[64,144]{1,0:T(8,128)}', space=vmem, size = 0x10000, scoped, tag = 'scratch operand']
  #allocation6 [shape = 'f32[1,512]{1,0:T(1,128)}', space=vmem, size = 0x800, scoped, tag = 'scratch operand']
  %s0 = inlined_call_operand.vmem [shape: f32[2,16,16,3], index: 0, kind: input, shape index: {}]
  %s1 = inlined_call_operand.vmem [shape: bf16[27,16], index: 1, kind: input, shape index: {}]
  %s2 = inlined_call_operand.vmem [shape: f32[1,16], index: 2, kind: input, shape index: {}]
  %s3 = inlined_call_operand.vmem [shape: bf16[144,32], index: 3, kind: input, shape index: {}]
  %s4 = inlined_call_operand.vmem [shape: f32[1,32], index: 4, kind: input, shape index: {}]
  %s5 = inlined_call_operand.hbm [shape: bf16[512,512], index: 5, kind: input, shape index: {}]
  %s6 = inlined_call_operand.vmem [shape: f32[1,512], index: 6, kind: input, shape index: {}]
  %s7 = inlined_call_operand.vmem [shape: bf16[512,128], index: 7, kind: input, shape index: {}]
  %s8 = inlined_call_operand.vmem [shape: f32[1,128], index: 8, kind: input, shape index: {}]
  %s9 = inlined_call_operand.hbm [shape: f32[2,1,128], index: 9, kind: output, shape index: {}]
  %s10 = sld [smem:[#allocation0]]
  $region73: #{simple_cnn_forward.1} parent=0
    _
  %s12 = ssub.s32 1, %s10
  %s13 = scalar_select 0, %s12, %s10
  $region1: #{simple_cnn_forward.1} parent=0
    #allocation7 [shape = 'u8[524288]{0}', space=vmem, size = 0x80000, scoped, tag = 'input window, operand 5, single buffered']
    #allocation8 [shape = 's32[2]{0}', space=sflag, size = 0x8, scoped, tag = 'scoped memory for simple_cnn_forward.1']
    #allocation9 [shape = 's32[2]{0}', space=sflag, size = 0x8, scoped, tag = 'scoped memory for simple_cnn_forward.1']
    #allocation10 [shape = 'u8[1024]{0}', space=vmem, size = 0x400, scoped, tag = 'output window, operand 0']
    %14 = vsyncpa [#allocation8], 0
    %15 = vsyncpa [#allocation9], 0
    %s16 = scalar_lea.sflag [#allocation9], 1
    %17 = vsyncpa %s16, 0
    loop: start=0, step=1, limit=4
    $region2: #{simple_cnn_forward.1} parent=1 // loop_pre_header
      _
    $region3: #{simple_cnn_forward.1} parent=1 // loop_header
      %s19 = sphi 0, %s23
      %p20 = scmp.ge.s32.totalorder %s19, 4
      %s29 = sphi 0, %s31
      %s32 = sphi 0, %s29
      %s33 = sphi 0, %s32
      %s49 = sphi 0, %s33
      %s53 = sphi 0, %s53
      %s55 = sphi 0, %s53
      %s56 = sphi 0, %s55
      %s70 = sphi 0, %s56
      %s74 = sphi 0, %s74
      %s76 = sphi 0, %s74
      %s77 = sphi 0, %s76
      %s91 = sphi 0, %s77
      %s95 = sphi 0, %s95
      %s97 = sphi 0, %s95
      %s98 = sphi 0, %s97
      %s112 = sphi 0, %s98
      %s116 = sphi 0, %s116
      %s118 = sphi 0, %s116
      %s119 = sphi 0, %s118
      %s133 = sphi 0, %s119
      %s137 = sphi 0, %s137
      %s139 = sphi 0, %s137
      %s140 = sphi 0, %s139
      %s154 = sphi 0, %s140
      %s158 = sphi 0, %s158
      %s160 = sphi 0, %s158
      %s161 = sphi 0, %s160
      %s175 = sphi 0, %s161
      %s179 = sphi 0, %s179
      %s181 = sphi 0, %s179
      %s182 = sphi 0, %s181
      %s196 = sphi 0, %s182
      %s200 = sphi 0, %s200
      %s202 = sphi 0, %s200
      %s203 = sphi 0, %s202
      %s217 = sphi 0, %s203
      %s223 = sphi 0, %s225
      %s226 = sphi 0, %s223
      %s227 = sphi 0, %s226
      %s243 = sphi 0, %s227
    $region4: #{simple_cnn_forward.1} parent=1 // loop_header_branch
      %22 = sbr.rel (%p20) target = $region8
    $region5: #{simple_cnn_forward.1} parent=1 // loop_body
      %s24 = ssub.s32 %s19, 1
      %s25 = ssub.s32 %s19, 2
      %s26 = sadd.s32 %s19, 1
      %s27 = ssub.s32 %s19, %s26
      %p28 = scmp.eq.s32.totalorder %s27, 0
      %s30 = sadd.s32 %s29, 1
      %s31 = scalar_select %p28, %s29, %s30
      %p34 = pneg %p28
      %p35 = scmp.eq.s32.totalorder %s19, 1
      %p36 = por %p34, %p35
      %p37 = scmp.ne.s32.totalorder %s29, %s32
      %p38 = scmp.eq.s32.totalorder %s19, 0
      %p39 = por %p37, %p38
      %p40 = scmp.ne.s32.totalorder %s29, %s32
      %p41 = scmp.eq.s32.totalorder %s24, 1
      %p42 = por %p40, %p41
      %p43 = scmp.ne.s32.totalorder %s32, %s33
      %p44 = scmp.eq.s32.totalorder %s24, 0
      %p45 = por %p43, %p44
      %p46 = scmp.ne.s32.totalorder %s32, %s33
      %p47 = scmp.eq.s32.totalorder %s25, 1
      %p48 = por %p46, %p47
      %p50 = scmp.ne.s32.totalorder %s33, %s49
      %p51 = scmp.eq.s32.totalorder %s25, 0
      %p52 = por %p50, %p51
      %s54 = sadd.s32 %s53, 1
      %p57 = scmp.eq.s32.totalorder %s19, 1
      %p58 = scmp.ne.s32.totalorder %s53, %s55
      %p59 = scmp.eq.s32.totalorder %s19, 0
      %p60 = por %p58, %p59
      %p61 = scmp.ne.s32.totalorder %s53, %s55
      %p62 = scmp.eq.s32.totalorder %s24, 1
      %p63 = por %p61, %p62
      %p64 = scmp.ne.s32.totalorder %s55, %s56
      %p65 = scmp.eq.s32.totalorder %s24, 0
      %p66 = por %p64, %p65
      %p67 = scmp.ne.s32.totalorder %s55, %s56
      %p68 = scmp.eq.s32.totalorder %s25, 1
      %p69 = por %p67, %p68
      %p71 = scmp.ne.s32.totalorder %s56, %s70
      %p72 = scmp.eq.s32.totalorder %s25, 0
      %p73 = por %p71, %p72
      %s75 = sadd.s32 %s74, 1
      %p78 = scmp.eq.s32.totalorder %s19, 1
      %p79 = scmp.ne.s32.totalorder %s74, %s76
      %p80 = scmp.eq.s32.totalorder %s19, 0
      %p81 = por %p79, %p80
      %p82 = scmp.ne.s32.totalorder %s74, %s76
      %p83 = scmp.eq.s32.totalorder %s24, 1
      %p84 = por %p82, %p83
      %p85 = scmp.ne.s32.totalorder %s76, %s77
      %p86 = scmp.eq.s32.totalorder %s24, 0
      %p87 = por %p85, %p86
      %p88 = scmp.ne.s32.totalorder %s76, %s77
      %p89 = scmp.eq.s32.totalorder %s25, 1
      %p90 = por %p88, %p89
      %p92 = scmp.ne.s32.totalorder %s77, %s91
      %p93 = scmp.eq.s32.totalorder %s25, 0
      %p94 = por %p92, %p93
      %s96 = sadd.s32 %s95, 1
      %p99 = scmp.eq.s32.totalorder %s19, 1
      %p100 = scmp.ne.s32.totalorder %s95, %s97
      %p101 = scmp.eq.s32.totalorder %s19, 0
      %p102 = por %p100, %p101
      %p103 = scmp.ne.s32.totalorder %s95, %s97
      %p104 = scmp.eq.s32.totalorder %s24, 1
      %p105 = por %p103, %p104
      %p106 = scmp.ne.s32.totalorder %s97, %s98
      %p107 = scmp.eq.s32.totalorder %s24, 0
      %p108 = por %p106, %p107
      %p109 = scmp.ne.s32.totalorder %s97, %s98
      %p110 = scmp.eq.s32.totalorder %s25, 1
      %p111 = por %p109, %p110
      %p113 = scmp.ne.s32.totalorder %s98, %s112
      %p114 = scmp.eq.s32.totalorder %s25, 0
      %p115 = por %p113, %p114
      %s117 = sadd.s32 %s116, 1
      %p120 = scmp.eq.s32.totalorder %s19, 1
      %p121 = scmp.ne.s32.totalorder %s116, %s118
      %p122 = scmp.eq.s32.totalorder %s19, 0
      %p123 = por %p121, %p122
      %p124 = scmp.ne.s32.totalorder %s116, %s118
      %p125 = scmp.eq.s32.totalorder %s24, 1
      %p126 = por %p124, %p125
      %p127 = scmp.ne.s32.totalorder %s118, %s119
      %p128 = scmp.eq.s32.totalorder %s24, 0
      %p129 = por %p127, %p128
      %p130 = scmp.ne.s32.totalorder %s118, %s119
      %p131 = scmp.eq.s32.totalorder %s25, 1
      %p132 = por %p130, %p131
      %p134 = scmp.ne.s32.totalorder %s119, %s133
      %p135 = scmp.eq.s32.totalorder %s25, 0
      %p136 = por %p134, %p135
      %s138 = sadd.s32 %s137, 1
      %p141 = scmp.eq.s32.totalorder %s19, 1
      %p142 = scmp.ne.s32.totalorder %s137, %s139
      %p143 = scmp.eq.s32.totalorder %s19, 0
      %p144 = por %p142, %p143
      %p145 = scmp.ne.s32.totalorder %s137, %s139
      %p146 = scmp.eq.s32.totalorder %s24, 1
      %p147 = por %p145, %p146
      %p148 = scmp.ne.s32.totalorder %s139, %s140
      %p149 = scmp.eq.s32.totalorder %s24, 0
      %p150 = por %p148, %p149
      %p151 = scmp.ne.s32.totalorder %s139, %s140
      %p152 = scmp.eq.s32.totalorder %s25, 1
      %p153 = por %p151, %p152
      %p155 = scmp.ne.s32.totalorder %s140, %s154
      %p156 = scmp.eq.s32.totalorder %s25, 0
      %p157 = por %p155, %p156
      %s159 = sadd.s32 %s158, 1
      %p162 = scmp.eq.s32.totalorder %s19, 1
      %p163 = scmp.ne.s32.totalorder %s158, %s160
      %p164 = scmp.eq.s32.totalorder %s19, 0
      %p165 = por %p163, %p164
      %p166 = scmp.ne.s32.totalorder %s158, %s160
      %p167 = scmp.eq.s32.totalorder %s24, 1
      %p168 = por %p166, %p167
      %p169 = scmp.ne.s32.totalorder %s160, %s161
      %p170 = scmp.eq.s32.totalorder %s24, 0
      %p171 = por %p169, %p170
      %p172 = scmp.ne.s32.totalorder %s160, %s161
      %p173 = scmp.eq.s32.totalorder %s25, 1
      %p174 = por %p172, %p173
      %p176 = scmp.ne.s32.totalorder %s161, %s175
      %p177 = scmp.eq.s32.totalorder %s25, 0
      %p178 = por %p176, %p177
      %s180 = sadd.s32 %s179, 1
      %p183 = scmp.eq.s32.totalorder %s19, 1
      %p184 = scmp.ne.s32.totalorder %s179, %s181
      %p185 = scmp.eq.s32.totalorder %s19, 0
      %p186 = por %p184, %p185
      %p187 = scmp.ne.s32.totalorder %s179, %s181
      %p188 = scmp.eq.s32.totalorder %s24, 1
      %p189 = por %p187, %p188
      %p190 = scmp.ne.s32.totalorder %s181, %s182
      %p191 = scmp.eq.s32.totalorder %s24, 0
      %p192 = por %p190, %p191
      %p193 = scmp.ne.s32.totalorder %s181, %s182
      %p194 = scmp.eq.s32.totalorder %s25, 1
      %p195 = por %p193, %p194
      %p197 = scmp.ne.s32.totalorder %s182, %s196
      %p198 = scmp.eq.s32.totalorder %s25, 0
      %p199 = por %p197, %p198
      %s201 = sadd.s32 %s200, 1
      %p204 = scmp.eq.s32.totalorder %s19, 1
      %p205 = scmp.ne.s32.totalorder %s200, %s202
      %p206 = scmp.eq.s32.totalorder %s19, 0
      %p207 = por %p205, %p206
      %p208 = scmp.ne.s32.totalorder %s200, %s202
      %p209 = scmp.eq.s32.totalorder %s24, 1
      %p210 = por %p208, %p209
      %p211 = scmp.ne.s32.totalorder %s202, %s203
      %p212 = scmp.eq.s32.totalorder %s24, 0
      %p213 = por %p211, %p212
      %p214 = scmp.ne.s32.totalorder %s202, %s203
      %p215 = scmp.eq.s32.totalorder %s25, 1
      %p216 = por %p214, %p215
      %p218 = scmp.ne.s32.totalorder %s203, %s217
      %p219 = scmp.eq.s32.totalorder %s25, 0
      %p220 = por %p218, %p219
      %s221 = ssub.s32 %s19, %s26
      %p222 = scmp.eq.s32.totalorder %s221, 0
      %s224 = sadd.s32 %s223, 1
      %s225 = scalar_select %p222, %s223, %s224
      %p228 = pneg %p222
      %p229 = scmp.eq.s32.totalorder %s19, 1
      %p230 = por %p228, %p229
      %p231 = scmp.ne.s32.totalorder %s223, %s226
      %p232 = scmp.eq.s32.totalorder %s19, 0
      %p233 = por %p231, %p232
      %p234 = scmp.ne.s32.totalorder %s223, %s226
      %p235 = scmp.eq.s32.totalorder %s24, 1
      %p236 = por %p234, %p235
      %p237 = scmp.ne.s32.totalorder %s226, %s227
      %p238 = scmp.eq.s32.totalorder %s24, 0
      %p239 = por %p237, %p238
      %p240 = scmp.ne.s32.totalorder %s226, %s227
      %p241 = scmp.eq.s32.totalorder %s25, 1
      %p242 = por %p240, %p241
      %p244 = scmp.ne.s32.totalorder %s227, %s243
      %p245 = scmp.eq.s32.totalorder %s25, 0
      %p246 = por %p244, %p245
      %p247 = scmp.le.s32.totalorder 1, %s19
      %p248 = scmp.lt.s32.totalorder %s19, 3
      %p249 = pnand %p247, %p248
      %p250 = pneg %p249
      // Predicated region
      $region9: #{simple_cnn_forward.1} parent=5 // pred_check
        _
      $region10: #{simple_cnn_forward.1} parent=5 // pred_check_branch
        %252 = sbr.rel (%p249) target = $region12
      $region11: #{simple_cnn_forward.1} parent=5 // pred_region
        %s253 = ssub.s32 %s19, 1
        // Predicated region
        $region13: #{simple_cnn_forward.1} parent=11 // pred_check
          %p254 = pneg %p66
        $region14: #{simple_cnn_forward.1} parent=11 // pred_check_branch
          %256 = sbr.rel (%p254) target = $region16
        $region15: #{simple_cnn_forward.1} parent=11 // pred_region
          _
        $region16: #{simple_cnn_forward.1} parent=11 // pred_fallthru
          _
        // Predicated region
        $region17: #{simple_cnn_forward.1} parent=11 // pred_check
          %p257 = pneg %p87
        $region18: #{simple_cnn_forward.1} parent=11 // pred_check_branch
          %259 = sbr.rel (%p257) target = $region20
        $region19: #{simple_cnn_forward.1} parent=11 // pred_region
          _
        $region20: #{simple_cnn_forward.1} parent=11 // pred_fallthru
          _
        // Predicated region
        $region21: #{simple_cnn_forward.1} parent=11 // pred_check
          %p260 = pneg %p108
        $region22: #{simple_cnn_forward.1} parent=11 // pred_check_branch
          %262 = sbr.rel (%p260) target = $region24
        $region23: #{simple_cnn_forward.1} parent=11 // pred_region
          _
        $region24: #{simple_cnn_forward.1} parent=11 // pred_fallthru
          _
        // Predicated region
        $region25: #{simple_cnn_forward.1} parent=11 // pred_check
          %p263 = pneg %p129
        $region26: #{simple_cnn_forward.1} parent=11 // pred_check_branch
          %265 = sbr.rel (%p263) target = $region28
        $region27: #{simple_cnn_forward.1} parent=11 // pred_region
          _
        $region28: #{simple_cnn_forward.1} parent=11 // pred_fallthru
          _
        // Predicated region
        $region29: #{simple_cnn_forward.1} parent=11 // pred_check
          %p266 = pneg %p150
        $region30: #{simple_cnn_forward.1} parent=11 // pred_check_branch
          %268 = sbr.rel (%p266) target = $region32
        $region31: #{simple_cnn_forward.1} parent=11 // pred_region
          %s270 = ssub.s32 16384, 16384
          %271 = vsyncadd [#allocation8], %s270
          %s272 = sshll.u32 [#allocation7], 4
          %s273 = int_to_ptr.vmem [resolvable:$true] %s272
          %278 = dma.hbm_to_vmem [thread:$0]  %s5, 16384, %s273, [#allocation8], 256, 256, 16
        $region32: #{simple_cnn_forward.1} parent=11 // pred_fallthru
          _
        // Predicated region
        $region33: #{simple_cnn_forward.1} parent=11 // pred_check
          %p279 = pneg %p171
        $region34: #{simple_cnn_forward.1} parent=11 // pred_check_branch
          %281 = sbr.rel (%p279) target = $region36
        $region35: #{simple_cnn_forward.1} parent=11 // pred_region
          _
        $region36: #{simple_cnn_forward.1} parent=11 // pred_fallthru
          _
        // Predicated region
        $region37: #{simple_cnn_forward.1} parent=11 // pred_check
          %p282 = pneg %p192
        $region38: #{simple_cnn_forward.1} parent=11 // pred_check_branch
          %284 = sbr.rel (%p282) target = $region40
        $region39: #{simple_cnn_forward.1} parent=11 // pred_region
          _
        $region40: #{simple_cnn_forward.1} parent=11 // pred_fallthru
          _
        // Predicated region
        $region41: #{simple_cnn_forward.1} parent=11 // pred_check
          %p285 = pneg %p213
        $region42: #{simple_cnn_forward.1} parent=11 // pred_check_branch
          %287 = sbr.rel (%p285) target = $region44
        $region43: #{simple_cnn_forward.1} parent=11 // pred_region
          _
        $region44: #{simple_cnn_forward.1} parent=11 // pred_fallthru
          _
      $region12: #{simple_cnn_forward.1} parent=5 // pred_fallthru
        _
      %p288 = scmp.lt.s32.totalorder %s19, 2
      // Predicated region
      $region45: #{simple_cnn_forward.1} parent=5 // pred_check
        %p289 = pneg %p288
      $region46: #{simple_cnn_forward.1} parent=5 // pred_check_branch
        %291 = sbr.rel (%p289) target = $region48
      $region47: #{simple_cnn_forward.1} parent=5 // pred_region
        // Predicated region
        $region49: #{simple_cnn_forward.1} parent=47 // pred_check
          %p292 = pneg %p39
        $region50: #{simple_cnn_forward.1} parent=47 // pred_check_branch
          %294 = sbr.rel (%p292) target = $region52
        $region51: #{simple_cnn_forward.1} parent=47 // pred_region
          %p295 = scmp.lt.s32.totalorder %s19, 1
          %s296 = scalar_select %p295, %s19, 1
          %s297 = smul.addr %s296, 32
          %s298 = smul.addr %s297, 8
          %s299 = scalar_lea.vmem %s0, %s298
        $region52: #{simple_cnn_forward.1} parent=47 // pred_fallthru
          _
      $region48: #{simple_cnn_forward.1} parent=5 // pred_fallthru
        _
      %p300 = scmp.le.s32.totalorder 1, %s19
      %p301 = scmp.lt.s32.totalorder %s19, 3
      %p302 = pnand %p300, %p301
      %p303 = pneg %p302
      // Predicated region
      $region53: #{simple_cnn_forward.1} parent=5 // pred_check
        _
      $region54: #{simple_cnn_forward.1} parent=5 // pred_check_branch
        %305 = sbr.rel (%p302) target = $region56
      $region55: #{simple_cnn_forward.1} parent=5 // pred_region
        %s306 = ssub.s32 %s19, 1
        // Predicated region
        $region57: #{simple_cnn_forward.1} parent=55 // pred_check
          %p307 = pneg %p150
        $region58: #{simple_cnn_forward.1} parent=55 // pred_check_branch
          %309 = sbr.rel (%p307) target = $region60
        $region59: #{simple_cnn_forward.1} parent=55 // pred_region
          %310 = dma.done [#allocation8], 16384
        $region60: #{simple_cnn_forward.1} parent=55 // pred_fallthru
          _
        %p311 = scmp.lt.s32.totalorder %s24, 1
        %s312 = scalar_select %p311, %s24, 1
        %s313 = smul.addr %s312, 32
        %s314 = smul.addr %s313, 8
        %s315 = scalar_lea.vmem %s0, %s314
        %p316 = pneg %p45
        %p317 = pneg %p42
        %p318 = pneg %p66
        %p319 = pneg %p63
        %p320 = pneg %p87
        %p321 = pneg %p84
        %p322 = pneg %p108
        %p323 = pneg %p105
        %p324 = pneg %p129
        %p325 = pneg %p126
        %p326 = pneg %p150
        %p327 = pneg %p147
        %p328 = pneg %p171
        %p329 = pneg %p168
        %p330 = pneg %p192
        %p331 = pneg %p189
        %p332 = pneg %p213
        %p333 = pneg %p210
        %p334 = pneg %p239
        %p335 = pneg %p236
        %s336 = sand.u32 %s226, 1
        %s337 = scalar_lea.sflag [#allocation9], %s336
        %s338 = sand.u32 %s226, 1
        %s339 = scalar_lea.vmem [#allocation10], %s338
        %p340 = scmp.lt.s32.totalorder %s24, 1
        %s341 = scalar_select %p340, %s24, 1
        %s342 = smul.addr %s341, 32
        %s343 = smul.addr %s342, 8
        %s344 = scalar_lea.vmem %s0, %s343
        %v346 = vld [vmem:[%s344] sm:$0xff]
        %v347 = vld [vmem:[%s344 + $0x8] sm:$0xff]
        %v348 = vld [vmem:[%s344 + $0x10] sm:$0xff]
        %v349 = vld [vmem:[%s344 + $0x18] sm:$0xff]
        %v350 = vld [vmem:[%s344 + $0x20] sm:$0xff]
        %v351 = vld [vmem:[%s344 + $0x28] sm:$0xff]
        %v352 = vld [vmem:[%s344 + $0x30] sm:$0xff]
        %v353 = vld [vmem:[%s344 + $0x38] sm:$0xff]
        %v354 = vld [vmem:[%s344 + $0x40] sm:$0xff]
        %v355 = vld [vmem:[%s344 + $0x48] sm:$0xff]
        %v356 = vld [vmem:[%s344 + $0x50] sm:$0xff]
        %v357 = vld [vmem:[%s344 + $0x58] sm:$0xff]
        %v358 = vld [vmem:[%s344 + $0x60] sm:$0xff]
        %v359 = vld [vmem:[%s344 + $0x68] sm:$0xff]
        %v360 = vld [vmem:[%s344 + $0x70] sm:$0xff]
        %v361 = vld [vmem:[%s344 + $0x78] sm:$0xff]
        %v362 = vld [vmem:[%s344 + $0x80] sm:$0xff]
        %v363 = vld [vmem:[%s344 + $0x88] sm:$0xff]
        %v364 = vld [vmem:[%s344 + $0x90] sm:$0xff]
        %v365 = vld [vmem:[%s344 + $0x98] sm:$0xff]
        %v366 = vld [vmem:[%s344 + $0xa0] sm:$0xff]
        %v367 = vld [vmem:[%s344 + $0xa8] sm:$0xff]
        %v368 = vld [vmem:[%s344 + $0xb0] sm:$0xff]
        %v369 = vld [vmem:[%s344 + $0xb8] sm:$0xff]
        %v370 = vld [vmem:[%s344 + $0xc0] sm:$0xff]
        %v371 = vld [vmem:[%s344 + $0xc8] sm:$0xff]
        %v372 = vld [vmem:[%s344 + $0xd0] sm:$0xff]
        %v373 = vld [vmem:[%s344 + $0xd8] sm:$0xff]
        %v374 = vld [vmem:[%s344 + $0xe0] sm:$0xff]
        %v375 = vld [vmem:[%s344 + $0xe8] sm:$0xff]
        %v376 = vld [vmem:[%s344 + $0xf0] sm:$0xff]
        %v377 = vld [vmem:[%s344 + $0xf8] sm:$0xff]
        %vm378 = vcmask 23552
        %379 = vst.msk [vmem:[#allocation2] sm:$0xff] %vm378, 0.0
        %380 = vst.msk [vmem:[#allocation2 + $0x8] sm:$0xff] %vm378, 0.0
        %vm381 = vcmask 17408
        %382 = vst.msk [vmem:[#allocation2 + $0x10] sm:$0x3] %vm381, 0.0
        %383 = vst.msk [vmem:[#allocation2 + $0x18] sm:$0xff] %vm378, 0.0
        %384 = vst.msk [vmem:[#allocation2 + $0x20] sm:$0xff] %vm378, 0.0
        %385 = vst.msk [vmem:[#allocation2 + $0x28] sm:$0x3] %vm381, 0.0
        %386 = vst.msk [vmem:[#allocation2 + $0x30] sm:$0xff] %vm378, 0.0
        %387 = vst.msk [vmem:[#allocation2 + $0x38] sm:$0xff] %vm378, 0.0
        %388 = vst.msk [vmem:[#allocation2 + $0x40] sm:$0x3] %vm381, 0.0
        %389 = vst.msk [vmem:[#allocation2 + $0x48] sm:$0xff] %vm378, 0.0
        %390 = vst.msk [vmem:[#allocation2 + $0x50] sm:$0xff] %vm378, 0.0
        %391 = vst.msk [vmem:[#allocation2 + $0x58] sm:$0x3] %vm381, 0.0
        %392 = vst.msk [vmem:[#allocation2 + $0x60] sm:$0xff] %vm378, 0.0
        %393 = vst.msk [vmem:[#allocation2 + $0x68] sm:$0xff] %vm378, 0.0
        %394 = vst.msk [vmem:[#allocation2 + $0x70] sm:$0x3] %vm381, 0.0
        %395 = vst.msk [vmem:[#allocation2 + $0x78] sm:$0xff] %vm378, 0.0
        %396 = vst.msk [vmem:[#allocation2 + $0x80] sm:$0xff] %vm378, 0.0
        %397 = vst.msk [vmem:[#allocation2 + $0x88] sm:$0x3] %vm381, 0.0
        %398 = vst.msk [vmem:[#allocation2 + $0x90] sm:$0xff] %vm378, 0.0
        %399 = vst.msk [vmem:[#allocation2 + $0x98] sm:$0xff] %vm378, 0.0
        %400 = vst.msk [vmem:[#allocation2 + $0xa0] sm:$0x3] %vm381, 0.0
        %401 = vst.msk [vmem:[#allocation2 + $0xa8] sm:$0xff] %vm378, 0.0
        %402 = vst.msk [vmem:[#allocation2 + $0xb0] sm:$0xff] %vm378, 0.0
        %403 = vst.msk [vmem:[#allocation2 + $0xb8] sm:$0x3] %vm381, 0.0
        %404 = vst.msk [vmem:[#allocation2 + $0xc0] sm:$0xff] %vm378, 0.0
        %405 = vst.msk [vmem:[#allocation2 + $0xc8] sm:$0xff] %vm378, 0.0
        %406 = vst.msk [vmem:[#allocation2 + $0xd0] sm:$0x3] %vm381, 0.0
        %407 = vst.msk [vmem:[#allocation2 + $0xd8] sm:$0xff] %vm378, 0.0
        %408 = vst.msk [vmem:[#allocation2 + $0xe0] sm:$0xff] %vm378, 0.0
        %409 = vst.msk [vmem:[#allocation2 + $0xe8] sm:$0x3] %vm381, 0.0
        %410 = vst.msk [vmem:[#allocation2 + $0xf0] sm:$0xff] %vm378, 0.0
        %411 = vst.msk [vmem:[#allocation2 + $0xf8] sm:$0xff] %vm378, 0.0
        %412 = vst.msk [vmem:[#allocation2 + $0x100] sm:$0x3] %vm381, 0.0
        %413 = vst.msk [vmem:[#allocation2 + $0x108] sm:$0xff] %vm378, 0.0
        %414 = vst.msk [vmem:[#allocation2 + $0x110] sm:$0xff] %vm378, 0.0
        %415 = vst.msk [vmem:[#allocation2 + $0x118] sm:$0x3] %vm381, 0.0
        %416 = vst.msk [vmem:[#allocation2 + $0x120] sm:$0xff] %vm378, 0.0
        %417 = vst.msk [vmem:[#allocation2 + $0x128] sm:$0xff] %vm378, 0.0
        %418 = vst.msk [vmem:[#allocation2 + $0x130] sm:$0x3] %vm381, 0.0
        %419 = vst.msk [vmem:[#allocation2 + $0x138] sm:$0xff] %vm378, 0.0
        %420 = vst.msk [vmem:[#allocation2 + $0x140] sm:$0xff] %vm378, 0.0
        %421 = vst.msk [vmem:[#allocation2 + $0x148] sm:$0x3] %vm381, 0.0
        %422 = vst.msk [vmem:[#allocation2 + $0x150] sm:$0xff] %vm378, 0.0
        %423 = vst.msk [vmem:[#allocation2 + $0x158] sm:$0xff] %vm378, 0.0
        %424 = vst.msk [vmem:[#allocation2 + $0x160] sm:$0x3] %vm381, 0.0
        %425 = vst.msk [vmem:[#allocation2 + $0x168] sm:$0xff] %vm378, 0.0
        %426 = vst.msk [vmem:[#allocation2 + $0x170] sm:$0xff] %vm378, 0.0
        %427 = vst.msk [vmem:[#allocation2 + $0x178] sm:$0x3] %vm381, 0.0
        %428 = vst.msk [vmem:[#allocation2 + $0x180] sm:$0xff] %vm378, 0.0
        %429 = vst.msk [vmem:[#allocation2 + $0x188] sm:$0xff] %vm378, 0.0
        %430 = vst.msk [vmem:[#allocation2 + $0x190] sm:$0x3] %vm381, 0.0
        %431 = vst.msk [vmem:[#allocation2 + $0x198] sm:$0xff] %vm378, 0.0
        %432 = vst.msk [vmem:[#allocation2 + $0x1a0] sm:$0xff] %vm378, 0.0
        %433 = vst.msk [vmem:[#allocation2 + $0x1a8] sm:$0x3] %vm381, 0.0
        %s434 = scalar_lea.vmem [#allocation2], 24
        %435 = vst.msk [vmem:[%s434 + $0x1] sm:$0xff] %vm378, %v346
        %436 = vst.msk [vmem:[%s434 + $0x9] sm:$0xff] %vm378, %v347
        %437 = vst.msk [vmem:[%s434 + $0x19] sm:$0xff] %vm378, %v348
        %438 = vst.msk [vmem:[%s434 + $0x21] sm:$0xff] %vm378, %v349
        %439 = vst.msk [vmem:[%s434 + $0x31] sm:$0xff] %vm378, %v350
        %440 = vst.msk [vmem:[%s434 + $0x39] sm:$0xff] %vm378, %v351
        %441 = vst.msk [vmem:[%s434 + $0x49] sm:$0xff] %vm378, %v352
        %442 = vst.msk [vmem:[%s434 + $0x51] sm:$0xff] %vm378, %v353
        %443 = vst.msk [vmem:[%s434 + $0x61] sm:$0xff] %vm378, %v354
        %444 = vst.msk [vmem:[%s434 + $0x69] sm:$0xff] %vm378, %v355
        %445 = vst.msk [vmem:[%s434 + $0x79] sm:$0xff] %vm378, %v356
        %446 = vst.msk [vmem:[%s434 + $0x81] sm:$0xff] %vm378, %v357
        %447 = vst.msk [vmem:[%s434 + $0x91] sm:$0xff] %vm378, %v358
        %448 = vst.msk [vmem:[%s434 + $0x99] sm:$0xff] %vm378, %v359
        %449 = vst.msk [vmem:[%s434 + $0xa9] sm:$0xff] %vm378, %v360
        %450 = vst.msk [vmem:[%s434 + $0xb1] sm:$0xff] %vm378, %v361
        %451 = vst.msk [vmem:[%s434 + $0xc1] sm:$0xff] %vm378, %v362
        %452 = vst.msk [vmem:[%s434 + $0xc9] sm:$0xff] %vm378, %v363
        %453 = vst.msk [vmem:[%s434 + $0xd9] sm:$0xff] %vm378, %v364
        %454 = vst.msk [vmem:[%s434 + $0xe1] sm:$0xff] %vm378, %v365
        %455 = vst.msk [vmem:[%s434 + $0xf1] sm:$0xff] %vm378, %v366
        %456 = vst.msk [vmem:[%s434 + $0xf9] sm:$0xff] %vm378, %v367
        %457 = vst.msk [vmem:[%s434 + $0x109] sm:$0xff] %vm378, %v368
        %458 = vst.msk [vmem:[%s434 + $0x111] sm:$0xff] %vm378, %v369
        %459 = vst.msk [vmem:[%s434 + $0x121] sm:$0xff] %vm378, %v370
        %460 = vst.msk [vmem:[%s434 + $0x129] sm:$0xff] %vm378, %v371
        %461 = vst.msk [vmem:[%s434 + $0x139] sm:$0xff] %vm378, %v372
        %462 = vst.msk [vmem:[%s434 + $0x141] sm:$0xff] %vm378, %v373
        %463 = vst.msk [vmem:[%s434 + $0x151] sm:$0xff] %vm378, %v374
        %464 = vst.msk [vmem:[%s434 + $0x159] sm:$0xff] %vm378, %v375
        %465 = vst.msk [vmem:[%s434 + $0x169] sm:$0xff] %vm378, %v376
        %466 = vst.msk [vmem:[%s434 + $0x171] sm:$0xff] %vm378, %v377
        %v467 = vld [vmem:[#allocation2] sm:$0xff]
        %v468 = vld [vmem:[#allocation2 + $0x8] sm:$0xff]
        %v469 = vld [vmem:[#allocation2 + $0x10] sm:$0x3]
        %v470 = vld [vmem:[#allocation2 + $0x18] sm:$0xff]
        %v471 = vld [vmem:[#allocation2 + $0x20] sm:$0xff]
        %v472 = vld [vmem:[#allocation2 + $0x28] sm:$0x3]
        %v473 = vld [vmem:[#allocation2 + $0x30] sm:$0xff]
        %v474 = vld [vmem:[#allocation2 + $0x38] sm:$0xff]
        %v475 = vld [vmem:[#allocation2 + $0x40] sm:$0x3]
        %v476 = vld [vmem:[#allocation2 + $0x48] sm:$0xff]
        %v477 = vld [vmem:[#allocation2 + $0x50] sm:$0xff]
        %v478 = vld [vmem:[#allocation2 + $0x58] sm:$0x3]
        %v479 = vld [vmem:[#allocation2 + $0x60] sm:$0xff]
        %v480 = vld [vmem:[#allocation2 + $0x68] sm:$0xff]
        %v481 = vld [vmem:[#allocation2 + $0x70] sm:$0x3]
        %v482 = vld [vmem:[#allocation2 + $0x78] sm:$0xff]
        %v483 = vld [vmem:[#allocation2 + $0x80] sm:$0xff]
        %v484 = vld [vmem:[#allocation2 + $0x88] sm:$0x3]
        %v485 = vld [vmem:[#allocation2 + $0x90] sm:$0xff]
        %v486 = vld [vmem:[#allocation2 + $0x98] sm:$0xff]
        %v487 = vld [vmem:[#allocation2 + $0xa0] sm:$0x3]
        %v488 = vld [vmem:[#allocation2 + $0xa8] sm:$0xff]
        %v489 = vld [vmem:[#allocation2 + $0xb0] sm:$0xff]
        %v490 = vld [vmem:[#allocation2 + $0xb8] sm:$0x3]
        %v491 = vld [vmem:[#allocation2 + $0xc0] sm:$0xff]
        %v492 = vld [vmem:[#allocation2 + $0xc8] sm:$0xff]
        %v493 = vld [vmem:[#allocation2 + $0xd0] sm:$0x3]
        %v494 = vld [vmem:[#allocation2 + $0xd8] sm:$0xff]
        %v495 = vld [vmem:[#allocation2 + $0xe0] sm:$0xff]
        %v496 = vld [vmem:[#allocation2 + $0xe8] sm:$0x3]
        %v497 = vld [vmem:[#allocation2 + $0xf0] sm:$0xff]
        %v498 = vld [vmem:[#allocation2 + $0xf8] sm:$0xff]
        %v499 = vld [vmem:[#allocation2 + $0x100] sm:$0x3]
        %v500 = vld [vmem:[#allocation2 + $0x108] sm:$0xff]
        %v501 = vld [vmem:[#allocation2 + $0x110] sm:$0xff]
        %v502 = vld [vmem:[#allocation2 + $0x118] sm:$0x3]
        %v503 = vld [vmem:[#allocation2 + $0x120] sm:$0xff]
        %v504 = vld [vmem:[#allocation2 + $0x128] sm:$0xff]
        %v505 = vld [vmem:[#allocation2 + $0x130] sm:$0x3]
        %v506 = vld [vmem:[#allocation2 + $0x138] sm:$0xff]
        %v507 = vld [vmem:[#allocation2 + $0x140] sm:$0xff]
        %v508 = vld [vmem:[#allocation2 + $0x148] sm:$0x3]
        %v509 = vld [vmem:[#allocation2 + $0x150] sm:$0xff]
        %v510 = vld [vmem:[#allocation2 + $0x158] sm:$0xff]
        %v511 = vld [vmem:[#allocation2 + $0x160] sm:$0x3]
        %v512 = vld [vmem:[#allocation2 + $0x168] sm:$0xff]
        %v513 = vld [vmem:[#allocation2 + $0x170] sm:$0xff]
        %v514 = vld [vmem:[#allocation2 + $0x178] sm:$0x3]
        %v515 = vld [vmem:[#allocation2 + $0x180] sm:$0xff]
        %v516 = vld [vmem:[#allocation2 + $0x188] sm:$0xff]
        %v517 = vld [vmem:[#allocation2 + $0x190] sm:$0x3]
        %v518 = vld [vmem:[#allocation2 + $0x198] sm:$0xff]
        %v519 = vld [vmem:[#allocation2 + $0x1a0] sm:$0xff]
        %v520 = vld [vmem:[#allocation2 + $0x1a8] sm:$0x3]
        %521 = vst.msk [vmem:[#allocation3] sm:$0xff] %vm378, %v467
        %522 = vst.msk [vmem:[#allocation3 + $0x8] sm:$0xff] %vm378, %v468
        %523 = vst.msk [vmem:[#allocation3 + $0x10] sm:$0xff] %vm378, %v470
        %524 = vst.msk [vmem:[#allocation3 + $0x18] sm:$0xff] %vm378, %v471
        %525 = vst.msk [vmem:[#allocation3 + $0x20] sm:$0xff] %vm378, %v473
        %526 = vst.msk [vmem:[#allocation3 + $0x28] sm:$0xff] %vm378, %v474
        %527 = vst.msk [vmem:[#allocation3 + $0x30] sm:$0xff] %vm378, %v476
        %528 = vst.msk [vmem:[#allocation3 + $0x38] sm:$0xff] %vm378, %v477
        %529 = vst.msk [vmem:[#allocation3 + $0x40] sm:$0xff] %vm378, %v479
        %530 = vst.msk [vmem:[#allocation3 + $0x48] sm:$0xff] %vm378, %v480
        %531 = vst.msk [vmem:[#allocation3 + $0x50] sm:$0xff] %vm378, %v482
        %532 = vst.msk [vmem:[#allocation3 + $0x58] sm:$0xff] %vm378, %v483
        %533 = vst.msk [vmem:[#allocation3 + $0x60] sm:$0xff] %vm378, %v485
        %534 = vst.msk [vmem:[#allocation3 + $0x68] sm:$0xff] %vm378, %v486
        %535 = vst.msk [vmem:[#allocation3 + $0x70] sm:$0xff] %vm378, %v488
        %536 = vst.msk [vmem:[#allocation3 + $0x78] sm:$0xff] %vm378, %v489
        %537 = vst.msk [vmem:[#allocation3 + $0x80] sm:$0xff] %vm378, %v491
        %538 = vst.msk [vmem:[#allocation3 + $0x88] sm:$0xff] %vm378, %v492
        %539 = vst.msk [vmem:[#allocation3 + $0x90] sm:$0xff] %vm378, %v494
        %540 = vst.msk [vmem:[#allocation3 + $0x98] sm:$0xff] %vm378, %v495
        %541 = vst.msk [vmem:[#allocation3 + $0xa0] sm:$0xff] %vm378, %v497
        %542 = vst.msk [vmem:[#allocation3 + $0xa8] sm:$0xff] %vm378, %v498
        %543 = vst.msk [vmem:[#allocation3 + $0xb0] sm:$0xff] %vm378, %v500
        %544 = vst.msk [vmem:[#allocation3 + $0xb8] sm:$0xff] %vm378, %v501
        %545 = vst.msk [vmem:[#allocation3 + $0xc0] sm:$0xff] %vm378, %v503
        %546 = vst.msk [vmem:[#allocation3 + $0xc8] sm:$0xff] %vm378, %v504
        %547 = vst.msk [vmem:[#allocation3 + $0xd0] sm:$0xff] %vm378, %v506
        %548 = vst.msk [vmem:[#allocation3 + $0xd8] sm:$0xff] %vm378, %v507
        %549 = vst.msk [vmem:[#allocation3 + $0xe0] sm:$0xff] %vm378, %v509
        %550 = vst.msk [vmem:[#allocation3 + $0xe8] sm:$0xff] %vm378, %v510
        %551 = vst.msk [vmem:[#allocation3 + $0xf0] sm:$0xff] %vm378, %v512
        %552 = vst.msk [vmem:[#allocation3 + $0xf8] sm:$0xff] %vm378, %v513
        %vm601 = vcmask 1046528
        %v602 = vrot.slane %v467, 1
        %v603 = vrot.slane %v468, 1
        %v604 = vsel %vm601, %v602, %v603
        %v605 = vrot.slane %v469, 1
        %v606 = vsel %vm601, %v603, %v605
        %v607 = vrot.slane %v470, 1
        %v608 = vrot.slane %v471, 1
        %v609 = vsel %vm601, %v607, %v608
        %v610 = vrot.slane %v472, 1
        %v611 = vsel %vm601, %v608, %v610
        %v612 = vrot.slane %v473, 1
        %v613 = vrot.slane %v474, 1
        %v614 = vsel %vm601, %v612, %v613
        %v615 = vrot.slane %v475, 1
        %v616 = vsel %vm601, %v613, %v615
        %v617 = vrot.slane %v476, 1
        %v618 = vrot.slane %v477, 1
        %v619 = vsel %vm601, %v617, %v618
        %v620 = vrot.slane %v478, 1
        %v621 = vsel %vm601, %v618, %v620
        %v622 = vrot.slane %v479, 1
        %v623 = vrot.slane %v480, 1
        %v624 = vsel %vm601, %v622, %v623
        %v625 = vrot.slane %v481, 1
        %v626 = vsel %vm601, %v623, %v625
        %v627 = vrot.slane %v482, 1
        %v628 = vrot.slane %v483, 1
        %v629 = vsel %vm601, %v627, %v628
        %v630 = vrot.slane %v484, 1
        %v631 = vsel %vm601, %v628, %v630
        %v632 = vrot.slane %v485, 1
        %v633 = vrot.slane %v486, 1
        %v634 = vsel %vm601, %v632, %v633
        %v635 = vrot.slane %v487, 1
        %v636 = vsel %vm601, %v633, %v635
        %v637 = vrot.slane %v488, 1
        %v638 = vrot.slane %v489, 1
        %v639 = vsel %vm601, %v637, %v638
        %v640 = vrot.slane %v490, 1
        %v641 = vsel %vm601, %v638, %v640
        %v642 = vrot.slane %v491, 1
        %v643 = vrot.slane %v492, 1
        %v644 = vsel %vm601, %v642, %v643
        %v645 = vrot.slane %v493, 1
        %v646 = vsel %vm601, %v643, %v645
        %v647 = vrot.slane %v494, 1
        %v648 = vrot.slane %v495, 1
        %v649 = vsel %vm601, %v647, %v648
        %v650 = vrot.slane %v496, 1
        %v651 = vsel %vm601, %v648, %v650
        %v652 = vrot.slane %v497, 1
        %v653 = vrot.slane %v498, 1
        %v654 = vsel %vm601, %v652, %v653
        %v655 = vrot.slane %v499, 1
        %v656 = vsel %vm601, %v653, %v655
        %v657 = vrot.slane %v500, 1
        %v658 = vrot.slane %v501, 1
        %v659 = vsel %vm601, %v657, %v658
        %v660 = vrot.slane %v502, 1
        %v661 = vsel %vm601, %v658, %v660
        %v662 = vrot.slane %v503, 1
        %v663 = vrot.slane %v504, 1
        %v664 = vsel %vm601, %v662, %v663
        %v665 = vrot.slane %v505, 1
        %v666 = vsel %vm601, %v663, %v665
        %v667 = vrot.slane %v506, 1
        %v668 = vrot.slane %v507, 1
        %v669 = vsel %vm601, %v667, %v668
        %v670 = vrot.slane %v508, 1
        %v671 = vsel %vm601, %v668, %v670
        %v672 = vrot.slane %v509, 1
        %v673 = vrot.slane %v510, 1
        %v674 = vsel %vm601, %v672, %v673
        %v675 = vrot.slane %v511, 1
        %v676 = vsel %vm601, %v673, %v675
        %v677 = vrot.slane %v512, 1
        %v678 = vrot.slane %v513, 1
        %v679 = vsel %vm601, %v677, %v678
        %v680 = vrot.slane %v514, 1
        %v681 = vsel %vm601, %v678, %v680
        %682 = vrot.lane.b32.xlu0 %v604, 3
        %v683 = vpop.permute.xlu0 %682
        %684 = vrot.lane.b32.xlu0 %v606, 3
        %v685 = vpop.permute.xlu0 %684
        %686 = vrot.lane.b32.xlu0 %v609, 3
        %v687 = vpop.permute.xlu0 %686
        %688 = vrot.lane.b32.xlu0 %v611, 3
        %v689 = vpop.permute.xlu0 %688
        %690 = vrot.lane.b32.xlu0 %v614, 3
        %v691 = vpop.permute.xlu0 %690
        %692 = vrot.lane.b32.xlu0 %v616, 3
        %v693 = vpop.permute.xlu0 %692
        %694 = vrot.lane.b32.xlu0 %v619, 3
        %v695 = vpop.permute.xlu0 %694
        %696 = vrot.lane.b32.xlu0 %v621, 3
        %v697 = vpop.permute.xlu0 %696
        %698 = vrot.lane.b32.xlu0 %v624, 3
        %v699 = vpop.permute.xlu0 %698
        %700 = vrot.lane.b32.xlu0 %v626, 3
        %v701 = vpop.permute.xlu0 %700
        %702 = vrot.lane.b32.xlu0 %v629, 3
        %v703 = vpop.permute.xlu0 %702
        %704 = vrot.lane.b32.xlu0 %v631, 3
        %v705 = vpop.permute.xlu0 %704
        %706 = vrot.lane.b32.xlu0 %v634, 3
        %v707 = vpop.permute.xlu0 %706
        %708 = vrot.lane.b32.xlu0 %v636, 3
        %v709 = vpop.permute.xlu0 %708
        %710 = vrot.lane.b32.xlu0 %v639, 3
        %v711 = vpop.permute.xlu0 %710
        %712 = vrot.lane.b32.xlu0 %v641, 3
        %v713 = vpop.permute.xlu0 %712
        %714 = vrot.lane.b32.xlu0 %v644, 3
        %v715 = vpop.permute.xlu0 %714
        %716 = vrot.lane.b32.xlu0 %v646, 3
        %v717 = vpop.permute.xlu0 %716
        %718 = vrot.lane.b32.xlu0 %v649, 3
        %v719 = vpop.permute.xlu0 %718
        %720 = vrot.lane.b32.xlu0 %v651, 3
        %v721 = vpop.permute.xlu0 %720
        %722 = vrot.lane.b32.xlu0 %v654, 3
        %v723 = vpop.permute.xlu0 %722
        %724 = vrot.lane.b32.xlu0 %v656, 3
        %v725 = vpop.permute.xlu0 %724
        %726 = vrot.lane.b32.xlu0 %v659, 3
        %v727 = vpop.permute.xlu0 %726
        %728 = vrot.lane.b32.xlu0 %v661, 3
        %v729 = vpop.permute.xlu0 %728
        %730 = vrot.lane.b32.xlu0 %v664, 3
        %v731 = vpop.permute.xlu0 %730
        %732 = vrot.lane.b32.xlu0 %v666, 3
        %v733 = vpop.permute.xlu0 %732
        %734 = vrot.lane.b32.xlu0 %v669, 3
        %v735 = vpop.permute.xlu0 %734
        %736 = vrot.lane.b32.xlu0 %v671, 3
        %v737 = vpop.permute.xlu0 %736
        %738 = vrot.lane.b32.xlu0 %v674, 3
        %v739 = vpop.permute.xlu0 %738
        %740 = vrot.lane.b32.xlu0 %v676, 3
        %v741 = vpop.permute.xlu0 %740
        %742 = vrot.lane.b32.xlu0 %v679, 3
        %v743 = vpop.permute.xlu0 %742
        %744 = vrot.lane.b32.xlu0 %v681, 3
        %v745 = vpop.permute.xlu0 %744
        %vm778 = vcmask 48152
        %779 = vst.msk [vmem:[#allocation3] sm:$0xff] %vm778, %v683
        %780 = vst.msk [vmem:[#allocation3 + $0x8] sm:$0xff] %vm778, %v685
        %781 = vst.msk [vmem:[#allocation3 + $0x10] sm:$0xff] %vm778, %v687
        %782 = vst.msk [vmem:[#allocation3 + $0x18] sm:$0xff] %vm778, %v689
        %783 = vst.msk [vmem:[#allocation3 + $0x20] sm:$0xff] %vm778, %v691
        %784 = vst.msk [vmem:[#allocation3 + $0x28] sm:$0xff] %vm778, %v693
        %785 = vst.msk [vmem:[#allocation3 + $0x30] sm:$0xff] %vm778, %v695
        %786 = vst.msk [vmem:[#allocation3 + $0x38] sm:$0xff] %vm778, %v697
        %787 = vst.msk [vmem:[#allocation3 + $0x40] sm:$0xff] %vm778, %v699
        %788 = vst.msk [vmem:[#allocation3 + $0x48] sm:$0xff] %vm778, %v701
        %789 = vst.msk [vmem:[#allocation3 + $0x50] sm:$0xff] %vm778, %v703
        %790 = vst.msk [vmem:[#allocation3 + $0x58] sm:$0xff] %vm778, %v705
        %791 = vst.msk [vmem:[#allocation3 + $0x60] sm:$0xff] %vm778, %v707
        %792 = vst.msk [vmem:[#allocation3 + $0x68] sm:$0xff] %vm778, %v709
        %793 = vst.msk [vmem:[#allocation3 + $0x70] sm:$0xff] %vm778, %v711
        %794 = vst.msk [vmem:[#allocation3 + $0x78] sm:$0xff] %vm778, %v713
        %795 = vst.msk [vmem:[#allocation3 + $0x80] sm:$0xff] %vm778, %v715
        %796 = vst.msk [vmem:[#allocation3 + $0x88] sm:$0xff] %vm778, %v717
        %797 = vst.msk [vmem:[#allocation3 + $0x90] sm:$0xff] %vm778, %v719
        %798 = vst.msk [vmem:[#allocation3 + $0x98] sm:$0xff] %vm778, %v721
        %799 = vst.msk [vmem:[#allocation3 + $0xa0] sm:$0xff] %vm778, %v723
        %800 = vst.msk [vmem:[#allocation3 + $0xa8] sm:$0xff] %vm778, %v725
        %801 = vst.msk [vmem:[#allocation3 + $0xb0] sm:$0xff] %vm778, %v727
        %802 = vst.msk [vmem:[#allocation3 + $0xb8] sm:$0xff] %vm778, %v729
        %803 = vst.msk [vmem:[#allocation3 + $0xc0] sm:$0xff] %vm778, %v731
        %804 = vst.msk [vmem:[#allocation3 + $0xc8] sm:$0xff] %vm778, %v733
        %805 = vst.msk [vmem:[#allocation3 + $0xd0] sm:$0xff] %vm778, %v735
        %806 = vst.msk [vmem:[#allocation3 + $0xd8] sm:$0xff] %vm778, %v737
        %807 = vst.msk [vmem:[#allocation3 + $0xe0] sm:$0xff] %vm778, %v739
        %808 = vst.msk [vmem:[#allocation3 + $0xe8] sm:$0xff] %vm778, %v741
        %809 = vst.msk [vmem:[#allocation3 + $0xf0] sm:$0xff] %vm778, %v743
        %810 = vst.msk [vmem:[#allocation3 + $0xf8] sm:$0xff] %vm778, %v745
        %vm811 = vcmask 1045504
        %v812 = vrot.slane %v467, 2
        %v813 = vrot.slane %v468, 2
        %v814 = vsel %vm811, %v812, %v813
        %v815 = vrot.slane %v469, 2
        %v816 = vsel %vm811, %v813, %v815
        %v817 = vrot.slane %v470, 2
        %v818 = vrot.slane %v471, 2
        %v819 = vsel %vm811, %v817, %v818
        %v820 = vrot.slane %v472, 2
        %v821 = vsel %vm811, %v818, %v820
        %v822 = vrot.slane %v473, 2
        %v823 = vrot.slane %v474, 2
        %v824 = vsel %vm811, %v822, %v823
        %v825 = vrot.slane %v475, 2
        %v826 = vsel %vm811, %v823, %v825
        %v827 = vrot.slane %v476, 2
        %v828 = vrot.slane %v477, 2
        %v829 = vsel %vm811, %v827, %v828
        %v830 = vrot.slane %v478, 2
        %v831 = vsel %vm811, %v828, %v830
        %v832 = vrot.slane %v479, 2
        %v833 = vrot.slane %v480, 2
        %v834 = vsel %vm811, %v832, %v833
        %v835 = vrot.slane %v481, 2
        %v836 = vsel %vm811, %v833, %v835
        %v837 = vrot.slane %v482, 2
        %v838 = vrot.slane %v483, 2
        %v839 = vsel %vm811, %v837, %v838
        %v840 = vrot.slane %v484, 2
        %v841 = vsel %vm811, %v838, %v840
        %v842 = vrot.slane %v485, 2
        %v843 = vrot.slane %v486, 2
        %v844 = vsel %vm811, %v842, %v843
        %v845 = vrot.slane %v487, 2
        %v846 = vsel %vm811, %v843, %v845
        %v847 = vrot.slane %v488, 2
        %v848 = vrot.slane %v489, 2
        %v849 = vsel %vm811, %v847, %v848
        %v850 = vrot.slane %v490, 2
        %v851 = vsel %vm811, %v848, %v850
        %v852 = vrot.slane %v491, 2
        %v853 = vrot.slane %v492, 2
        %v854 = vsel %vm811, %v852, %v853
        %v855 = vrot.slane %v493, 2
        %v856 = vsel %vm811, %v853, %v855
        %v857 = vrot.slane %v494, 2
        %v858 = vrot.slane %v495, 2
        %v859 = vsel %vm811, %v857, %v858
        %v860 = vrot.slane %v496, 2
        %v861 = vsel %vm811, %v858, %v860
        %v862 = vrot.slane %v497, 2
        %v863 = vrot.slane %v498, 2
        %v864 = vsel %vm811, %v862, %v863
        %v865 = vrot.slane %v499, 2
        %v866 = vsel %vm811, %v863, %v865
        %v867 = vrot.slane %v500, 2
        %v868 = vrot.slane %v501, 2
        %v869 = vsel %vm811, %v867, %v868
        %v870 = vrot.slane %v502, 2
        %v871 = vsel %vm811, %v868, %v870
        %v872 = vrot.slane %v503, 2
        %v873 = vrot.slane %v504, 2
        %v874 = vsel %vm811, %v872, %v873
        %v875 = vrot.slane %v505, 2
        %v876 = vsel %vm811, %v873, %v875
        %v877 = vrot.slane %v506, 2
        %v878 = vrot.slane %v507, 2
        %v879 = vsel %vm811, %v877, %v878
        %v880 = vrot.slane %v508, 2
        %v881 = vsel %vm811, %v878, %v880
        %v882 = vrot.slane %v509, 2
        %v883 = vrot.slane %v510, 2
        %v884 = vsel %vm811, %v882, %v883
        %v885 = vrot.slane %v511, 2
        %v886 = vsel %vm811, %v883, %v885
        %v887 = vrot.slane %v512, 2
        %v888 = vrot.slane %v513, 2
        %v889 = vsel %vm811, %v887, %v888
        %v890 = vrot.slane %v514, 2
        %v891 = vsel %vm811, %v888, %v890
        %892 = vrot.lane.b32.xlu0 %v814, 6
        %v893 = vpop.permute.xlu0 %892
        %894 = vrot.lane.b32.xlu0 %v816, 6
        %v895 = vpop.permute.xlu0 %894
        %896 = vrot.lane.b32.xlu0 %v819, 6
        %v897 = vpop.permute.xlu0 %896
        %898 = vrot.lane.b32.xlu0 %v821, 6
        %v899 = vpop.permute.xlu0 %898
        %900 = vrot.lane.b32.xlu0 %v824, 6
        %v901 = vpop.permute.xlu0 %900
        %902 = vrot.lane.b32.xlu0 %v826, 6
        %v903 = vpop.permute.xlu0 %902
        %904 = vrot.lane.b32.xlu0 %v829, 6
        %v905 = vpop.permute.xlu0 %904
        %906 = vrot.lane.b32.xlu0 %v831, 6
        %v907 = vpop.permute.xlu0 %906
        %908 = vrot.lane.b32.xlu0 %v834, 6
        %v909 = vpop.permute.xlu0 %908
        %910 = vrot.lane.b32.xlu0 %v836, 6
        %v911 = vpop.permute.xlu0 %910
        %912 = vrot.lane.b32.xlu0 %v839, 6
        %v913 = vpop.permute.xlu0 %912
        %914 = vrot.lane.b32.xlu0 %v841, 6
        %v915 = vpop.permute.xlu0 %914
        %916 = vrot.lane.b32.xlu0 %v844, 6
        %v917 = vpop.permute.xlu0 %916
        %918 = vrot.lane.b32.xlu0 %v846, 6
        %v919 = vpop.permute.xlu0 %918
        %920 = vrot.lane.b32.xlu0 %v849, 6
        %v921 = vpop.permute.xlu0 %920
        %922 = vrot.lane.b32.xlu0 %v851, 6
        %v923 = vpop.permute.xlu0 %922
        %924 = vrot.lane.b32.xlu0 %v854, 6
        %v925 = vpop.permute.xlu0 %924
        %926 = vrot.lane.b32.xlu0 %v856, 6
        %v927 = vpop.permute.xlu0 %926
        %928 = vrot.lane.b32.xlu0 %v859, 6
        %v929 = vpop.permute.xlu0 %928
        %930 = vrot.lane.b32.xlu0 %v861, 6
        %v931 = vpop.permute.xlu0 %930
        %932 = vrot.lane.b32.xlu0 %v864, 6
        %v933 = vpop.permute.xlu0 %932
        %934 = vrot.lane.b32.xlu0 %v866, 6
        %v935 = vpop.permute.xlu0 %934
        %936 = vrot.lane.b32.xlu0 %v869, 6
        %v937 = vpop.permute.xlu0 %936
        %938 = vrot.lane.b32.xlu0 %v871, 6
        %v939 = vpop.permute.xlu0 %938
        %940 = vrot.lane.b32.xlu0 %v874, 6
        %v941 = vpop.permute.xlu0 %940
        %942 = vrot.lane.b32.xlu0 %v876, 6
        %v943 = vpop.permute.xlu0 %942
        %944 = vrot.lane.b32.xlu0 %v879, 6
        %v945 = vpop.permute.xlu0 %944
        %946 = vrot.lane.b32.xlu0 %v881, 6
        %v947 = vpop.permute.xlu0 %946
        %948 = vrot.lane.b32.xlu0 %v884, 6
        %v949 = vpop.permute.xlu0 %948
        %950 = vrot.lane.b32.xlu0 %v886, 6
        %v951 = vpop.permute.xlu0 %950
        %952 = vrot.lane.b32.xlu0 %v889, 6
        %v953 = vpop.permute.xlu0 %952
        %954 = vrot.lane.b32.xlu0 %v891, 6
        %v955 = vpop.permute.xlu0 %954
        %vm988 = vcmask 72752
        %989 = vst.msk [vmem:[#allocation3] sm:$0xff] %vm988, %v893
        %990 = vst.msk [vmem:[#allocation3 + $0x8] sm:$0xff] %vm988, %v895
        %991 = vst.msk [vmem:[#allocation3 + $0x10] sm:$0xff] %vm988, %v897
        %992 = vst.msk [vmem:[#allocation3 + $0x18] sm:$0xff] %vm988, %v899
        %993 = vst.msk [vmem:[#allocation3 + $0x20] sm:$0xff] %vm988, %v901
        %994 = vst.msk [vmem:[#allocation3 + $0x28] sm:$0xff] %vm988, %v903
        %995 = vst.msk [vmem:[#allocation3 + $0x30] sm:$0xff] %vm988, %v905
        %996 = vst.msk [vmem:[#allocation3 + $0x38] sm:$0xff] %vm988, %v907
        %997 = vst.msk [vmem:[#allocation3 + $0x40] sm:$0xff] %vm988, %v909
        %998 = vst.msk [vmem:[#allocation3 + $0x48] sm:$0xff] %vm988, %v911
        %999 = vst.msk [vmem:[#allocation3 + $0x50] sm:$0xff] %vm988, %v913
        %1000 = vst.msk [vmem:[#allocation3 + $0x58] sm:$0xff] %vm988, %v915
        %1001 = vst.msk [vmem:[#allocation3 + $0x60] sm:$0xff] %vm988, %v917
        %1002 = vst.msk [vmem:[#allocation3 + $0x68] sm:$0xff] %vm988, %v919
        %1003 = vst.msk [vmem:[#allocation3 + $0x70] sm:$0xff] %vm988, %v921
        %1004 = vst.msk [vmem:[#allocation3 + $0x78] sm:$0xff] %vm988, %v923
        %1005 = vst.msk [vmem:[#allocation3 + $0x80] sm:$0xff] %vm988, %v925
        %1006 = vst.msk [vmem:[#allocation3 + $0x88] sm:$0xff] %vm988, %v927
        %1007 = vst.msk [vmem:[#allocation3 + $0x90] sm:$0xff] %vm988, %v929
        %1008 = vst.msk [vmem:[#allocation3 + $0x98] sm:$0xff] %vm988, %v931
        %1009 = vst.msk [vmem:[#allocation3 + $0xa0] sm:$0xff] %vm988, %v933
        %1010 = vst.msk [vmem:[#allocation3 + $0xa8] sm:$0xff] %vm988, %v935
        %1011 = vst.msk [vmem:[#allocation3 + $0xb0] sm:$0xff] %vm988, %v937
        %1012 = vst.msk [vmem:[#allocation3 + $0xb8] sm:$0xff] %vm988, %v939
        %1013 = vst.msk [vmem:[#allocation3 + $0xc0] sm:$0xff] %vm988, %v941
        %1014 = vst.msk [vmem:[#allocation3 + $0xc8] sm:$0xff] %vm988, %v943
        %1015 = vst.msk [vmem:[#allocation3 + $0xd0] sm:$0xff] %vm988, %v945
        %1016 = vst.msk [vmem:[#allocation3 + $0xd8] sm:$0xff] %vm988, %v947
        %1017 = vst.msk [vmem:[#allocation3 + $0xe0] sm:$0xff] %vm988, %v949
        %1018 = vst.msk [vmem:[#allocation3 + $0xe8] sm:$0xff] %vm988, %v951
        %1019 = vst.msk [vmem:[#allocation3 + $0xf0] sm:$0xff] %vm988, %v953
        %1020 = vst.msk [vmem:[#allocation3 + $0xf8] sm:$0xff] %vm988, %v955
        %1023 = vrot.lane.b32.xlu0 %v470, 9
        %v1024 = vpop.permute.xlu0 %1023
        %1025 = vrot.lane.b32.xlu0 %v471, 9
        %v1026 = vpop.permute.xlu0 %1025
        %1027 = vrot.lane.b32.xlu0 %v473, 9
        %v1028 = vpop.permute.xlu0 %1027
        %1029 = vrot.lane.b32.xlu0 %v474, 9
        %v1030 = vpop.permute.xlu0 %1029
        %1031 = vrot.lane.b32.xlu0 %v476, 9
        %v1032 = vpop.permute.xlu0 %1031
        %1033 = vrot.lane.b32.xlu0 %v477, 9
        %v1034 = vpop.permute.xlu0 %1033
        %1035 = vrot.lane.b32.xlu0 %v479, 9
        %v1036 = vpop.permute.xlu0 %1035
        %1037 = vrot.lane.b32.xlu0 %v480, 9
        %v1038 = vpop.permute.xlu0 %1037
        %1039 = vrot.lane.b32.xlu0 %v482, 9
        %v1040 = vpop.permute.xlu0 %1039
        %1041 = vrot.lane.b32.xlu0 %v483, 9
        %v1042 = vpop.permute.xlu0 %1041
        %1043 = vrot.lane.b32.xlu0 %v485, 9
        %v1044 = vpop.permute.xlu0 %1043
        %1045 = vrot.lane.b32.xlu0 %v486, 9
        %v1046 = vpop.permute.xlu0 %1045
        %1047 = vrot.lane.b32.xlu0 %v488, 9
        %v1048 = vpop.permute.xlu0 %1047
        %1049 = vrot.lane.b32.xlu0 %v489, 9
        %v1050 = vpop.permute.xlu0 %1049
        %1051 = vrot.lane.b32.xlu0 %v491, 9
        %v1052 = vpop.permute.xlu0 %1051
        %1053 = vrot.lane.b32.xlu0 %v492, 9
        %v1054 = vpop.permute.xlu0 %1053
        %1055 = vrot.lane.b32.xlu0 %v494, 9
        %v1056 = vpop.permute.xlu0 %1055
        %1057 = vrot.lane.b32.xlu0 %v495, 9
        %v1058 = vpop.permute.xlu0 %1057
        %1059 = vrot.lane.b32.xlu0 %v497, 9
        %v1060 = vpop.permute.xlu0 %1059
        %1061 = vrot.lane.b32.xlu0 %v498, 9
        %v1062 = vpop.permute.xlu0 %1061
        %1063 = vrot.lane.b32.xlu0 %v500, 9
        %v1064 = vpop.permute.xlu0 %1063
        %1065 = vrot.lane.b32.xlu0 %v501, 9
        %v1066 = vpop.permute.xlu0 %1065
        %1067 = vrot.lane.b32.xlu0 %v503, 9
        %v1068 = vpop.permute.xlu0 %1067
        %1069 = vrot.lane.b32.xlu0 %v504, 9
        %v1070 = vpop.permute.xlu0 %1069
        %1071 = vrot.lane.b32.xlu0 %v506, 9
        %v1072 = vpop.permute.xlu0 %1071
        %1073 = vrot.lane.b32.xlu0 %v507, 9
        %v1074 = vpop.permute.xlu0 %1073
        %1075 = vrot.lane.b32.xlu0 %v509, 9
        %v1076 = vpop.permute.xlu0 %1075
        %1077 = vrot.lane.b32.xlu0 %v510, 9
        %v1078 = vpop.permute.xlu0 %1077
        %1079 = vrot.lane.b32.xlu0 %v512, 9
        %v1080 = vpop.permute.xlu0 %1079
        %1081 = vrot.lane.b32.xlu0 %v513, 9
        %v1082 = vpop.permute.xlu0 %1081
        %1083 = vrot.lane.b32.xlu0 %v515, 9
        %v1084 = vpop.permute.xlu0 %1083
        %1085 = vrot.lane.b32.xlu0 %v516, 9
        %v1086 = vpop.permute.xlu0 %1085
        %vm1119 = vcmask 97352
        %1120 = vst.msk [vmem:[#allocation3] sm:$0xff] %vm1119, %v1024
        %1121 = vst.msk [vmem:[#allocation3 + $0x8] sm:$0xff] %vm1119, %v1026
        %1122 = vst.msk [vmem:[#allocation3 + $0x10] sm:$0xff] %vm1119, %v1028
        %1123 = vst.msk [vmem:[#allocation3 + $0x18] sm:$0xff] %vm1119, %v1030
        %1124 = vst.msk [vmem:[#allocation3 + $0x20] sm:$0xff] %vm1119, %v1032
        %1125 = vst.msk [vmem:[#allocation3 + $0x28] sm:$0xff] %vm1119, %v1034
        %1126 = vst.msk [vmem:[#allocation3 + $0x30] sm:$0xff] %vm1119, %v1036
        %1127 = vst.msk [vmem:[#allocation3 + $0x38] sm:$0xff] %vm1119, %v1038
        %1128 = vst.msk [vmem:[#allocation3 + $0x40] sm:$0xff] %vm1119, %v1040
        %1129 = vst.msk [vmem:[#allocation3 + $0x48] sm:$0xff] %vm1119, %v1042
        %1130 = vst.msk [vmem:[#allocation3 + $0x50] sm:$0xff] %vm1119, %v1044
        %1131 = vst.msk [vmem:[#allocation3 + $0x58] sm:$0xff] %vm1119, %v1046
        %1132 = vst.msk [vmem:[#allocation3 + $0x60] sm:$0xff] %vm1119, %v1048
        %1133 = vst.msk [vmem:[#allocation3 + $0x68] sm:$0xff] %vm1119, %v1050
        %1134 = vst.msk [vmem:[#allocation3 + $0x70] sm:$0xff] %vm1119, %v1052
        %1135 = vst.msk [vmem:[#allocation3 + $0x78] sm:$0xff] %vm1119, %v1054
        %1136 = vst.msk [vmem:[#allocation3 + $0x80] sm:$0xff] %vm1119, %v1056
        %1137 = vst.msk [vmem:[#allocation3 + $0x88] sm:$0xff] %vm1119, %v1058
        %1138 = vst.msk [vmem:[#allocation3 + $0x90] sm:$0xff] %vm1119, %v1060
        %1139 = vst.msk [vmem:[#allocation3 + $0x98] sm:$0xff] %vm1119, %v1062
        %1140 = vst.msk [vmem:[#allocation3 + $0xa0] sm:$0xff] %vm1119, %v1064
        %1141 = vst.msk [vmem:[#allocation3 + $0xa8] sm:$0xff] %vm1119, %v1066
        %1142 = vst.msk [vmem:[#allocation3 + $0xb0] sm:$0xff] %vm1119, %v1068
        %1143 = vst.msk [vmem:[#allocation3 + $0xb8] sm:$0xff] %vm1119, %v1070
        %1144 = vst.msk [vmem:[#allocation3 + $0xc0] sm:$0xff] %vm1119, %v1072
        %1145 = vst.msk [vmem:[#allocation3 + $0xc8] sm:$0xff] %vm1119, %v1074
        %1146 = vst.msk [vmem:[#allocation3 + $0xd0] sm:$0xff] %vm1119, %v1076
        %1147 = vst.msk [vmem:[#allocation3 + $0xd8] sm:$0xff] %vm1119, %v1078
        %1148 = vst.msk [vmem:[#allocation3 + $0xe0] sm:$0xff] %vm1119, %v1080
        %1149 = vst.msk [vmem:[#allocation3 + $0xe8] sm:$0xff] %vm1119, %v1082
        %1150 = vst.msk [vmem:[#allocation3 + $0xf0] sm:$0xff] %vm1119, %v1084
        %1151 = vst.msk [vmem:[#allocation3 + $0xf8] sm:$0xff] %vm1119, %v1086
        %v1153 = vrot.slane %v515, 1
        %v1154 = vrot.slane %v516, 1
        %v1155 = vsel %vm601, %v1153, %v1154
        %v1156 = vrot.slane %v517, 1
        %v1157 = vsel %vm601, %v1154, %v1156
        %1158 = vrot.lane.b32.xlu0 %v609, 12
        %v1159 = vpop.permute.xlu0 %1158
        %1160 = vrot.lane.b32.xlu0 %v611, 12
        %v1161 = vpop.permute.xlu0 %1160
        %1162 = vrot.lane.b32.xlu0 %v614, 12
        %v1163 = vpop.permute.xlu0 %1162
        %1164 = vrot.lane.b32.xlu0 %v616, 12
        %v1165 = vpop.permute.xlu0 %1164
        %1166 = vrot.lane.b32.xlu0 %v619, 12
        %v1167 = vpop.permute.xlu0 %1166
        %1168 = vrot.lane.b32.xlu0 %v621, 12
        %v1169 = vpop.permute.xlu0 %1168
        %1170 = vrot.lane.b32.xlu0 %v624, 12
        %v1171 = vpop.permute.xlu0 %1170
        %1172 = vrot.lane.b32.xlu0 %v626, 12
        %v1173 = vpop.permute.xlu0 %1172
        %1174 = vrot.lane.b32.xlu0 %v629, 12
        %v1175 = vpop.permute.xlu0 %1174
        %1176 = vrot.lane.b32.xlu0 %v631, 12
        %v1177 = vpop.permute.xlu0 %1176
        %1178 = vrot.lane.b32.xlu0 %v634, 12
        %v1179 = vpop.permute.xlu0 %1178
        %1180 = vrot.lane.b32.xlu0 %v636, 12
        %v1181 = vpop.permute.xlu0 %1180
        %1182 = vrot.lane.b32.xlu0 %v639, 12
        %v1183 = vpop.permute.xlu0 %1182
        %1184 = vrot.lane.b32.xlu0 %v641, 12
        %v1185 = vpop.permute.xlu0 %1184
        %1186 = vrot.lane.b32.xlu0 %v644, 12
        %v1187 = vpop.permute.xlu0 %1186
        %1188 = vrot.lane.b32.xlu0 %v646, 12
        %v1189 = vpop.permute.xlu0 %1188
        %1190 = vrot.lane.b32.xlu0 %v649, 12
        %v1191 = vpop.permute.xlu0 %1190
        %1192 = vrot.lane.b32.xlu0 %v651, 12
        %v1193 = vpop.permute.xlu0 %1192
        %1194 = vrot.lane.b32.xlu0 %v654, 12
        %v1195 = vpop.permute.xlu0 %1194
        %1196 = vrot.lane.b32.xlu0 %v656, 12
        %v1197 = vpop.permute.xlu0 %1196
        %1198 = vrot.lane.b32.xlu0 %v659, 12
        %v1199 = vpop.permute.xlu0 %1198
        %1200 = vrot.lane.b32.xlu0 %v661, 12
        %v1201 = vpop.permute.xlu0 %1200
        %1202 = vrot.lane.b32.xlu0 %v664, 12
        %v1203 = vpop.permute.xlu0 %1202
        %1204 = vrot.lane.b32.xlu0 %v666, 12
        %v1205 = vpop.permute.xlu0 %1204
        %1206 = vrot.lane.b32.xlu0 %v669, 12
        %v1207 = vpop.permute.xlu0 %1206
        %1208 = vrot.lane.b32.xlu0 %v671, 12
        %v1209 = vpop.permute.xlu0 %1208
        %1210 = vrot.lane.b32.xlu0 %v674, 12
        %v1211 = vpop.permute.xlu0 %1210
        %1212 = vrot.lane.b32.xlu0 %v676, 12
        %v1213 = vpop.permute.xlu0 %1212
        %1214 = vrot.lane.b32.xlu0 %v679, 12
        %v1215 = vpop.permute.xlu0 %1214
        %1216 = vrot.lane.b32.xlu0 %v681, 12
        %v1217 = vpop.permute.xlu0 %1216
        %1218 = vrot.lane.b32.xlu0 %v1155, 12
        %v1219 = vpop.permute.xlu0 %1218
        %1220 = vrot.lane.b32.xlu0 %v1157, 12
        %v1221 = vpop.permute.xlu0 %1220
        %vm1254 = vcmask 121952
        %1255 = vst.msk [vmem:[#allocation3] sm:$0xff] %vm1254, %v1159
        %1256 = vst.msk [vmem:[#allocation3 + $0x8] sm:$0xff] %vm1254, %v1161
        %1257 = vst.msk [vmem:[#allocation3 + $0x10] sm:$0xff] %vm1254, %v1163
        %1258 = vst.msk [vmem:[#allocation3 + $0x18] sm:$0xff] %vm1254, %v1165
        %1259 = vst.msk [vmem:[#allocation3 + $0x20] sm:$0xff] %vm1254, %v1167
        %1260 = vst.msk [vmem:[#allocation3 + $0x28] sm:$0xff] %vm1254, %v1169
        %1261 = vst.msk [vmem:[#allocation3 + $0x30] sm:$0xff] %vm1254, %v1171
        %1262 = vst.msk [vmem:[#allocation3 + $0x38] sm:$0xff] %vm1254, %v1173
        %1263 = vst.msk [vmem:[#allocation3 + $0x40] sm:$0xff] %vm1254, %v1175
        %1264 = vst.msk [vmem:[#allocation3 + $0x48] sm:$0xff] %vm1254, %v1177
        %1265 = vst.msk [vmem:[#allocation3 + $0x50] sm:$0xff] %vm1254, %v1179
        %1266 = vst.msk [vmem:[#allocation3 + $0x58] sm:$0xff] %vm1254, %v1181
        %1267 = vst.msk [vmem:[#allocation3 + $0x60] sm:$0xff] %vm1254, %v1183
        %1268 = vst.msk [vmem:[#allocation3 + $0x68] sm:$0xff] %vm1254, %v1185
        %1269 = vst.msk [vmem:[#allocation3 + $0x70] sm:$0xff] %vm1254, %v1187
        %1270 = vst.msk [vmem:[#allocation3 + $0x78] sm:$0xff] %vm1254, %v1189
        %1271 = vst.msk [vmem:[#allocation3 + $0x80] sm:$0xff] %vm1254, %v1191
        %1272 = vst.msk [vmem:[#allocation3 + $0x88] sm:$0xff] %vm1254, %v1193
        %1273 = vst.msk [vmem:[#allocation3 + $0x90] sm:$0xff] %vm1254, %v1195
        %1274 = vst.msk [vmem:[#allocation3 + $0x98] sm:$0xff] %vm1254, %v1197
        %1275 = vst.msk [vmem:[#allocation3 + $0xa0] sm:$0xff] %vm1254, %v1199
        %1276 = vst.msk [vmem:[#allocation3 + $0xa8] sm:$0xff] %vm1254, %v1201
        %1277 = vst.msk [vmem:[#allocation3 + $0xb0] sm:$0xff] %vm1254, %v1203
        %1278 = vst.msk [vmem:[#allocation3 + $0xb8] sm:$0xff] %vm1254, %v1205
        %1279 = vst.msk [vmem:[#allocation3 + $0xc0] sm:$0xff] %vm1254, %v1207
        %1280 = vst.msk [vmem:[#allocation3 + $0xc8] sm:$0xff] %vm1254, %v1209
        %1281 = vst.msk [vmem:[#allocation3 + $0xd0] sm:$0xff] %vm1254, %v1211
        %1282 = vst.msk [vmem:[#allocation3 + $0xd8] sm:$0xff] %vm1254, %v1213
        %1283 = vst.msk [vmem:[#allocation3 + $0xe0] sm:$0xff] %vm1254, %v1215
        %1284 = vst.msk [vmem:[#allocation3 + $0xe8] sm:$0xff] %vm1254, %v1217
        %1285 = vst.msk [vmem:[#allocation3 + $0xf0] sm:$0xff] %vm1254, %v1219
        %1286 = vst.msk [vmem:[#allocation3 + $0xf8] sm:$0xff] %vm1254, %v1221
        %v1287 = vrot.slane %v515, 2
        %v1288 = vrot.slane %v516, 2
        %v1289 = vsel %vm811, %v1287, %v1288
        %v1290 = vrot.slane %v517, 2
        %v1291 = vsel %vm811, %v1288, %v1290
        %1292 = vrot.lane.b32.xlu0 %v819, 15
        %v1293 = vpop.permute.xlu0 %1292
        %1294 = vrot.lane.b32.xlu0 %v821, 15
        %v1295 = vpop.permute.xlu0 %1294
        %1296 = vrot.lane.b32.xlu0 %v824, 15
        %v1297 = vpop.permute.xlu0 %1296
        %1298 = vrot.lane.b32.xlu0 %v826, 15
        %v1299 = vpop.permute.xlu0 %1298
        %1300 = vrot.lane.b32.xlu0 %v829, 15
        %v1301 = vpop.permute.xlu0 %1300
        %1302 = vrot.lane.b32.xlu0 %v831, 15
        %v1303 = vpop.permute.xlu0 %1302
        %1304 = vrot.lane.b32.xlu0 %v834, 15
        %v1305 = vpop.permute.xlu0 %1304
        %1306 = vrot.lane.b32.xlu0 %v836, 15
        %v1307 = vpop.permute.xlu0 %1306
        %1308 = vrot.lane.b32.xlu0 %v839, 15
        %v1309 = vpop.permute.xlu0 %1308
        %1310 = vrot.lane.b32.xlu0 %v841, 15
        %v1311 = vpop.permute.xlu0 %1310
        %1312 = vrot.lane.b32.xlu0 %v844, 15
        %v1313 = vpop.permute.xlu0 %1312
        %1314 = vrot.lane.b32.xlu0 %v846, 15
        %v1315 = vpop.permute.xlu0 %1314
        %1316 = vrot.lane.b32.xlu0 %v849, 15
        %v1317 = vpop.permute.xlu0 %1316
        %1318 = vrot.lane.b32.xlu0 %v851, 15
        %v1319 = vpop.permute.xlu0 %1318
        %1320 = vrot.lane.b32.xlu0 %v854, 15
        %v1321 = vpop.permute.xlu0 %1320
        %1322 = vrot.lane.b32.xlu0 %v856, 15
        %v1323 = vpop.permute.xlu0 %1322
        %1324 = vrot.lane.b32.xlu0 %v859, 15
        %v1325 = vpop.permute.xlu0 %1324
        %1326 = vrot.lane.b32.xlu0 %v861, 15
        %v1327 = vpop.permute.xlu0 %1326
        %1328 = vrot.lane.b32.xlu0 %v864, 15
        %v1329 = vpop.permute.xlu0 %1328
        %1330 = vrot.lane.b32.xlu0 %v866, 15
        %v1331 = vpop.permute.xlu0 %1330
        %1332 = vrot.lane.b32.xlu0 %v869, 15
        %v1333 = vpop.permute.xlu0 %1332
        %1334 = vrot.lane.b32.xlu0 %v871, 15
        %v1335 = vpop.permute.xlu0 %1334
        %1336 = vrot.lane.b32.xlu0 %v874, 15
        %v1337 = vpop.permute.xlu0 %1336
        %1338 = vrot.lane.b32.xlu0 %v876, 15
        %v1339 = vpop.permute.xlu0 %1338
        %1340 = vrot.lane.b32.xlu0 %v879, 15
        %v1341 = vpop.permute.xlu0 %1340
        %1342 = vrot.lane.b32.xlu0 %v881, 15
        %v1343 = vpop.permute.xlu0 %1342
        %1344 = vrot.lane.b32.xlu0 %v884, 15
        %v1345 = vpop.permute.xlu0 %1344
        %1346 = vrot.lane.b32.xlu0 %v886, 15
        %v1347 = vpop.permute.xlu0 %1346
        %1348 = vrot.lane.b32.xlu0 %v889, 15
        %v1349 = vpop.permute.xlu0 %1348
        %1350 = vrot.lane.b32.xlu0 %v891, 15
        %v1351 = vpop.permute.xlu0 %1350
        %1352 = vrot.lane.b32.xlu0 %v1289, 15
        %v1353 = vpop.permute.xlu0 %1352
        %1354 = vrot.lane.b32.xlu0 %v1291, 15
        %v1355 = vpop.permute.xlu0 %1354
        %vm1388 = vcmask 146552
        %1389 = vst.msk [vmem:[#allocation3] sm:$0xff] %vm1388, %v1293
        %1390 = vst.msk [vmem:[#allocation3 + $0x8] sm:$0xff] %vm1388, %v1295
        %1391 = vst.msk [vmem:[#allocation3 + $0x10] sm:$0xff] %vm1388, %v1297
        %1392 = vst.msk [vmem:[#allocation3 + $0x18] sm:$0xff] %vm1388, %v1299
        %1393 = vst.msk [vmem:[#allocation3 + $0x20] sm:$0xff] %vm1388, %v1301
        %1394 = vst.msk [vmem:[#allocation3 + $0x28] sm:$0xff] %vm1388, %v1303
        %1395 = vst.msk [vmem:[#allocation3 + $0x30] sm:$0xff] %vm1388, %v1305
        %1396 = vst.msk [vmem:[#allocation3 + $0x38] sm:$0xff] %vm1388, %v1307
        %1397 = vst.msk [vmem:[#allocation3 + $0x40] sm:$0xff] %vm1388, %v1309
        %1398 = vst.msk [vmem:[#allocation3 + $0x48] sm:$0xff] %vm1388, %v1311
        %1399 = vst.msk [vmem:[#allocation3 + $0x50] sm:$0xff] %vm1388, %v1313
        %1400 = vst.msk [vmem:[#allocation3 + $0x58] sm:$0xff] %vm1388, %v1315
        %1401 = vst.msk [vmem:[#allocation3 + $0x60] sm:$0xff] %vm1388, %v1317
        %1402 = vst.msk [vmem:[#allocation3 + $0x68] sm:$0xff] %vm1388, %v1319
        %1403 = vst.msk [vmem:[#allocation3 + $0x70] sm:$0xff] %vm1388, %v1321
        %1404 = vst.msk [vmem:[#allocation3 + $0x78] sm:$0xff] %vm1388, %v1323
        %1405 = vst.msk [vmem:[#allocation3 + $0x80] sm:$0xff] %vm1388, %v1325
        %1406 = vst.msk [vmem:[#allocation3 + $0x88] sm:$0xff] %vm1388, %v1327
        %1407 = vst.msk [vmem:[#allocation3 + $0x90] sm:$0xff] %vm1388, %v1329
        %1408 = vst.msk [vmem:[#allocation3 + $0x98] sm:$0xff] %vm1388, %v1331
        %1409 = vst.msk [vmem:[#allocation3 + $0xa0] sm:$0xff] %vm1388, %v1333
        %1410 = vst.msk [vmem:[#allocation3 + $0xa8] sm:$0xff] %vm1388, %v1335
        %1411 = vst.msk [vmem:[#allocation3 + $0xb0] sm:$0xff] %vm1388, %v1337
        %1412 = vst.msk [vmem:[#allocation3 + $0xb8] sm:$0xff] %vm1388, %v1339
        %1413 = vst.msk [vmem:[#allocation3 + $0xc0] sm:$0xff] %vm1388, %v1341
        %1414 = vst.msk [vmem:[#allocation3 + $0xc8] sm:$0xff] %vm1388, %v1343
        %1415 = vst.msk [vmem:[#allocation3 + $0xd0] sm:$0xff] %vm1388, %v1345
        %1416 = vst.msk [vmem:[#allocation3 + $0xd8] sm:$0xff] %vm1388, %v1347
        %1417 = vst.msk [vmem:[#allocation3 + $0xe0] sm:$0xff] %vm1388, %v1349
        %1418 = vst.msk [vmem:[#allocation3 + $0xe8] sm:$0xff] %vm1388, %v1351
        %1419 = vst.msk [vmem:[#allocation3 + $0xf0] sm:$0xff] %vm1388, %v1353
        %1420 = vst.msk [vmem:[#allocation3 + $0xf8] sm:$0xff] %vm1388, %v1355
        %1423 = vrot.lane.b32.xlu0 %v473, 18
        %v1424 = vpop.permute.xlu0 %1423
        %1425 = vrot.lane.b32.xlu0 %v474, 18
        %v1426 = vpop.permute.xlu0 %1425
        %1427 = vrot.lane.b32.xlu0 %v476, 18
        %v1428 = vpop.permute.xlu0 %1427
        %1429 = vrot.lane.b32.xlu0 %v477, 18
        %v1430 = vpop.permute.xlu0 %1429
        %1431 = vrot.lane.b32.xlu0 %v479, 18
        %v1432 = vpop.permute.xlu0 %1431
        %1433 = vrot.lane.b32.xlu0 %v480, 18
        %v1434 = vpop.permute.xlu0 %1433
        %1435 = vrot.lane.b32.xlu0 %v482, 18
        %v1436 = vpop.permute.xlu0 %1435
        %1437 = vrot.lane.b32.xlu0 %v483, 18
        %v1438 = vpop.permute.xlu0 %1437
        %1439 = vrot.lane.b32.xlu0 %v485, 18
        %v1440 = vpop.permute.xlu0 %1439
        %1441 = vrot.lane.b32.xlu0 %v486, 18
        %v1442 = vpop.permute.xlu0 %1441
        %1443 = vrot.lane.b32.xlu0 %v488, 18
        %v1444 = vpop.permute.xlu0 %1443
        %1445 = vrot.lane.b32.xlu0 %v489, 18
        %v1446 = vpop.permute.xlu0 %1445
        %1447 = vrot.lane.b32.xlu0 %v491, 18
        %v1448 = vpop.permute.xlu0 %1447
        %1449 = vrot.lane.b32.xlu0 %v492, 18
        %v1450 = vpop.permute.xlu0 %1449
        %1451 = vrot.lane.b32.xlu0 %v494, 18
        %v1452 = vpop.permute.xlu0 %1451
        %1453 = vrot.lane.b32.xlu0 %v495, 18
        %v1454 = vpop.permute.xlu0 %1453
        %1455 = vrot.lane.b32.xlu0 %v497, 18
        %v1456 = vpop.permute.xlu0 %1455
        %1457 = vrot.lane.b32.xlu0 %v498, 18
        %v1458 = vpop.permute.xlu0 %1457
        %1459 = vrot.lane.b32.xlu0 %v500, 18
        %v1460 = vpop.permute.xlu0 %1459
        %1461 = vrot.lane.b32.xlu0 %v501, 18
        %v1462 = vpop.permute.xlu0 %1461
        %1463 = vrot.lane.b32.xlu0 %v503, 18
        %v1464 = vpop.permute.xlu0 %1463
        %1465 = vrot.lane.b32.xlu0 %v504, 18
        %v1466 = vpop.permute.xlu0 %1465
        %1467 = vrot.lane.b32.xlu0 %v506, 18
        %v1468 = vpop.permute.xlu0 %1467
        %1469 = vrot.lane.b32.xlu0 %v507, 18
        %v1470 = vpop.permute.xlu0 %1469
        %1471 = vrot.lane.b32.xlu0 %v509, 18
        %v1472 = vpop.permute.xlu0 %1471
        %1473 = vrot.lane.b32.xlu0 %v510, 18
        %v1474 = vpop.permute.xlu0 %1473
        %1475 = vrot.lane.b32.xlu0 %v512, 18
        %v1476 = vpop.permute.xlu0 %1475
        %1477 = vrot.lane.b32.xlu0 %v513, 18
        %v1478 = vpop.permute.xlu0 %1477
        %1479 = vrot.lane.b32.xlu0 %v515, 18
        %v1480 = vpop.permute.xlu0 %1479
        %1481 = vrot.lane.b32.xlu0 %v516, 18
        %v1482 = vpop.permute.xlu0 %1481
        %1483 = vrot.lane.b32.xlu0 %v518, 18
        %v1484 = vpop.permute.xlu0 %1483
        %1485 = vrot.lane.b32.xlu0 %v519, 18
        %v1486 = vpop.permute.xlu0 %1485
        %vm1519 = vcmask 171152
        %1520 = vst.msk [vmem:[#allocation3] sm:$0xff] %vm1519, %v1424
        %1521 = vst.msk [vmem:[#allocation3 + $0x8] sm:$0xff] %vm1519, %v1426
        %1522 = vst.msk [vmem:[#allocation3 + $0x10] sm:$0xff] %vm1519, %v1428
        %1523 = vst.msk [vmem:[#allocation3 + $0x18] sm:$0xff] %vm1519, %v1430
        %1524 = vst.msk [vmem:[#allocation3 + $0x20] sm:$0xff] %vm1519, %v1432
        %1525 = vst.msk [vmem:[#allocation3 + $0x28] sm:$0xff] %vm1519, %v1434
        %1526 = vst.msk [vmem:[#allocation3 + $0x30] sm:$0xff] %vm1519, %v1436
        %1527 = vst.msk [vmem:[#allocation3 + $0x38] sm:$0xff] %vm1519, %v1438
        %1528 = vst.msk [vmem:[#allocation3 + $0x40] sm:$0xff] %vm1519, %v1440
        %1529 = vst.msk [vmem:[#allocation3 + $0x48] sm:$0xff] %vm1519, %v1442
        %1530 = vst.msk [vmem:[#allocation3 + $0x50] sm:$0xff] %vm1519, %v1444
        %1531 = vst.msk [vmem:[#allocation3 + $0x58] sm:$0xff] %vm1519, %v1446
        %1532 = vst.msk [vmem:[#allocation3 + $0x60] sm:$0xff] %vm1519, %v1448
        %1533 = vst.msk [vmem:[#allocation3 + $0x68] sm:$0xff] %vm1519, %v1450
        %1534 = vst.msk [vmem:[#allocation3 + $0x70] sm:$0xff] %vm1519, %v1452
        %1535 = vst.msk [vmem:[#allocation3 + $0x78] sm:$0xff] %vm1519, %v1454
        %1536 = vst.msk [vmem:[#allocation3 + $0x80] sm:$0xff] %vm1519, %v1456
        %1537 = vst.msk [vmem:[#allocation3 + $0x88] sm:$0xff] %vm1519, %v1458
        %1538 = vst.msk [vmem:[#allocation3 + $0x90] sm:$0xff] %vm1519, %v1460
        %1539 = vst.msk [vmem:[#allocation3 + $0x98] sm:$0xff] %vm1519, %v1462
        %1540 = vst.msk [vmem:[#allocation3 + $0xa0] sm:$0xff] %vm1519, %v1464
        %1541 = vst.msk [vmem:[#allocation3 + $0xa8] sm:$0xff] %vm1519, %v1466
        %1542 = vst.msk [vmem:[#allocation3 + $0xb0] sm:$0xff] %vm1519, %v1468
        %1543 = vst.msk [vmem:[#allocation3 + $0xb8] sm:$0xff] %vm1519, %v1470
        %1544 = vst.msk [vmem:[#allocation3 + $0xc0] sm:$0xff] %vm1519, %v1472
        %1545 = vst.msk [vmem:[#allocation3 + $0xc8] sm:$0xff] %vm1519, %v1474
        %1546 = vst.msk [vmem:[#allocation3 + $0xd0] sm:$0xff] %vm1519, %v1476
        %1547 = vst.msk [vmem:[#allocation3 + $0xd8] sm:$0xff] %vm1519, %v1478
        %1548 = vst.msk [vmem:[#allocation3 + $0xe0] sm:$0xff] %vm1519, %v1480
        %1549 = vst.msk [vmem:[#allocation3 + $0xe8] sm:$0xff] %vm1519, %v1482
        %1550 = vst.msk [vmem:[#allocation3 + $0xf0] sm:$0xff] %vm1519, %v1484
        %1551 = vst.msk [vmem:[#allocation3 + $0xf8] sm:$0xff] %vm1519, %v1486
        %v1553 = vrot.slane %v518, 1
        %v1554 = vrot.slane %v519, 1
        %v1555 = vsel %vm601, %v1553, %v1554
        %v1556 = vrot.slane %v520, 1
        %v1557 = vsel %vm601, %v1554, %v1556
        %1558 = vrot.lane.b32.xlu0 %v614, 21
        %v1559 = vpop.permute.xlu0 %1558
        %1560 = vrot.lane.b32.xlu0 %v616, 21
        %v1561 = vpop.permute.xlu0 %1560
        %1562 = vrot.lane.b32.xlu0 %v619, 21
        %v1563 = vpop.permute.xlu0 %1562
        %1564 = vrot.lane.b32.xlu0 %v621, 21
        %v1565 = vpop.permute.xlu0 %1564
        %1566 = vrot.lane.b32.xlu0 %v624, 21
        %v1567 = vpop.permute.xlu0 %1566
        %1568 = vrot.lane.b32.xlu0 %v626, 21
        %v1569 = vpop.permute.xlu0 %1568
        %1570 = vrot.lane.b32.xlu0 %v629, 21
        %v1571 = vpop.permute.xlu0 %1570
        %1572 = vrot.lane.b32.xlu0 %v631, 21
        %v1573 = vpop.permute.xlu0 %1572
        %1574 = vrot.lane.b32.xlu0 %v634, 21
        %v1575 = vpop.permute.xlu0 %1574
        %1576 = vrot.lane.b32.xlu0 %v636, 21
        %v1577 = vpop.permute.xlu0 %1576
        %1578 = vrot.lane.b32.xlu0 %v639, 21
        %v1579 = vpop.permute.xlu0 %1578
        %1580 = vrot.lane.b32.xlu0 %v641, 21
        %v1581 = vpop.permute.xlu0 %1580
        %1582 = vrot.lane.b32.xlu0 %v644, 21
        %v1583 = vpop.permute.xlu0 %1582
        %1584 = vrot.lane.b32.xlu0 %v646, 21
        %v1585 = vpop.permute.xlu0 %1584
        %1586 = vrot.lane.b32.xlu0 %v649, 21
        %v1587 = vpop.permute.xlu0 %1586
        %1588 = vrot.lane.b32.xlu0 %v651, 21
        %v1589 = vpop.permute.xlu0 %1588
        %1590 = vrot.lane.b32.xlu0 %v654, 21
        %v1591 = vpop.permute.xlu0 %1590
        %1592 = vrot.lane.b32.xlu0 %v656, 21
        %v1593 = vpop.permute.xlu0 %1592
        %1594 = vrot.lane.b32.xlu0 %v659, 21
        %v1595 = vpop.permute.xlu0 %1594
        %1596 = vrot.lane.b32.xlu0 %v661, 21
        %v1597 = vpop.permute.xlu0 %1596
        %1598 = vrot.lane.b32.xlu0 %v664, 21
        %v1599 = vpop.permute.xlu0 %1598
        %1600 = vrot.lane.b32.xlu0 %v666, 21
        %v1601 = vpop.permute.xlu0 %1600
        %1602 = vrot.lane.b32.xlu0 %v669, 21
        %v1603 = vpop.permute.xlu0 %1602
        %1604 = vrot.lane.b32.xlu0 %v671, 21
        %v1605 = vpop.permute.xlu0 %1604
        %1606 = vrot.lane.b32.xlu0 %v674, 21
        %v1607 = vpop.permute.xlu0 %1606
        %1608 = vrot.lane.b32.xlu0 %v676, 21
        %v1609 = vpop.permute.xlu0 %1608
        %1610 = vrot.lane.b32.xlu0 %v679, 21
        %v1611 = vpop.permute.xlu0 %1610
        %1612 = vrot.lane.b32.xlu0 %v681, 21
        %v1613 = vpop.permute.xlu0 %1612
        %1614 = vrot.lane.b32.xlu0 %v1155, 21
        %v1615 = vpop.permute.xlu0 %1614
        %1616 = vrot.lane.b32.xlu0 %v1157, 21
        %v1617 = vpop.permute.xlu0 %1616
        %1618 = vrot.lane.b32.xlu0 %v1555, 21
        %v1619 = vpop.permute.xlu0 %1618
        %1620 = vrot.lane.b32.xlu0 %v1557, 21
        %v1621 = vpop.permute.xlu0 %1620
        %vm1654 = vcmask 195752
        %1655 = vst.msk [vmem:[#allocation3] sm:$0xff] %vm1654, %v1559
        %1656 = vst.msk [vmem:[#allocation3 + $0x8] sm:$0xff] %vm1654, %v1561
        %1657 = vst.msk [vmem:[#allocation3 + $0x10] sm:$0xff] %vm1654, %v1563
        %1658 = vst.msk [vmem:[#allocation3 + $0x18] sm:$0xff] %vm1654, %v1565
        %1659 = vst.msk [vmem:[#allocation3 + $0x20] sm:$0xff] %vm1654, %v1567
        %1660 = vst.msk [vmem:[#allocation3 + $0x28] sm:$0xff] %vm1654, %v1569
        %1661 = vst.msk [vmem:[#allocation3 + $0x30] sm:$0xff] %vm1654, %v1571
        %1662 = vst.msk [vmem:[#allocation3 + $0x38] sm:$0xff] %vm1654, %v1573
        %1663 = vst.msk [vmem:[#allocation3 + $0x40] sm:$0xff] %vm1654, %v1575
        %1664 = vst.msk [vmem:[#allocation3 + $0x48] sm:$0xff] %vm1654, %v1577
        %1665 = vst.msk [vmem:[#allocation3 + $0x50] sm:$0xff] %vm1654, %v1579
        %1666 = vst.msk [vmem:[#allocation3 + $0x58] sm:$0xff] %vm1654, %v1581
        %1667 = vst.msk [vmem:[#allocation3 + $0x60] sm:$0xff] %vm1654, %v1583
        %1668 = vst.msk [vmem:[#allocation3 + $0x68] sm:$0xff] %vm1654, %v1585
        %1669 = vst.msk [vmem:[#allocation3 + $0x70] sm:$0xff] %vm1654, %v1587
        %1670 = vst.msk [vmem:[#allocation3 + $0x78] sm:$0xff] %vm1654, %v1589
        %1671 = vst.msk [vmem:[#allocation3 + $0x80] sm:$0xff] %vm1654, %v1591
        %1672 = vst.msk [vmem:[#allocation3 + $0x88] sm:$0xff] %vm1654, %v1593
        %1673 = vst.msk [vmem:[#allocation3 + $0x90] sm:$0xff] %vm1654, %v1595
        %1674 = vst.msk [vmem:[#allocation3 + $0x98] sm:$0xff] %vm1654, %v1597
        %1675 = vst.msk [vmem:[#allocation3 + $0xa0] sm:$0xff] %vm1654, %v1599
        %1676 = vst.msk [vmem:[#allocation3 + $0xa8] sm:$0xff] %vm1654, %v1601
        %1677 = vst.msk [vmem:[#allocation3 + $0xb0] sm:$0xff] %vm1654, %v1603
        %1678 = vst.msk [vmem:[#allocation3 + $0xb8] sm:$0xff] %vm1654, %v1605
        %1679 = vst.msk [vmem:[#allocation3 + $0xc0] sm:$0xff] %vm1654, %v1607
        %1680 = vst.msk [vmem:[#allocation3 + $0xc8] sm:$0xff] %vm1654, %v1609
        %1681 = vst.msk [vmem:[#allocation3 + $0xd0] sm:$0xff] %vm1654, %v1611
        %1682 = vst.msk [vmem:[#allocation3 + $0xd8] sm:$0xff] %vm1654, %v1613
        %1683 = vst.msk [vmem:[#allocation3 + $0xe0] sm:$0xff] %vm1654, %v1615
        %1684 = vst.msk [vmem:[#allocation3 + $0xe8] sm:$0xff] %vm1654, %v1617
        %1685 = vst.msk [vmem:[#allocation3 + $0xf0] sm:$0xff] %vm1654, %v1619
        %1686 = vst.msk [vmem:[#allocation3 + $0xf8] sm:$0xff] %vm1654, %v1621
        %v1687 = vrot.slane %v518, 2
        %v1688 = vrot.slane %v519, 2
        %v1689 = vsel %vm811, %v1687, %v1688
        %v1690 = vrot.slane %v520, 2
        %v1691 = vsel %vm811, %v1688, %v1690
        %1692 = vrot.lane.b32.xlu0 %v824, 24
        %v1693 = vpop.permute.xlu0 %1692
        %1694 = vrot.lane.b32.xlu0 %v826, 24
        %v1695 = vpop.permute.xlu0 %1694
        %1696 = vrot.lane.b32.xlu0 %v829, 24
        %v1697 = vpop.permute.xlu0 %1696
        %1698 = vrot.lane.b32.xlu0 %v831, 24
        %v1699 = vpop.permute.xlu0 %1698
        %1700 = vrot.lane.b32.xlu0 %v834, 24
        %v1701 = vpop.permute.xlu0 %1700
        %1702 = vrot.lane.b32.xlu0 %v836, 24
        %v1703 = vpop.permute.xlu0 %1702
        %1704 = vrot.lane.b32.xlu0 %v839, 24
        %v1705 = vpop.permute.xlu0 %1704
        %1706 = vrot.lane.b32.xlu0 %v841, 24
        %v1707 = vpop.permute.xlu0 %1706
        %1708 = vrot.lane.b32.xlu0 %v844, 24
        %v1709 = vpop.permute.xlu0 %1708
        %1710 = vrot.lane.b32.xlu0 %v846, 24
        %v1711 = vpop.permute.xlu0 %1710
        %1712 = vrot.lane.b32.xlu0 %v849, 24
        %v1713 = vpop.permute.xlu0 %1712
        %1714 = vrot.lane.b32.xlu0 %v851, 24
        %v1715 = vpop.permute.xlu0 %1714
        %1716 = vrot.lane.b32.xlu0 %v854, 24
        %v1717 = vpop.permute.xlu0 %1716
        %1718 = vrot.lane.b32.xlu0 %v856, 24
        %v1719 = vpop.permute.xlu0 %1718
        %1720 = vrot.lane.b32.xlu0 %v859, 24
        %v1721 = vpop.permute.xlu0 %1720
        %1722 = vrot.lane.b32.xlu0 %v861, 24
        %v1723 = vpop.permute.xlu0 %1722
        %1724 = vrot.lane.b32.xlu0 %v864, 24
        %v1725 = vpop.permute.xlu0 %1724
        %1726 = vrot.lane.b32.xlu0 %v866, 24
        %v1727 = vpop.permute.xlu0 %1726
        %1728 = vrot.lane.b32.xlu0 %v869, 24
        %v1729 = vpop.permute.xlu0 %1728
        %1730 = vrot.lane.b32.xlu0 %v871, 24
        %v1731 = vpop.permute.xlu0 %1730
        %1732 = vrot.lane.b32.xlu0 %v874, 24
        %v1733 = vpop.permute.xlu0 %1732
        %1734 = vrot.lane.b32.xlu0 %v876, 24
        %v1735 = vpop.permute.xlu0 %1734
        %1736 = vrot.lane.b32.xlu0 %v879, 24
        %v1737 = vpop.permute.xlu0 %1736
        %1738 = vrot.lane.b32.xlu0 %v881, 24
        %v1739 = vpop.permute.xlu0 %1738
        %1740 = vrot.lane.b32.xlu0 %v884, 24
        %v1741 = vpop.permute.xlu0 %1740
        %1742 = vrot.lane.b32.xlu0 %v886, 24
        %v1743 = vpop.permute.xlu0 %1742
        %1744 = vrot.lane.b32.xlu0 %v889, 24
        %v1745 = vpop.permute.xlu0 %1744
        %1746 = vrot.lane.b32.xlu0 %v891, 24
        %v1747 = vpop.permute.xlu0 %1746
        %1748 = vrot.lane.b32.xlu0 %v1289, 24
        %v1749 = vpop.permute.xlu0 %1748
        %1750 = vrot.lane.b32.xlu0 %v1291, 24
        %v1751 = vpop.permute.xlu0 %1750
        %1752 = vrot.lane.b32.xlu0 %v1689, 24
        %v1753 = vpop.permute.xlu0 %1752
        %1754 = vrot.lane.b32.xlu0 %v1691, 24
        %v1755 = vpop.permute.xlu0 %1754
        %vm1788 = vcmask 220352
        %1789 = vst.msk [vmem:[#allocation3] sm:$0xff] %vm1788, %v1693
        %1790 = vst.msk [vmem:[#allocation3 + $0x8] sm:$0xff] %vm1788, %v1695
        %1791 = vst.msk [vmem:[#allocation3 + $0x10] sm:$0xff] %vm1788, %v1697
        %1792 = vst.msk [vmem:[#allocation3 + $0x18] sm:$0xff] %vm1788, %v1699
        %1793 = vst.msk [vmem:[#allocation3 + $0x20] sm:$0xff] %vm1788, %v1701
        %1794 = vst.msk [vmem:[#allocation3 + $0x28] sm:$0xff] %vm1788, %v1703
        %1795 = vst.msk [vmem:[#allocation3 + $0x30] sm:$0xff] %vm1788, %v1705
        %1796 = vst.msk [vmem:[#allocation3 + $0x38] sm:$0xff] %vm1788, %v1707
        %1797 = vst.msk [vmem:[#allocation3 + $0x40] sm:$0xff] %vm1788, %v1709
        %1798 = vst.msk [vmem:[#allocation3 + $0x48] sm:$0xff] %vm1788, %v1711
        %1799 = vst.msk [vmem:[#allocation3 + $0x50] sm:$0xff] %vm1788, %v1713
        %1800 = vst.msk [vmem:[#allocation3 + $0x58] sm:$0xff] %vm1788, %v1715
        %1801 = vst.msk [vmem:[#allocation3 + $0x60] sm:$0xff] %vm1788, %v1717
        %1802 = vst.msk [vmem:[#allocation3 + $0x68] sm:$0xff] %vm1788, %v1719
        %1803 = vst.msk [vmem:[#allocation3 + $0x70] sm:$0xff] %vm1788, %v1721
        %1804 = vst.msk [vmem:[#allocation3 + $0x78] sm:$0xff] %vm1788, %v1723
        %1805 = vst.msk [vmem:[#allocation3 + $0x80] sm:$0xff] %vm1788, %v1725
        %1806 = vst.msk [vmem:[#allocation3 + $0x88] sm:$0xff] %vm1788, %v1727
        %1807 = vst.msk [vmem:[#allocation3 + $0x90] sm:$0xff] %vm1788, %v1729
        %1808 = vst.msk [vmem:[#allocation3 + $0x98] sm:$0xff] %vm1788, %v1731
        %1809 = vst.msk [vmem:[#allocation3 + $0xa0] sm:$0xff] %vm1788, %v1733
        %1810 = vst.msk [vmem:[#allocation3 + $0xa8] sm:$0xff] %vm1788, %v1735
        %1811 = vst.msk [vmem:[#allocation3 + $0xb0] sm:$0xff] %vm1788, %v1737
        %1812 = vst.msk [vmem:[#allocation3 + $0xb8] sm:$0xff] %vm1788, %v1739
        %1813 = vst.msk [vmem:[#allocation3 + $0xc0] sm:$0xff] %vm1788, %v1741
        %1814 = vst.msk [vmem:[#allocation3 + $0xc8] sm:$0xff] %vm1788, %v1743
        %1815 = vst.msk [vmem:[#allocation3 + $0xd0] sm:$0xff] %vm1788, %v1745
        %1816 = vst.msk [vmem:[#allocation3 + $0xd8] sm:$0xff] %vm1788, %v1747
        %1817 = vst.msk [vmem:[#allocation3 + $0xe0] sm:$0xff] %vm1788, %v1749
        %1818 = vst.msk [vmem:[#allocation3 + $0xe8] sm:$0xff] %vm1788, %v1751
        %1819 = vst.msk [vmem:[#allocation3 + $0xf0] sm:$0xff] %vm1788, %v1753
        %1820 = vst.msk [vmem:[#allocation3 + $0xf8] sm:$0xff] %vm1788, %v1755
        %v1821 = vld [vmem:[#allocation3] sm:$0xff]
        %v1822 = vld [vmem:[#allocation3 + $0x8] sm:$0xff]
        %v1823 = vld [vmem:[#allocation3 + $0x10] sm:$0xff]
        %v1824 = vld [vmem:[#allocation3 + $0x18] sm:$0xff]
        %v1825 = vld [vmem:[#allocation3 + $0x20] sm:$0xff]
        %v1826 = vld [vmem:[#allocation3 + $0x28] sm:$0xff]
        %v1827 = vld [vmem:[#allocation3 + $0x30] sm:$0xff]
        %v1828 = vld [vmem:[#allocation3 + $0x38] sm:$0xff]
        %v1829 = vld [vmem:[#allocation3 + $0x40] sm:$0xff]
        %v1830 = vld [vmem:[#allocation3 + $0x48] sm:$0xff]
        %v1831 = vld [vmem:[#allocation3 + $0x50] sm:$0xff]
        %v1832 = vld [vmem:[#allocation3 + $0x58] sm:$0xff]
        %v1833 = vld [vmem:[#allocation3 + $0x60] sm:$0xff]
        %v1834 = vld [vmem:[#allocation3 + $0x68] sm:$0xff]
        %v1835 = vld [vmem:[#allocation3 + $0x70] sm:$0xff]
        %v1836 = vld [vmem:[#allocation3 + $0x78] sm:$0xff]
        %v1837 = vld [vmem:[#allocation3 + $0x80] sm:$0xff]
        %v1838 = vld [vmem:[#allocation3 + $0x88] sm:$0xff]
        %v1839 = vld [vmem:[#allocation3 + $0x90] sm:$0xff]
        %v1840 = vld [vmem:[#allocation3 + $0x98] sm:$0xff]
        %v1841 = vld [vmem:[#allocation3 + $0xa0] sm:$0xff]
        %v1842 = vld [vmem:[#allocation3 + $0xa8] sm:$0xff]
        %v1843 = vld [vmem:[#allocation3 + $0xb0] sm:$0xff]
        %v1844 = vld [vmem:[#allocation3 + $0xb8] sm:$0xff]
        %v1845 = vld [vmem:[#allocation3 + $0xc0] sm:$0xff]
        %v1846 = vld [vmem:[#allocation3 + $0xc8] sm:$0xff]
        %v1847 = vld [vmem:[#allocation3 + $0xd0] sm:$0xff]
        %v1848 = vld [vmem:[#allocation3 + $0xd8] sm:$0xff]
        %v1849 = vld [vmem:[#allocation3 + $0xe0] sm:$0xff]
        %v1850 = vld [vmem:[#allocation3 + $0xe8] sm:$0xff]
        %v1851 = vld [vmem:[#allocation3 + $0xf0] sm:$0xff]
        %v1852 = vld [vmem:[#allocation3 + $0xf8] sm:$0xff]
        %v1853 = vpack.c.bf16 %v1822, %v1821
        %v1854 = vpack.c.bf16 %v1824, %v1823
        %v1855 = vpack.c.bf16 %v1826, %v1825
        %v1856 = vpack.c.bf16 %v1828, %v1827
        %v1857 = vpack.c.bf16 %v1830, %v1829
        %v1858 = vpack.c.bf16 %v1832, %v1831
        %v1859 = vpack.c.bf16 %v1834, %v1833
        %v1860 = vpack.c.bf16 %v1836, %v1835
        %v1861 = vpack.c.bf16 %v1838, %v1837
        %v1862 = vpack.c.bf16 %v1840, %v1839
        %v1863 = vpack.c.bf16 %v1842, %v1841
        %v1864 = vpack.c.bf16 %v1844, %v1843
        %v1865 = vpack.c.bf16 %v1846, %v1845
        %v1866 = vpack.c.bf16 %v1848, %v1847
        %v1867 = vpack.c.bf16 %v1850, %v1849
        %v1868 = vpack.c.bf16 %v1852, %v1851
        %v1869 = vld [vmem:[%s1] sm:$0xf]
        %v1870 = vld [vmem:[%s1 + $0x4] sm:$0xf]
        %v1871 = vld [vmem:[%s1 + $0x8] sm:$0xf]
        %v1872 = vld [vmem:[%s1 + $0xc] sm:$0x3]
        %v1873 = vld [vmem:[%s2] sm:$0x1]
        %v1875 = vlaneseq
        %v1876 = vshrl.u32 %v1875, 7
        %v1877 = vsub.s32 0, %v1876
        %v1878 = vrot.slane %v1873, %v1877
        %v1884 = vunpack.c.l.b16 %v1869
        %v1885 = vunpack.c.l.b16 %v1870
        %v1886 = vunpack.c.l.b16 %v1871
        %v1887 = vunpack.c.l.b16 %v1872
        %v1888 = vpack.c.b16 %v1885, %v1884
        %v1889 = vpack.c.b16 %v1887, %v1886
        %vm1891 = vcmask 220160
        %v1893 = vsel %vm1891, %v1853, 0
        %v1896 = vsel %vm1891, %v1854, 0
        %v1899 = vsel %vm1891, %v1855, 0
        %v1902 = vsel %vm1891, %v1856, 0
        %v1905 = vsel %vm1891, %v1857, 0
        %v1908 = vsel %vm1891, %v1858, 0
        %v1911 = vsel %vm1891, %v1859, 0
        %v1914 = vsel %vm1891, %v1860, 0
        %v1917 = vsel %vm1891, %v1861, 0
        %v1920 = vsel %vm1891, %v1862, 0
        %v1923 = vsel %vm1891, %v1863, 0
        %v1926 = vsel %vm1891, %v1864, 0
        %v1929 = vsel %vm1891, %v1865, 0
        %v1932 = vsel %vm1891, %v1866, 0
        %v1935 = vsel %vm1891, %v1867, 0
        %v1938 = vsel %vm1891, %v1868, 0
        %vm1940 = vcmask 1044480
        %v1941 = vsel %vm1940, 4294967295, 65535
        %v1942 = vsel %vm811, %v1941, 0
        %v1944 = vand.u32 %v1889, %v1942
        %1946 = vmatprep.subr.bf16.mxu0 0
        %1947 = vmatpush1.bf16.msra.mxu0 0
        %1948 = vmatprep.subr.bf16.mxu0 0
        %1949 = vmatpush1.bf16.msra.mxu0 0
        %1950 = vmatprep.subr.bf16.mxu0 0
        %1951 = vmatpush1.bf16.msra.mxu0 0
        %1952 = vmatprep.subr.bf16.mxu0 0
        %1953 = vmatpush1.bf16.msra.mxu0 0
        %1954 = vmatprep.subr.bf16.mxu0 0
        %1955 = vmatpush1.bf16.msra.mxu0 0
        %1956 = vmatprep.subr.bf16.mxu0 0
        %1957 = vmatpush1.bf16.msra.mxu0 0
        %1958 = vmatprep.subr.bf16.mxu0 0
        %1959 = vmatpush1.bf16.msra.mxu0 %v1944
        %1960 = vmatprep.subr.bf16.mxu0 0
        %1961 = vmatpush1.bf16.msra.mxu0 %v1888
        %1962 = vmatprep.subr.bf16.mxu0 0
        %1963 = vmatpush2.bf16.msra.mxu0 0
        %1964 = vmatprep.subr.bf16.mxu0 0
        %1965 = vmatpush2.bf16.msra.mxu0 0
        %1966 = vmatprep.subr.bf16.mxu0 0
        %1967 = vmatpush2.bf16.msra.mxu0 0
        %1968 = vmatprep.subr.bf16.mxu0 0
        %1969 = vmatpush2.bf16.msra.mxu0 0
        %1970 = vmatprep.subr.bf16.mxu0 0
        %1971 = vmatpush2.bf16.msra.mxu0 0
        %1972 = vmatprep.subr.bf16.mxu0 0
        %1973 = vmatpush2.bf16.msra.mxu0 0
        %1974 = vmatprep.subr.bf16.mxu0 0
        %1975 = vmatpush2.bf16.msra.mxu0 0
        %1976 = vmatprep.subr.bf16.mxu0 0
        %1977 = vmatpush2.bf16.msra.mxu0 0
        %1978 = vmatprep.mubr.bf16.mxu0 0
        %1979 = vmatmul.mubr.bf16.gmra.mxu0 %v1893
        %v1980 = vpop.f32.mrf.mxu0
        %v1981 = vadd.f32 %v1878, %v1980
        %v1982 = vpop.f32.mrf.mxu0
        %v1983 = vpop.f32.mrf.mxu0
        %v1984 = vadd.f32 %v1878, %v1983
        %v1985 = vpop.f32.mrf.mxu0
        %1986 = vmatprep.mubr.bf16.mxu0 0
        %1987 = vmatmul.mubr.bf16.gmra.mxu0 %v1896
        %v1988 = vpop.f32.mrf.mxu0
        %v1989 = vadd.f32 %v1878, %v1988
        %v1990 = vpop.f32.mrf.mxu0
        %v1991 = vpop.f32.mrf.mxu0
        %v1992 = vadd.f32 %v1878, %v1991
        %v1993 = vpop.f32.mrf.mxu0
        %1994 = vmatprep.mubr.bf16.mxu0 0
        %1995 = vmatmul.mubr.bf16.gmra.mxu0 %v1899
        %v1996 = vpop.f32.mrf.mxu0
        %v1997 = vadd.f32 %v1878, %v1996
        %v1998 = vpop.f32.mrf.mxu0
        %v1999 = vpop.f32.mrf.mxu0
        %v2000 = vadd.f32 %v1878, %v1999
        %v2001 = vpop.f32.mrf.mxu0
        %2002 = vmatprep.mubr.bf16.mxu0 0
        %2003 = vmatmul.mubr.bf16.gmra.mxu0 %v1902
        %v2004 = vpop.f32.mrf.mxu0
        %v2005 = vadd.f32 %v1878, %v2004
        %v2006 = vpop.f32.mrf.mxu0
        %v2007 = vpop.f32.mrf.mxu0
        %v2008 = vadd.f32 %v1878, %v2007
        %v2009 = vpop.f32.mrf.mxu0
        %2010 = vmatprep.mubr.bf16.mxu0 0
        %2011 = vmatmul.mubr.bf16.gmra.mxu0 %v1905
        %v2012 = vpop.f32.mrf.mxu0
        %v2013 = vadd.f32 %v1878, %v2012
        %v2014 = vpop.f32.mrf.mxu0
        %v2015 = vpop.f32.mrf.mxu0
        %v2016 = vadd.f32 %v1878, %v2015
        %v2017 = vpop.f32.mrf.mxu0
        %2018 = vmatprep.mubr.bf16.mxu0 0
        %2019 = vmatmul.mubr.bf16.gmra.mxu0 %v1908
        %v2020 = vpop.f32.mrf.mxu0
        %v2021 = vadd.f32 %v1878, %v2020
        %v2022 = vpop.f32.mrf.mxu0
        %v2023 = vpop.f32.mrf.mxu0
        %v2024 = vadd.f32 %v1878, %v2023
        %v2025 = vpop.f32.mrf.mxu0
        %2026 = vmatprep.mubr.bf16.mxu0 0
        %2027 = vmatmul.mubr.bf16.gmra.mxu0 %v1911
        %v2028 = vpop.f32.mrf.mxu0
        %v2029 = vadd.f32 %v1878, %v2028
        %v2030 = vpop.f32.mrf.mxu0
        %v2031 = vpop.f32.mrf.mxu0
        %v2032 = vadd.f32 %v1878, %v2031
        %v2033 = vpop.f32.mrf.mxu0
        %2034 = vmatprep.mubr.bf16.mxu0 0
        %2035 = vmatmul.mubr.bf16.gmra.mxu0 %v1914
        %v2036 = vpop.f32.mrf.mxu0
        %v2037 = vadd.f32 %v1878, %v2036
        %v2038 = vpop.f32.mrf.mxu0
        %v2039 = vpop.f32.mrf.mxu0
        %v2040 = vadd.f32 %v1878, %v2039
        %v2041 = vpop.f32.mrf.mxu0
        %2042 = vmatprep.mubr.bf16.mxu0 0
        %2043 = vmatmul.mubr.bf16.gmra.mxu0 %v1917
        %v2044 = vpop.f32.mrf.mxu0
        %v2045 = vadd.f32 %v1878, %v2044
        %v2046 = vpop.f32.mrf.mxu0
        %v2047 = vpop.f32.mrf.mxu0
        %v2048 = vadd.f32 %v1878, %v2047
        %v2049 = vpop.f32.mrf.mxu0
        %2050 = vmatprep.mubr.bf16.mxu0 0
        %2051 = vmatmul.mubr.bf16.gmra.mxu0 %v1920
        %v2052 = vpop.f32.mrf.mxu0
        %v2053 = vadd.f32 %v1878, %v2052
        %v2054 = vpop.f32.mrf.mxu0
        %v2055 = vpop.f32.mrf.mxu0
        %v2056 = vadd.f32 %v1878, %v2055
        %v2057 = vpop.f32.mrf.mxu0
        %2058 = vmatprep.mubr.bf16.mxu0 0
        %2059 = vmatmul.mubr.bf16.gmra.mxu0 %v1923
        %v2060 = vpop.f32.mrf.mxu0
        %v2061 = vadd.f32 %v1878, %v2060
        %v2062 = vpop.f32.mrf.mxu0
        %v2063 = vpop.f32.mrf.mxu0
        %v2064 = vadd.f32 %v1878, %v2063
        %v2065 = vpop.f32.mrf.mxu0
        %2066 = vmatprep.mubr.bf16.mxu0 0
        %2067 = vmatmul.mubr.bf16.gmra.mxu0 %v1926
        %v2068 = vpop.f32.mrf.mxu0
        %v2069 = vadd.f32 %v1878, %v2068
        %v2070 = vpop.f32.mrf.mxu0
        %v2071 = vpop.f32.mrf.mxu0
        %v2072 = vadd.f32 %v1878, %v2071
        %v2073 = vpop.f32.mrf.mxu0
        %2074 = vmatprep.mubr.bf16.mxu0 0
        %2075 = vmatmul.mubr.bf16.gmra.mxu0 %v1929
        %v2076 = vpop.f32.mrf.mxu0
        %v2077 = vadd.f32 %v1878, %v2076
        %v2078 = vpop.f32.mrf.mxu0
        %v2079 = vpop.f32.mrf.mxu0
        %v2080 = vadd.f32 %v1878, %v2079
        %v2081 = vpop.f32.mrf.mxu0
        %2082 = vmatprep.mubr.bf16.mxu0 0
        %2083 = vmatmul.mubr.bf16.gmra.mxu0 %v1932
        %v2084 = vpop.f32.mrf.mxu0
        %v2085 = vadd.f32 %v1878, %v2084
        %v2086 = vpop.f32.mrf.mxu0
        %v2087 = vpop.f32.mrf.mxu0
        %v2088 = vadd.f32 %v1878, %v2087
        %v2089 = vpop.f32.mrf.mxu0
        %2090 = vmatprep.mubr.bf16.mxu0 0
        %2091 = vmatmul.mubr.bf16.gmra.mxu0 %v1935
        %v2092 = vpop.f32.mrf.mxu0
        %v2093 = vadd.f32 %v1878, %v2092
        %v2094 = vpop.f32.mrf.mxu0
        %v2095 = vpop.f32.mrf.mxu0
        %v2096 = vadd.f32 %v1878, %v2095
        %v2097 = vpop.f32.mrf.mxu0
        %2098 = vmatprep.mubr.bf16.mxu0 0
        %2099 = vmatmul.mubr.bf16.gmra.mxu0 %v1938
        %v2100 = vpop.f32.mrf.mxu0
        %v2101 = vadd.f32 %v1878, %v2100
        %v2102 = vpop.f32.mrf.mxu0
        %v2103 = vpop.f32.mrf.mxu0
        %v2104 = vadd.f32 %v1878, %v2103
        %v2105 = vpop.f32.mrf.mxu0
        %2106 = vdwg.mxu0
        %v2107 = vmax.f32 %v1981, 0.0
        %v2108 = vmax.f32 %v1984, 0.0
        %v2109 = vmax.f32 %v1989, 0.0
        %v2110 = vmax.f32 %v1992, 0.0
        %v2111 = vmax.f32 %v1997, 0.0
        %v2112 = vmax.f32 %v2000, 0.0
        %v2113 = vmax.f32 %v2005, 0.0
        %v2114 = vmax.f32 %v2008, 0.0
        %v2115 = vmax.f32 %v2013, 0.0
        %v2116 = vmax.f32 %v2016, 0.0
        %v2117 = vmax.f32 %v2021, 0.0
        %v2118 = vmax.f32 %v2024, 0.0
        %v2119 = vmax.f32 %v2029, 0.0
        %v2120 = vmax.f32 %v2032, 0.0
        %v2121 = vmax.f32 %v2037, 0.0
        %v2122 = vmax.f32 %v2040, 0.0
        %v2123 = vmax.f32 %v2045, 0.0
        %v2124 = vmax.f32 %v2048, 0.0
        %v2125 = vmax.f32 %v2053, 0.0
        %v2126 = vmax.f32 %v2056, 0.0
        %v2127 = vmax.f32 %v2061, 0.0
        %v2128 = vmax.f32 %v2064, 0.0
        %v2129 = vmax.f32 %v2069, 0.0
        %v2130 = vmax.f32 %v2072, 0.0
        %v2131 = vmax.f32 %v2077, 0.0
        %v2132 = vmax.f32 %v2080, 0.0
        %v2133 = vmax.f32 %v2085, 0.0
        %v2134 = vmax.f32 %v2088, 0.0
        %v2135 = vmax.f32 %v2093, 0.0
        %v2136 = vmax.f32 %v2096, 0.0
        %v2137 = vmax.f32 %v2101, 0.0
        %v2138 = vmax.f32 %v2104, 0.0
        %v2171 = vcombine.high %v2107, %v2107
        %v2173 = vunpack.c.l.s4 1983009808
        %v2174 = vunpack.c.0.s8 %v2173
        %v2175 = vlaneseq
        %v2176 = vshrl.u32 %v2175, 7
        %v2177 = vsub.s32 %v2174, %v2176
        %v2178 = vrot.slane %v2107, %v2177
        %v2180 = vunpack.c.l.s4 1983009808
        %v2181 = vunpack.c.0.s8 %v2180
        %v2182 = vlaneseq
        %v2183 = vshrl.u32 %v2182, 7
        %v2184 = vsub.s32 %v2181, %v2183
        %v2185 = vrot.slane %v2171, %v2184
        %v2186 = vcombine.high %v2178, %v2178
        %v2187 = vcombine.high %v2185, %v2185
        %v2188 = vcombine.high %v2108, %v2108
        %v2190 = vunpack.c.l.s4 1983009808
        %v2191 = vunpack.c.0.s8 %v2190
        %v2192 = vlaneseq
        %v2193 = vshrl.u32 %v2192, 7
        %v2194 = vsub.s32 %v2191, %v2193
        %v2195 = vrot.slane %v2108, %v2194
        %v2197 = vunpack.c.l.s4 1983009808
        %v2198 = vunpack.c.0.s8 %v2197
        %v2199 = vlaneseq
        %v2200 = vshrl.u32 %v2199, 7
        %v2201 = vsub.s32 %v2198, %v2200
        %v2202 = vrot.slane %v2188, %v2201
        %v2203 = vcombine.high %v2195, %v2195
        %v2204 = vcombine.high %v2202, %v2202
        %v2205 = vcombine.high %v2109, %v2109
        %v2207 = vunpack.c.l.s4 1983009808
        %v2208 = vunpack.c.0.s8 %v2207
        %v2209 = vlaneseq
        %v2210 = vshrl.u32 %v2209, 7
        %v2211 = vsub.s32 %v2208, %v2210
        %v2212 = vrot.slane %v2109, %v2211
        %v2214 = vunpack.c.l.s4 1983009808
        %v2215 = vunpack.c.0.s8 %v2214
        %v2216 = vlaneseq
        %v2217 = vshrl.u32 %v2216, 7
        %v2218 = vsub.s32 %v2215, %v2217
        %v2219 = vrot.slane %v2205, %v2218
        %v2220 = vcombine.high %v2212, %v2212
        %v2221 = vcombine.high %v2219, %v2219
        %v2222 = vcombine.high %v2110, %v2110
        %v2224 = vunpack.c.l.s4 1983009808
        %v2225 = vunpack.c.0.s8 %v2224
        %v2226 = vlaneseq
        %v2227 = vshrl.u32 %v2226, 7
        %v2228 = vsub.s32 %v2225, %v2227
        %v2229 = vrot.slane %v2110, %v2228
        %v2231 = vunpack.c.l.s4 1983009808
        %v2232 = vunpack.c.0.s8 %v2231
        %v2233 = vlaneseq
        %v2234 = vshrl.u32 %v2233, 7
        %v2235 = vsub.s32 %v2232, %v2234
        %v2236 = vrot.slane %v2222, %v2235
        %v2237 = vcombine.high %v2229, %v2229
        %v2238 = vcombine.high %v2236, %v2236
        %v2239 = vcombine.high %v2111, %v2111
        %v2241 = vunpack.c.l.s4 1983009808
        %v2242 = vunpack.c.0.s8 %v2241
        %v2243 = vlaneseq
        %v2244 = vshrl.u32 %v2243, 7
        %v2245 = vsub.s32 %v2242, %v2244
        %v2246 = vrot.slane %v2111, %v2245
        %v2248 = vunpack.c.l.s4 1983009808
        %v2249 = vunpack.c.0.s8 %v2248
        %v2250 = vlaneseq
        %v2251 = vshrl.u32 %v2250, 7
        %v2252 = vsub.s32 %v2249, %v2251
        %v2253 = vrot.slane %v2239, %v2252
        %v2254 = vcombine.high %v2246, %v2246
        %v2255 = vcombine.high %v2253, %v2253
        %v2256 = vcombine.high %v2112, %v2112
        %v2258 = vunpack.c.l.s4 1983009808
        %v2259 = vunpack.c.0.s8 %v2258
        %v2260 = vlaneseq
        %v2261 = vshrl.u32 %v2260, 7
        %v2262 = vsub.s32 %v2259, %v2261
        %v2263 = vrot.slane %v2112, %v2262
        %v2265 = vunpack.c.l.s4 1983009808
        %v2266 = vunpack.c.0.s8 %v2265
        %v2267 = vlaneseq
        %v2268 = vshrl.u32 %v2267, 7
        %v2269 = vsub.s32 %v2266, %v2268
        %v2270 = vrot.slane %v2256, %v2269
        %v2271 = vcombine.high %v2263, %v2263
        %v2272 = vcombine.high %v2270, %v2270
        %v2273 = vcombine.high %v2113, %v2113
        %v2275 = vunpack.c.l.s4 1983009808
        %v2276 = vunpack.c.0.s8 %v2275
        %v2277 = vlaneseq
        %v2278 = vshrl.u32 %v2277, 7
        %v2279 = vsub.s32 %v2276, %v2278
        %v2280 = vrot.slane %v2113, %v2279
        %v2282 = vunpack.c.l.s4 1983009808
        %v2283 = vunpack.c.0.s8 %v2282
        %v2284 = vlaneseq
        %v2285 = vshrl.u32 %v2284, 7
        %v2286 = vsub.s32 %v2283, %v2285
        %v2287 = vrot.slane %v2273, %v2286
        %v2288 = vcombine.high %v2280, %v2280
        %v2289 = vcombine.high %v2287, %v2287
        %v2290 = vcombine.high %v2114, %v2114
        %v2292 = vunpack.c.l.s4 1983009808
        %v2293 = vunpack.c.0.s8 %v2292
        %v2294 = vlaneseq
        %v2295 = vshrl.u32 %v2294, 7
        %v2296 = vsub.s32 %v2293, %v2295
        %v2297 = vrot.slane %v2114, %v2296
        %v2299 = vunpack.c.l.s4 1983009808
        %v2300 = vunpack.c.0.s8 %v2299
        %v2301 = vlaneseq
        %v2302 = vshrl.u32 %v2301, 7
        %v2303 = vsub.s32 %v2300, %v2302
        %v2304 = vrot.slane %v2290, %v2303
        %v2305 = vcombine.high %v2297, %v2297
        %v2306 = vcombine.high %v2304, %v2304
        %v2307 = vcombine.high %v2115, %v2115
        %v2309 = vunpack.c.l.s4 1983009808
        %v2310 = vunpack.c.0.s8 %v2309
        %v2311 = vlaneseq
        %v2312 = vshrl.u32 %v2311, 7
        %v2313 = vsub.s32 %v2310, %v2312
        %v2314 = vrot.slane %v2115, %v2313
        %v2316 = vunpack.c.l.s4 1983009808
        %v2317 = vunpack.c.0.s8 %v2316
        %v2318 = vlaneseq
        %v2319 = vshrl.u32 %v2318, 7
        %v2320 = vsub.s32 %v2317, %v2319
        %v2321 = vrot.slane %v2307, %v2320
        %v2322 = vcombine.high %v2314, %v2314
        %v2323 = vcombine.high %v2321, %v2321
        %v2324 = vcombine.high %v2116, %v2116
        %v2326 = vunpack.c.l.s4 1983009808
        %v2327 = vunpack.c.0.s8 %v2326
        %v2328 = vlaneseq
        %v2329 = vshrl.u32 %v2328, 7
        %v2330 = vsub.s32 %v2327, %v2329
        %v2331 = vrot.slane %v2116, %v2330
        %v2333 = vunpack.c.l.s4 1983009808
        %v2334 = vunpack.c.0.s8 %v2333
        %v2335 = vlaneseq
        %v2336 = vshrl.u32 %v2335, 7
        %v2337 = vsub.s32 %v2334, %v2336
        %v2338 = vrot.slane %v2324, %v2337
        %v2339 = vcombine.high %v2331, %v2331
        %v2340 = vcombine.high %v2338, %v2338
        %v2341 = vcombine.high %v2117, %v2117
        %v2343 = vunpack.c.l.s4 1983009808
        %v2344 = vunpack.c.0.s8 %v2343
        %v2345 = vlaneseq
        %v2346 = vshrl.u32 %v2345, 7
        %v2347 = vsub.s32 %v2344, %v2346
        %v2348 = vrot.slane %v2117, %v2347
        %v2350 = vunpack.c.l.s4 1983009808
        %v2351 = vunpack.c.0.s8 %v2350
        %v2352 = vlaneseq
        %v2353 = vshrl.u32 %v2352, 7
        %v2354 = vsub.s32 %v2351, %v2353
        %v2355 = vrot.slane %v2341, %v2354
        %v2356 = vcombine.high %v2348, %v2348
        %v2357 = vcombine.high %v2355, %v2355
        %v2358 = vcombine.high %v2118, %v2118
        %v2360 = vunpack.c.l.s4 1983009808
        %v2361 = vunpack.c.0.s8 %v2360
        %v2362 = vlaneseq
        %v2363 = vshrl.u32 %v2362, 7
        %v2364 = vsub.s32 %v2361, %v2363
        %v2365 = vrot.slane %v2118, %v2364
        %v2367 = vunpack.c.l.s4 1983009808
        %v2368 = vunpack.c.0.s8 %v2367
        %v2369 = vlaneseq
        %v2370 = vshrl.u32 %v2369, 7
        %v2371 = vsub.s32 %v2368, %v2370
        %v2372 = vrot.slane %v2358, %v2371
        %v2373 = vcombine.high %v2365, %v2365
        %v2374 = vcombine.high %v2372, %v2372
        %v2375 = vcombine.high %v2119, %v2119
        %v2377 = vunpack.c.l.s4 1983009808
        %v2378 = vunpack.c.0.s8 %v2377
        %v2379 = vlaneseq
        %v2380 = vshrl.u32 %v2379, 7
        %v2381 = vsub.s32 %v2378, %v2380
        %v2382 = vrot.slane %v2119, %v2381
        %v2384 = vunpack.c.l.s4 1983009808
        %v2385 = vunpack.c.0.s8 %v2384
        %v2386 = vlaneseq
        %v2387 = vshrl.u32 %v2386, 7
        %v2388 = vsub.s32 %v2385, %v2387
        %v2389 = vrot.slane %v2375, %v2388
        %v2390 = vcombine.high %v2382, %v2382
        %v2391 = vcombine.high %v2389, %v2389
        %v2392 = vcombine.high %v2120, %v2120
        %v2394 = vunpack.c.l.s4 1983009808
        %v2395 = vunpack.c.0.s8 %v2394
        %v2396 = vlaneseq
        %v2397 = vshrl.u32 %v2396, 7
        %v2398 = vsub.s32 %v2395, %v2397
        %v2399 = vrot.slane %v2120, %v2398
        %v2401 = vunpack.c.l.s4 1983009808
        %v2402 = vunpack.c.0.s8 %v2401
        %v2403 = vlaneseq
        %v2404 = vshrl.u32 %v2403, 7
        %v2405 = vsub.s32 %v2402, %v2404
        %v2406 = vrot.slane %v2392, %v2405
        %v2407 = vcombine.high %v2399, %v2399
        %v2408 = vcombine.high %v2406, %v2406
        %v2409 = vcombine.high %v2121, %v2121
        %v2411 = vunpack.c.l.s4 1983009808
        %v2412 = vunpack.c.0.s8 %v2411
        %v2413 = vlaneseq
        %v2414 = vshrl.u32 %v2413, 7
        %v2415 = vsub.s32 %v2412, %v2414
        %v2416 = vrot.slane %v2121, %v2415
        %v2418 = vunpack.c.l.s4 1983009808
        %v2419 = vunpack.c.0.s8 %v2418
        %v2420 = vlaneseq
        %v2421 = vshrl.u32 %v2420, 7
        %v2422 = vsub.s32 %v2419, %v2421
        %v2423 = vrot.slane %v2409, %v2422
        %v2424 = vcombine.high %v2416, %v2416
        %v2425 = vcombine.high %v2423, %v2423
        %v2426 = vcombine.high %v2122, %v2122
        %v2428 = vunpack.c.l.s4 1983009808
        %v2429 = vunpack.c.0.s8 %v2428
        %v2430 = vlaneseq
        %v2431 = vshrl.u32 %v2430, 7
        %v2432 = vsub.s32 %v2429, %v2431
        %v2433 = vrot.slane %v2122, %v2432
        %v2435 = vunpack.c.l.s4 1983009808
        %v2436 = vunpack.c.0.s8 %v2435
        %v2437 = vlaneseq
        %v2438 = vshrl.u32 %v2437, 7
        %v2439 = vsub.s32 %v2436, %v2438
        %v2440 = vrot.slane %v2426, %v2439
        %v2441 = vcombine.high %v2433, %v2433
        %v2442 = vcombine.high %v2440, %v2440
        %v2443 = vcombine.high %v2123, %v2123
        %v2445 = vunpack.c.l.s4 1983009808
        %v2446 = vunpack.c.0.s8 %v2445
        %v2447 = vlaneseq
        %v2448 = vshrl.u32 %v2447, 7
        %v2449 = vsub.s32 %v2446, %v2448
        %v2450 = vrot.slane %v2123, %v2449
        %v2452 = vunpack.c.l.s4 1983009808
        %v2453 = vunpack.c.0.s8 %v2452
        %v2454 = vlaneseq
        %v2455 = vshrl.u32 %v2454, 7
        %v2456 = vsub.s32 %v2453, %v2455
        %v2457 = vrot.slane %v2443, %v2456
        %v2458 = vcombine.high %v2450, %v2450
        %v2459 = vcombine.high %v2457, %v2457
        %v2460 = vcombine.high %v2124, %v2124
        %v2462 = vunpack.c.l.s4 1983009808
        %v2463 = vunpack.c.0.s8 %v2462
        %v2464 = vlaneseq
        %v2465 = vshrl.u32 %v2464, 7
        %v2466 = vsub.s32 %v2463, %v2465
        %v2467 = vrot.slane %v2124, %v2466
        %v2469 = vunpack.c.l.s4 1983009808
        %v2470 = vunpack.c.0.s8 %v2469
        %v2471 = vlaneseq
        %v2472 = vshrl.u32 %v2471, 7
        %v2473 = vsub.s32 %v2470, %v2472
        %v2474 = vrot.slane %v2460, %v2473
        %v2475 = vcombine.high %v2467, %v2467
        %v2476 = vcombine.high %v2474, %v2474
        %v2477 = vcombine.high %v2125, %v2125
        %v2479 = vunpack.c.l.s4 1983009808
        %v2480 = vunpack.c.0.s8 %v2479
        %v2481 = vlaneseq
        %v2482 = vshrl.u32 %v2481, 7
        %v2483 = vsub.s32 %v2480, %v2482
        %v2484 = vrot.slane %v2125, %v2483
        %v2486 = vunpack.c.l.s4 1983009808
        %v2487 = vunpack.c.0.s8 %v2486
        %v2488 = vlaneseq
        %v2489 = vshrl.u32 %v2488, 7
        %v2490 = vsub.s32 %v2487, %v2489
        %v2491 = vrot.slane %v2477, %v2490
        %v2492 = vcombine.high %v2484, %v2484
        %v2493 = vcombine.high %v2491, %v2491
        %v2494 = vcombine.high %v2126, %v2126
        %v2496 = vunpack.c.l.s4 1983009808
        %v2497 = vunpack.c.0.s8 %v2496
        %v2498 = vlaneseq
        %v2499 = vshrl.u32 %v2498, 7
        %v2500 = vsub.s32 %v2497, %v2499
        %v2501 = vrot.slane %v2126, %v2500
        %v2503 = vunpack.c.l.s4 1983009808
        %v2504 = vunpack.c.0.s8 %v2503
        %v2505 = vlaneseq
        %v2506 = vshrl.u32 %v2505, 7
        %v2507 = vsub.s32 %v2504, %v2506
        %v2508 = vrot.slane %v2494, %v2507
        %v2509 = vcombine.high %v2501, %v2501
        %v2510 = vcombine.high %v2508, %v2508
        %v2511 = vcombine.high %v2127, %v2127
        %v2513 = vunpack.c.l.s4 1983009808
        %v2514 = vunpack.c.0.s8 %v2513
        %v2515 = vlaneseq
        %v2516 = vshrl.u32 %v2515, 7
        %v2517 = vsub.s32 %v2514, %v2516
        %v2518 = vrot.slane %v2127, %v2517
        %v2520 = vunpack.c.l.s4 1983009808
        %v2521 = vunpack.c.0.s8 %v2520
        %v2522 = vlaneseq
        %v2523 = vshrl.u32 %v2522, 7
        %v2524 = vsub.s32 %v2521, %v2523
        %v2525 = vrot.slane %v2511, %v2524
        %v2526 = vcombine.high %v2518, %v2518
        %v2527 = vcombine.high %v2525, %v2525
        %v2528 = vcombine.high %v2128, %v2128
        %v2530 = vunpack.c.l.s4 1983009808
        %v2531 = vunpack.c.0.s8 %v2530
        %v2532 = vlaneseq
        %v2533 = vshrl.u32 %v2532, 7
        %v2534 = vsub.s32 %v2531, %v2533
        %v2535 = vrot.slane %v2128, %v2534
        %v2537 = vunpack.c.l.s4 1983009808
        %v2538 = vunpack.c.0.s8 %v2537
        %v2539 = vlaneseq
        %v2540 = vshrl.u32 %v2539, 7
        %v2541 = vsub.s32 %v2538, %v2540
        %v2542 = vrot.slane %v2528, %v2541
        %v2543 = vcombine.high %v2535, %v2535
        %v2544 = vcombine.high %v2542, %v2542
        %v2545 = vcombine.high %v2129, %v2129
        %v2547 = vunpack.c.l.s4 1983009808
        %v2548 = vunpack.c.0.s8 %v2547
        %v2549 = vlaneseq
        %v2550 = vshrl.u32 %v2549, 7
        %v2551 = vsub.s32 %v2548, %v2550
        %v2552 = vrot.slane %v2129, %v2551
        %v2554 = vunpack.c.l.s4 1983009808
        %v2555 = vunpack.c.0.s8 %v2554
        %v2556 = vlaneseq
        %v2557 = vshrl.u32 %v2556, 7
        %v2558 = vsub.s32 %v2555, %v2557
        %v2559 = vrot.slane %v2545, %v2558
        %v2560 = vcombine.high %v2552, %v2552
        %v2561 = vcombine.high %v2559, %v2559
        %v2562 = vcombine.high %v2130, %v2130
        %v2564 = vunpack.c.l.s4 1983009808
        %v2565 = vunpack.c.0.s8 %v2564
        %v2566 = vlaneseq
        %v2567 = vshrl.u32 %v2566, 7
        %v2568 = vsub.s32 %v2565, %v2567
        %v2569 = vrot.slane %v2130, %v2568
        %v2571 = vunpack.c.l.s4 1983009808
        %v2572 = vunpack.c.0.s8 %v2571
        %v2573 = vlaneseq
        %v2574 = vshrl.u32 %v2573, 7
        %v2575 = vsub.s32 %v2572, %v2574
        %v2576 = vrot.slane %v2562, %v2575
        %v2577 = vcombine.high %v2569, %v2569
        %v2578 = vcombine.high %v2576, %v2576
        %v2579 = vcombine.high %v2131, %v2131
        %v2581 = vunpack.c.l.s4 1983009808
        %v2582 = vunpack.c.0.s8 %v2581
        %v2583 = vlaneseq
        %v2584 = vshrl.u32 %v2583, 7
        %v2585 = vsub.s32 %v2582, %v2584
        %v2586 = vrot.slane %v2131, %v2585
        %v2588 = vunpack.c.l.s4 1983009808
        %v2589 = vunpack.c.0.s8 %v2588
        %v2590 = vlaneseq
        %v2591 = vshrl.u32 %v2590, 7
        %v2592 = vsub.s32 %v2589, %v2591
        %v2593 = vrot.slane %v2579, %v2592
        %v2594 = vcombine.high %v2586, %v2586
        %v2595 = vcombine.high %v2593, %v2593
        %v2596 = vcombine.high %v2132, %v2132
        %v2598 = vunpack.c.l.s4 1983009808
        %v2599 = vunpack.c.0.s8 %v2598
        %v2600 = vlaneseq
        %v2601 = vshrl.u32 %v2600, 7
        %v2602 = vsub.s32 %v2599, %v2601
        %v2603 = vrot.slane %v2132, %v2602
        %v2605 = vunpack.c.l.s4 1983009808
        %v2606 = vunpack.c.0.s8 %v2605
        %v2607 = vlaneseq
        %v2608 = vshrl.u32 %v2607, 7
        %v2609 = vsub.s32 %v2606, %v2608
        %v2610 = vrot.slane %v2596, %v2609
        %v2611 = vcombine.high %v2603, %v2603
        %v2612 = vcombine.high %v2610, %v2610
        %v2613 = vcombine.high %v2133, %v2133
        %v2615 = vunpack.c.l.s4 1983009808
        %v2616 = vunpack.c.0.s8 %v2615
        %v2617 = vlaneseq
        %v2618 = vshrl.u32 %v2617, 7
        %v2619 = vsub.s32 %v2616, %v2618
        %v2620 = vrot.slane %v2133, %v2619
        %v2622 = vunpack.c.l.s4 1983009808
        %v2623 = vunpack.c.0.s8 %v2622
        %v2624 = vlaneseq
        %v2625 = vshrl.u32 %v2624, 7
        %v2626 = vsub.s32 %v2623, %v2625
        %v2627 = vrot.slane %v2613, %v2626
        %v2628 = vcombine.high %v2620, %v2620
        %v2629 = vcombine.high %v2627, %v2627
        %v2630 = vcombine.high %v2134, %v2134
        %v2632 = vunpack.c.l.s4 1983009808
        %v2633 = vunpack.c.0.s8 %v2632
        %v2634 = vlaneseq
        %v2635 = vshrl.u32 %v2634, 7
        %v2636 = vsub.s32 %v2633, %v2635
        %v2637 = vrot.slane %v2134, %v2636
        %v2639 = vunpack.c.l.s4 1983009808
        %v2640 = vunpack.c.0.s8 %v2639
        %v2641 = vlaneseq
        %v2642 = vshrl.u32 %v2641, 7
        %v2643 = vsub.s32 %v2640, %v2642
        %v2644 = vrot.slane %v2630, %v2643
        %v2645 = vcombine.high %v2637, %v2637
        %v2646 = vcombine.high %v2644, %v2644
        %v2647 = vcombine.high %v2135, %v2135
        %v2649 = vunpack.c.l.s4 1983009808
        %v2650 = vunpack.c.0.s8 %v2649
        %v2651 = vlaneseq
        %v2652 = vshrl.u32 %v2651, 7
        %v2653 = vsub.s32 %v2650, %v2652
        %v2654 = vrot.slane %v2135, %v2653
        %v2656 = vunpack.c.l.s4 1983009808
        %v2657 = vunpack.c.0.s8 %v2656
        %v2658 = vlaneseq
        %v2659 = vshrl.u32 %v2658, 7
        %v2660 = vsub.s32 %v2657, %v2659
        %v2661 = vrot.slane %v2647, %v2660
        %v2662 = vcombine.high %v2654, %v2654
        %v2663 = vcombine.high %v2661, %v2661
        %v2664 = vcombine.high %v2136, %v2136
        %v2666 = vunpack.c.l.s4 1983009808
        %v2667 = vunpack.c.0.s8 %v2666
        %v2668 = vlaneseq
        %v2669 = vshrl.u32 %v2668, 7
        %v2670 = vsub.s32 %v2667, %v2669
        %v2671 = vrot.slane %v2136, %v2670
        %v2673 = vunpack.c.l.s4 1983009808
        %v2674 = vunpack.c.0.s8 %v2673
        %v2675 = vlaneseq
        %v2676 = vshrl.u32 %v2675, 7
        %v2677 = vsub.s32 %v2674, %v2676
        %v2678 = vrot.slane %v2664, %v2677
        %v2679 = vcombine.high %v2671, %v2671
        %v2680 = vcombine.high %v2678, %v2678
        %v2681 = vcombine.high %v2137, %v2137
        %v2683 = vunpack.c.l.s4 1983009808
        %v2684 = vunpack.c.0.s8 %v2683
        %v2685 = vlaneseq
        %v2686 = vshrl.u32 %v2685, 7
        %v2687 = vsub.s32 %v2684, %v2686
        %v2688 = vrot.slane %v2137, %v2687
        %v2690 = vunpack.c.l.s4 1983009808
        %v2691 = vunpack.c.0.s8 %v2690
        %v2692 = vlaneseq
        %v2693 = vshrl.u32 %v2692, 7
        %v2694 = vsub.s32 %v2691, %v2693
        %v2695 = vrot.slane %v2681, %v2694
        %v2696 = vcombine.high %v2688, %v2688
        %v2697 = vcombine.high %v2695, %v2695
        %v2698 = vcombine.high %v2138, %v2138
        %v2700 = vunpack.c.l.s4 1983009808
        %v2701 = vunpack.c.0.s8 %v2700
        %v2702 = vlaneseq
        %v2703 = vshrl.u32 %v2702, 7
        %v2704 = vsub.s32 %v2701, %v2703
        %v2705 = vrot.slane %v2138, %v2704
        %v2707 = vunpack.c.l.s4 1983009808
        %v2708 = vunpack.c.0.s8 %v2707
        %v2709 = vlaneseq
        %v2710 = vshrl.u32 %v2709, 7
        %v2711 = vsub.s32 %v2708, %v2710
        %v2712 = vrot.slane %v2698, %v2711
        %v2713 = vcombine.high %v2705, %v2705
        %v2714 = vcombine.high %v2712, %v2712
        %v2843 = vrot.slane %v2178, 7
        %v2844 = vrot.slane %v2843, 2
        %v2845 = vrot.slane %v2186, 7
        %v2846 = vrot.slane %v2845, 2
        %v2847 = vrot.slane %v2185, 7
        %v2848 = vrot.slane %v2847, 2
        %v2849 = vrot.slane %v2187, 7
        %v2850 = vrot.slane %v2849, 2
        %v2851 = vrot.slane %v2195, 7
        %v2852 = vrot.slane %v2851, 2
        %v2853 = vrot.slane %v2203, 7
        %v2854 = vrot.slane %v2853, 2
        %v2855 = vrot.slane %v2202, 7
        %v2856 = vrot.slane %v2855, 2
        %v2857 = vrot.slane %v2204, 7
        %v2858 = vrot.slane %v2857, 2
        %v2859 = vrot.slane %v2212, 7
        %v2860 = vrot.slane %v2859, 2
        %v2861 = vrot.slane %v2220, 7
        %v2862 = vrot.slane %v2861, 2
        %v2863 = vrot.slane %v2219, 7
        %v2864 = vrot.slane %v2863, 2
        %v2865 = vrot.slane %v2221, 7
        %v2866 = vrot.slane %v2865, 2
        %v2867 = vrot.slane %v2229, 7
        %v2868 = vrot.slane %v2867, 2
        %v2869 = vrot.slane %v2237, 7
        %v2870 = vrot.slane %v2869, 2
        %v2871 = vrot.slane %v2236, 7
        %v2872 = vrot.slane %v2871, 2
        %v2873 = vrot.slane %v2238, 7
        %v2874 = vrot.slane %v2873, 2
        %v2875 = vrot.slane %v2246, 7
        %v2876 = vrot.slane %v2875, 2
        %v2877 = vrot.slane %v2254, 7
        %v2878 = vrot.slane %v2877, 2
        %v2879 = vrot.slane %v2253, 7
        %v2880 = vrot.slane %v2879, 2
        %v2881 = vrot.slane %v2255, 7
        %v2882 = vrot.slane %v2881, 2
        %v2883 = vrot.slane %v2263, 7
        %v2884 = vrot.slane %v2883, 2
        %v2885 = vrot.slane %v2271, 7
        %v2886 = vrot.slane %v2885, 2
        %v2887 = vrot.slane %v2270, 7
        %v2888 = vrot.slane %v2887, 2
        %v2889 = vrot.slane %v2272, 7
        %v2890 = vrot.slane %v2889, 2
        %v2891 = vrot.slane %v2280, 7
        %v2892 = vrot.slane %v2891, 2
        %v2893 = vrot.slane %v2288, 7
        %v2894 = vrot.slane %v2893, 2
        %v2895 = vrot.slane %v2287, 7
        %v2896 = vrot.slane %v2895, 2
        %v2897 = vrot.slane %v2289, 7
        %v2898 = vrot.slane %v2897, 2
        %v2899 = vrot.slane %v2297, 7
        %v2900 = vrot.slane %v2899, 2
        %v2901 = vrot.slane %v2305, 7
        %v2902 = vrot.slane %v2901, 2
        %v2903 = vrot.slane %v2304, 7
        %v2904 = vrot.slane %v2903, 2
        %v2905 = vrot.slane %v2306, 7
        %v2906 = vrot.slane %v2905, 2
        %v2907 = vrot.slane %v2314, 7
        %v2908 = vrot.slane %v2907, 2
        %v2909 = vrot.slane %v2322, 7
        %v2910 = vrot.slane %v2909, 2
        %v2911 = vrot.slane %v2321, 7
        %v2912 = vrot.slane %v2911, 2
        %v2913 = vrot.slane %v2323, 7
        %v2914 = vrot.slane %v2913, 2
        %v2915 = vrot.slane %v2331, 7
        %v2916 = vrot.slane %v2915, 2
        %v2917 = vrot.slane %v2339, 7
        %v2918 = vrot.slane %v2917, 2
        %v2919 = vrot.slane %v2338, 7
        %v2920 = vrot.slane %v2919, 2
        %v2921 = vrot.slane %v2340, 7
        %v2922 = vrot.slane %v2921, 2
        %v2923 = vrot.slane %v2348, 7
        %v2924 = vrot.slane %v2923, 2
        %v2925 = vrot.slane %v2356, 7
        %v2926 = vrot.slane %v2925, 2
        %v2927 = vrot.slane %v2355, 7
        %v2928 = vrot.slane %v2927, 2
        %v2929 = vrot.slane %v2357, 7
        %v2930 = vrot.slane %v2929, 2
        %v2931 = vrot.slane %v2365, 7
        %v2932 = vrot.slane %v2931, 2
        %v2933 = vrot.slane %v2373, 7
        %v2934 = vrot.slane %v2933, 2
        %v2935 = vrot.slane %v2372, 7
        %v2936 = vrot.slane %v2935, 2
        %v2937 = vrot.slane %v2374, 7
        %v2938 = vrot.slane %v2937, 2
        %v2939 = vrot.slane %v2382, 7
        %v2940 = vrot.slane %v2939, 2
        %v2941 = vrot.slane %v2390, 7
        %v2942 = vrot.slane %v2941, 2
        %v2943 = vrot.slane %v2389, 7
        %v2944 = vrot.slane %v2943, 2
        %v2945 = vrot.slane %v2391, 7
        %v2946 = vrot.slane %v2945, 2
        %v2947 = vrot.slane %v2399, 7
        %v2948 = vrot.slane %v2947, 2
        %v2949 = vrot.slane %v2407, 7
        %v2950 = vrot.slane %v2949, 2
        %v2951 = vrot.slane %v2406, 7
        %v2952 = vrot.slane %v2951, 2
        %v2953 = vrot.slane %v2408, 7
        %v2954 = vrot.slane %v2953, 2
        %v2955 = vrot.slane %v2416, 7
        %v2956 = vrot.slane %v2955, 2
        %v2957 = vrot.slane %v2424, 7
        %v2958 = vrot.slane %v2957, 2
        %v2959 = vrot.slane %v2423, 7
        %v2960 = vrot.slane %v2959, 2
        %v2961 = vrot.slane %v2425, 7
        %v2962 = vrot.slane %v2961, 2
        %v2963 = vrot.slane %v2433, 7
        %v2964 = vrot.slane %v2963, 2
        %v2965 = vrot.slane %v2441, 7
        %v2966 = vrot.slane %v2965, 2
        %v2967 = vrot.slane %v2440, 7
        %v2968 = vrot.slane %v2967, 2
        %v2969 = vrot.slane %v2442, 7
        %v2970 = vrot.slane %v2969, 2
        %v2971 = vrot.slane %v2450, 7
        %v2972 = vrot.slane %v2971, 2
        %v2973 = vrot.slane %v2458, 7
        %v2974 = vrot.slane %v2973, 2
        %v2975 = vrot.slane %v2457, 7
        %v2976 = vrot.slane %v2975, 2
        %v2977 = vrot.slane %v2459, 7
        %v2978 = vrot.slane %v2977, 2
        %v2979 = vrot.slane %v2467, 7
        %v2980 = vrot.slane %v2979, 2
        %v2981 = vrot.slane %v2475, 7
        %v2982 = vrot.slane %v2981, 2
        %v2983 = vrot.slane %v2474, 7
        %v2984 = vrot.slane %v2983, 2
        %v2985 = vrot.slane %v2476, 7
        %v2986 = vrot.slane %v2985, 2
        %v2987 = vrot.slane %v2484, 7
        %v2988 = vrot.slane %v2987, 2
        %v2989 = vrot.slane %v2492, 7
        %v2990 = vrot.slane %v2989, 2
        %v2991 = vrot.slane %v2491, 7
        %v2992 = vrot.slane %v2991, 2
        %v2993 = vrot.slane %v2493, 7
        %v2994 = vrot.slane %v2993, 2
        %v2995 = vrot.slane %v2501, 7
        %v2996 = vrot.slane %v2995, 2
        %v2997 = vrot.slane %v2509, 7
        %v2998 = vrot.slane %v2997, 2
        %v2999 = vrot.slane %v2508, 7
        %v3000 = vrot.slane %v2999, 2
        %v3001 = vrot.slane %v2510, 7
        %v3002 = vrot.slane %v3001, 2
        %v3003 = vrot.slane %v2518, 7
        %v3004 = vrot.slane %v3003, 2
        %v3005 = vrot.slane %v2526, 7
        %v3006 = vrot.slane %v3005, 2
        %v3007 = vrot.slane %v2525, 7
        %v3008 = vrot.slane %v3007, 2
        %v3009 = vrot.slane %v2527, 7
        %v3010 = vrot.slane %v3009, 2
        %v3011 = vrot.slane %v2535, 7
        %v3012 = vrot.slane %v3011, 2
        %v3013 = vrot.slane %v2543, 7
        %v3014 = vrot.slane %v3013, 2
        %v3015 = vrot.slane %v2542, 7
        %v3016 = vrot.slane %v3015, 2
        %v3017 = vrot.slane %v2544, 7
        %v3018 = vrot.slane %v3017, 2
        %v3019 = vrot.slane %v2552, 7
        %v3020 = vrot.slane %v3019, 2
        %v3021 = vrot.slane %v2560, 7
        %v3022 = vrot.slane %v3021, 2
        %v3023 = vrot.slane %v2559, 7
        %v3024 = vrot.slane %v3023, 2
        %v3025 = vrot.slane %v2561, 7
        %v3026 = vrot.slane %v3025, 2
        %v3027 = vrot.slane %v2569, 7
        %v3028 = vrot.slane %v3027, 2
        %v3029 = vrot.slane %v2577, 7
        %v3030 = vrot.slane %v3029, 2
        %v3031 = vrot.slane %v2576, 7
        %v3032 = vrot.slane %v3031, 2
        %v3033 = vrot.slane %v2578, 7
        %v3034 = vrot.slane %v3033, 2
        %v3035 = vrot.slane %v2586, 7
        %v3036 = vrot.slane %v3035, 2
        %v3037 = vrot.slane %v2594, 7
        %v3038 = vrot.slane %v3037, 2
        %v3039 = vrot.slane %v2593, 7
        %v3040 = vrot.slane %v3039, 2
        %v3041 = vrot.slane %v2595, 7
        %v3042 = vrot.slane %v3041, 2
        %v3043 = vrot.slane %v2603, 7
        %v3044 = vrot.slane %v3043, 2
        %v3045 = vrot.slane %v2611, 7
        %v3046 = vrot.slane %v3045, 2
        %v3047 = vrot.slane %v2610, 7
        %v3048 = vrot.slane %v3047, 2
        %v3049 = vrot.slane %v2612, 7
        %v3050 = vrot.slane %v3049, 2
        %v3051 = vrot.slane %v2620, 7
        %v3052 = vrot.slane %v3051, 2
        %v3053 = vrot.slane %v2628, 7
        %v3054 = vrot.slane %v3053, 2
        %v3055 = vrot.slane %v2627, 7
        %v3056 = vrot.slane %v3055, 2
        %v3057 = vrot.slane %v2629, 7
        %v3058 = vrot.slane %v3057, 2
        %v3059 = vrot.slane %v2637, 7
        %v3060 = vrot.slane %v3059, 2
        %v3061 = vrot.slane %v2645, 7
        %v3062 = vrot.slane %v3061, 2
        %v3063 = vrot.slane %v2644, 7
        %v3064 = vrot.slane %v3063, 2
        %v3065 = vrot.slane %v2646, 7
        %v3066 = vrot.slane %v3065, 2
        %v3067 = vrot.slane %v2654, 7
        %v3068 = vrot.slane %v3067, 2
        %v3069 = vrot.slane %v2662, 7
        %v3070 = vrot.slane %v3069, 2
        %v3071 = vrot.slane %v2661, 7
        %v3072 = vrot.slane %v3071, 2
        %v3073 = vrot.slane %v2663, 7
        %v3074 = vrot.slane %v3073, 2
        %v3075 = vrot.slane %v2671, 7
        %v3076 = vrot.slane %v3075, 2
        %v3077 = vrot.slane %v2679, 7
        %v3078 = vrot.slane %v3077, 2
        %v3079 = vrot.slane %v2678, 7
        %v3080 = vrot.slane %v3079, 2
        %v3081 = vrot.slane %v2680, 7
        %v3082 = vrot.slane %v3081, 2
        %v3083 = vrot.slane %v2688, 7
        %v3084 = vrot.slane %v3083, 2
        %v3085 = vrot.slane %v2696, 7
        %v3086 = vrot.slane %v3085, 2
        %v3087 = vrot.slane %v2695, 7
        %v3088 = vrot.slane %v3087, 2
        %v3089 = vrot.slane %v2697, 7
        %v3090 = vrot.slane %v3089, 2
        %v3091 = vrot.slane %v2705, 7
        %v3092 = vrot.slane %v3091, 2
        %v3093 = vrot.slane %v2713, 7
        %v3094 = vrot.slane %v3093, 2
        %v3095 = vrot.slane %v2712, 7
        %v3096 = vrot.slane %v3095, 2
        %v3097 = vrot.slane %v2714, 7
        %v3098 = vrot.slane %v3097, 2
        %v3227 = vmax.f32 %v2178, %v2844
        %v3228 = vmax.f32 %v2186, %v2846
        %v3229 = vmax.f32 %v2185, %v2848
        %v3230 = vmax.f32 %v2187, %v2850
        %v3231 = vmax.f32 %v2195, %v2852
        %v3232 = vmax.f32 %v2203, %v2854
        %v3233 = vmax.f32 %v2202, %v2856
        %v3234 = vmax.f32 %v2204, %v2858
        %v3235 = vmax.f32 %v2212, %v2860
        %v3236 = vmax.f32 %v2220, %v2862
        %v3237 = vmax.f32 %v2219, %v2864
        %v3238 = vmax.f32 %v2221, %v2866
        %v3239 = vmax.f32 %v2229, %v2868
        %v3240 = vmax.f32 %v2237, %v2870
        %v3241 = vmax.f32 %v2236, %v2872
        %v3242 = vmax.f32 %v2238, %v2874
        %v3243 = vmax.f32 %v2246, %v2876
        %v3244 = vmax.f32 %v2254, %v2878
        %v3245 = vmax.f32 %v2253, %v2880
        %v3246 = vmax.f32 %v2255, %v2882
        %v3247 = vmax.f32 %v2263, %v2884
        %v3248 = vmax.f32 %v2271, %v2886
        %v3249 = vmax.f32 %v2270, %v2888
        %v3250 = vmax.f32 %v2272, %v2890
        %v3251 = vmax.f32 %v2280, %v2892
        %v3252 = vmax.f32 %v2288, %v2894
        %v3253 = vmax.f32 %v2287, %v2896
        %v3254 = vmax.f32 %v2289, %v2898
        %v3255 = vmax.f32 %v2297, %v2900
        %v3256 = vmax.f32 %v2305, %v2902
        %v3257 = vmax.f32 %v2304, %v2904
        %v3258 = vmax.f32 %v2306, %v2906
        %v3259 = vmax.f32 %v2314, %v2908
        %v3260 = vmax.f32 %v2322, %v2910
        %v3261 = vmax.f32 %v2321, %v2912
        %v3262 = vmax.f32 %v2323, %v2914
        %v3263 = vmax.f32 %v2331, %v2916
        %v3264 = vmax.f32 %v2339, %v2918
        %v3265 = vmax.f32 %v2338, %v2920
        %v3266 = vmax.f32 %v2340, %v2922
        %v3267 = vmax.f32 %v2348, %v2924
        %v3268 = vmax.f32 %v2356, %v2926
        %v3269 = vmax.f32 %v2355, %v2928
        %v3270 = vmax.f32 %v2357, %v2930
        %v3271 = vmax.f32 %v2365, %v2932
        %v3272 = vmax.f32 %v2373, %v2934
        %v3273 = vmax.f32 %v2372, %v2936
        %v3274 = vmax.f32 %v2374, %v2938
        %v3275 = vmax.f32 %v2382, %v2940
        %v3276 = vmax.f32 %v2390, %v2942
        %v3277 = vmax.f32 %v2389, %v2944
        %v3278 = vmax.f32 %v2391, %v2946
        %v3279 = vmax.f32 %v2399, %v2948
        %v3280 = vmax.f32 %v2407, %v2950
        %v3281 = vmax.f32 %v2406, %v2952
        %v3282 = vmax.f32 %v2408, %v2954
        %v3283 = vmax.f32 %v2416, %v2956
        %v3284 = vmax.f32 %v2424, %v2958
        %v3285 = vmax.f32 %v2423, %v2960
        %v3286 = vmax.f32 %v2425, %v2962
        %v3287 = vmax.f32 %v2433, %v2964
        %v3288 = vmax.f32 %v2441, %v2966
        %v3289 = vmax.f32 %v2440, %v2968
        %v3290 = vmax.f32 %v2442, %v2970
        %v3291 = vmax.f32 %v2450, %v2972
        %v3292 = vmax.f32 %v2458, %v2974
        %v3293 = vmax.f32 %v2457, %v2976
        %v3294 = vmax.f32 %v2459, %v2978
        %v3295 = vmax.f32 %v2467, %v2980
        %v3296 = vmax.f32 %v2475, %v2982
        %v3297 = vmax.f32 %v2474, %v2984
        %v3298 = vmax.f32 %v2476, %v2986
        %v3299 = vmax.f32 %v2484, %v2988
        %v3300 = vmax.f32 %v2492, %v2990
        %v3301 = vmax.f32 %v2491, %v2992
        %v3302 = vmax.f32 %v2493, %v2994
        %v3303 = vmax.f32 %v2501, %v2996
        %v3304 = vmax.f32 %v2509, %v2998
        %v3305 = vmax.f32 %v2508, %v3000
        %v3306 = vmax.f32 %v2510, %v3002
        %v3307 = vmax.f32 %v2518, %v3004
        %v3308 = vmax.f32 %v2526, %v3006
        %v3309 = vmax.f32 %v2525, %v3008
        %v3310 = vmax.f32 %v2527, %v3010
        %v3311 = vmax.f32 %v2535, %v3012
        %v3312 = vmax.f32 %v2543, %v3014
        %v3313 = vmax.f32 %v2542, %v3016
        %v3314 = vmax.f32 %v2544, %v3018
        %v3315 = vmax.f32 %v2552, %v3020
        %v3316 = vmax.f32 %v2560, %v3022
        %v3317 = vmax.f32 %v2559, %v3024
        %v3318 = vmax.f32 %v2561, %v3026
        %v3319 = vmax.f32 %v2569, %v3028
        %v3320 = vmax.f32 %v2577, %v3030
        %v3321 = vmax.f32 %v2576, %v3032
        %v3322 = vmax.f32 %v2578, %v3034
        %v3323 = vmax.f32 %v2586, %v3036
        %v3324 = vmax.f32 %v2594, %v3038
        %v3325 = vmax.f32 %v2593, %v3040
        %v3326 = vmax.f32 %v2595, %v3042
        %v3327 = vmax.f32 %v2603, %v3044
        %v3328 = vmax.f32 %v2611, %v3046
        %v3329 = vmax.f32 %v2610, %v3048
        %v3330 = vmax.f32 %v2612, %v3050
        %v3331 = vmax.f32 %v2620, %v3052
        %v3332 = vmax.f32 %v2628, %v3054
        %v3333 = vmax.f32 %v2627, %v3056
        %v3334 = vmax.f32 %v2629, %v3058
        %v3335 = vmax.f32 %v2637, %v3060
        %v3336 = vmax.f32 %v2645, %v3062
        %v3337 = vmax.f32 %v2644, %v3064
        %v3338 = vmax.f32 %v2646, %v3066
        %v3339 = vmax.f32 %v2654, %v3068
        %v3340 = vmax.f32 %v2662, %v3070
        %v3341 = vmax.f32 %v2661, %v3072
        %v3342 = vmax.f32 %v2663, %v3074
        %v3343 = vmax.f32 %v2671, %v3076
        %v3344 = vmax.f32 %v2679, %v3078
        %v3345 = vmax.f32 %v2678, %v3080
        %v3346 = vmax.f32 %v2680, %v3082
        %v3347 = vmax.f32 %v2688, %v3084
        %v3348 = vmax.f32 %v2696, %v3086
        %v3349 = vmax.f32 %v2695, %v3088
        %v3350 = vmax.f32 %v2697, %v3090
        %v3351 = vmax.f32 %v2705, %v3092
        %v3352 = vmax.f32 %v2713, %v3094
        %v3353 = vmax.f32 %v2712, %v3096
        %v3354 = vmax.f32 %v2714, %v3098
        %v3355 = vmax.f32 %v3227, %v3235
        %v3356 = vmax.f32 %v3228, %v3236
        %v3357 = vmax.f32 %v3229, %v3237
        %v3358 = vmax.f32 %v3230, %v3238
        %v3359 = vmax.f32 %v3231, %v3239
        %v3360 = vmax.f32 %v3232, %v3240
        %v3361 = vmax.f32 %v3233, %v3241
        %v3362 = vmax.f32 %v3234, %v3242
        %v3363 = vmax.f32 %v3243, %v3251
        %v3364 = vmax.f32 %v3244, %v3252
        %v3365 = vmax.f32 %v3245, %v3253
        %v3366 = vmax.f32 %v3246, %v3254
        %v3367 = vmax.f32 %v3247, %v3255
        %v3368 = vmax.f32 %v3248, %v3256
        %v3369 = vmax.f32 %v3249, %v3257
        %v3370 = vmax.f32 %v3250, %v3258
        %v3371 = vmax.f32 %v3259, %v3267
        %v3372 = vmax.f32 %v3260, %v3268
        %v3373 = vmax.f32 %v3261, %v3269
        %v3374 = vmax.f32 %v3262, %v3270
        %v3375 = vmax.f32 %v3263, %v3271
        %v3376 = vmax.f32 %v3264, %v3272
        %v3377 = vmax.f32 %v3265, %v3273
        %v3378 = vmax.f32 %v3266, %v3274
        %v3379 = vmax.f32 %v3275, %v3283
        %v3380 = vmax.f32 %v3276, %v3284
        %v3381 = vmax.f32 %v3277, %v3285
        %v3382 = vmax.f32 %v3278, %v3286
        %v3383 = vmax.f32 %v3279, %v3287
        %v3384 = vmax.f32 %v3280, %v3288
        %v3385 = vmax.f32 %v3281, %v3289
        %v3386 = vmax.f32 %v3282, %v3290
        %v3387 = vmax.f32 %v3291, %v3299
        %v3388 = vmax.f32 %v3292, %v3300
        %v3389 = vmax.f32 %v3293, %v3301
        %v3390 = vmax.f32 %v3294, %v3302
        %v3391 = vmax.f32 %v3295, %v3303
        %v3392 = vmax.f32 %v3296, %v3304
        %v3393 = vmax.f32 %v3297, %v3305
        %v3394 = vmax.f32 %v3298, %v3306
        %v3395 = vmax.f32 %v3307, %v3315
        %v3396 = vmax.f32 %v3308, %v3316
        %v3397 = vmax.f32 %v3309, %v3317
        %v3398 = vmax.f32 %v3310, %v3318
        %v3399 = vmax.f32 %v3311, %v3319
        %v3400 = vmax.f32 %v3312, %v3320
        %v3401 = vmax.f32 %v3313, %v3321
        %v3402 = vmax.f32 %v3314, %v3322
        %v3403 = vmax.f32 %v3323, %v3331
        %v3404 = vmax.f32 %v3324, %v3332
        %v3405 = vmax.f32 %v3325, %v3333
        %v3406 = vmax.f32 %v3326, %v3334
        %v3407 = vmax.f32 %v3327, %v3335
        %v3408 = vmax.f32 %v3328, %v3336
        %v3409 = vmax.f32 %v3329, %v3337
        %v3410 = vmax.f32 %v3330, %v3338
        %v3411 = vmax.f32 %v3339, %v3347
        %v3412 = vmax.f32 %v3340, %v3348
        %v3413 = vmax.f32 %v3341, %v3349
        %v3414 = vmax.f32 %v3342, %v3350
        %v3415 = vmax.f32 %v3343, %v3351
        %v3416 = vmax.f32 %v3344, %v3352
        %v3417 = vmax.f32 %v3345, %v3353
        %v3418 = vmax.f32 %v3346, %v3354
        %vm3419 = vcmask 130048
        %3420 = vst.msk [vmem:[#allocation4] sm:$0xff] %vm3419, 0.0
        %vm3421 = vcmask 123904
        %3422 = vst.msk [vmem:[#allocation4 + $0x8] sm:$0x3] %vm3421, 0.0
        %3423 = vst.msk [vmem:[#allocation4 + $0x10] sm:$0xff] %vm3419, 0.0
        %3424 = vst.msk [vmem:[#allocation4 + $0x18] sm:$0x3] %vm3421, 0.0
        %3425 = vst.msk [vmem:[#allocation4 + $0x20] sm:$0xff] %vm3419, 0.0
        %3426 = vst.msk [vmem:[#allocation4 + $0x28] sm:$0x3] %vm3421, 0.0
        %3427 = vst.msk [vmem:[#allocation4 + $0x30] sm:$0xff] %vm3419, 0.0
        %3428 = vst.msk [vmem:[#allocation4 + $0x38] sm:$0x3] %vm3421, 0.0
        %3429 = vst.msk [vmem:[#allocation4 + $0x40] sm:$0xff] %vm3419, 0.0
        %3430 = vst.msk [vmem:[#allocation4 + $0x48] sm:$0x3] %vm3421, 0.0
        %3431 = vst.msk [vmem:[#allocation4 + $0x50] sm:$0xff] %vm3419, 0.0
        %3432 = vst.msk [vmem:[#allocation4 + $0x58] sm:$0x3] %vm3421, 0.0
        %3433 = vst.msk [vmem:[#allocation4 + $0x60] sm:$0xff] %vm3419, 0.0
        %3434 = vst.msk [vmem:[#allocation4 + $0x68] sm:$0x3] %vm3421, 0.0
        %3435 = vst.msk [vmem:[#allocation4 + $0x70] sm:$0xff] %vm3419, 0.0
        %3436 = vst.msk [vmem:[#allocation4 + $0x78] sm:$0x3] %vm3421, 0.0
        %3437 = vst.msk [vmem:[#allocation4 + $0x80] sm:$0xff] %vm3419, 0.0
        %3438 = vst.msk [vmem:[#allocation4 + $0x88] sm:$0x3] %vm3421, 0.0
        %3439 = vst.msk [vmem:[#allocation4 + $0x90] sm:$0xff] %vm3419, 0.0
        %3440 = vst.msk [vmem:[#allocation4 + $0x98] sm:$0x3] %vm3421, 0.0
        %v3505 = vlaneseq
        %v3506 = vshrl.u32 %v3505, 7
        %v3507 = vsub.s32 0, %v3506
        %v3508 = vrot.slane %v3355, %v3507
        %v3509 = vlaneseq
        %v3510 = vshrl.u32 %v3509, 7
        %v3511 = vsub.s32 0, %v3510
        %v3512 = vrot.slane %v3356, %v3511
        %v3513 = vlaneseq
        %v3514 = vshrl.u32 %v3513, 7
        %v3515 = vsub.s32 0, %v3514
        %v3516 = vrot.slane %v3357, %v3515
        %v3517 = vlaneseq
        %v3518 = vshrl.u32 %v3517, 7
        %v3519 = vsub.s32 0, %v3518
        %v3520 = vrot.slane %v3358, %v3519
        %v3521 = vlaneseq
        %v3522 = vshrl.u32 %v3521, 7
        %v3523 = vsub.s32 0, %v3522
        %v3524 = vrot.slane %v3359, %v3523
        %v3525 = vlaneseq
        %v3526 = vshrl.u32 %v3525, 7
        %v3527 = vsub.s32 0, %v3526
        %v3528 = vrot.slane %v3360, %v3527
        %v3529 = vlaneseq
        %v3530 = vshrl.u32 %v3529, 7
        %v3531 = vsub.s32 0, %v3530
        %v3532 = vrot.slane %v3361, %v3531
        %v3533 = vlaneseq
        %v3534 = vshrl.u32 %v3533, 7
        %v3535 = vsub.s32 0, %v3534
        %v3536 = vrot.slane %v3362, %v3535
        %v3537 = vlaneseq
        %v3538 = vshrl.u32 %v3537, 7
        %v3539 = vsub.s32 0, %v3538
        %v3540 = vrot.slane %v3363, %v3539
        %v3541 = vlaneseq
        %v3542 = vshrl.u32 %v3541, 7
        %v3543 = vsub.s32 0, %v3542
        %v3544 = vrot.slane %v3364, %v3543
        %v3545 = vlaneseq
        %v3546 = vshrl.u32 %v3545, 7
        %v3547 = vsub.s32 0, %v3546
        %v3548 = vrot.slane %v3365, %v3547
        %v3549 = vlaneseq
        %v3550 = vshrl.u32 %v3549, 7
        %v3551 = vsub.s32 0, %v3550
        %v3552 = vrot.slane %v3366, %v3551
        %v3553 = vlaneseq
        %v3554 = vshrl.u32 %v3553, 7
        %v3555 = vsub.s32 0, %v3554
        %v3556 = vrot.slane %v3367, %v3555
        %v3557 = vlaneseq
        %v3558 = vshrl.u32 %v3557, 7
        %v3559 = vsub.s32 0, %v3558
        %v3560 = vrot.slane %v3368, %v3559
        %v3561 = vlaneseq
        %v3562 = vshrl.u32 %v3561, 7
        %v3563 = vsub.s32 0, %v3562
        %v3564 = vrot.slane %v3369, %v3563
        %v3565 = vlaneseq
        %v3566 = vshrl.u32 %v3565, 7
        %v3567 = vsub.s32 0, %v3566
        %v3568 = vrot.slane %v3370, %v3567
        %v3569 = vlaneseq
        %v3570 = vshrl.u32 %v3569, 7
        %v3571 = vsub.s32 0, %v3570
        %v3572 = vrot.slane %v3371, %v3571
        %v3573 = vlaneseq
        %v3574 = vshrl.u32 %v3573, 7
        %v3575 = vsub.s32 0, %v3574
        %v3576 = vrot.slane %v3372, %v3575
        %v3577 = vlaneseq
        %v3578 = vshrl.u32 %v3577, 7
        %v3579 = vsub.s32 0, %v3578
        %v3580 = vrot.slane %v3373, %v3579
        %v3581 = vlaneseq
        %v3582 = vshrl.u32 %v3581, 7
        %v3583 = vsub.s32 0, %v3582
        %v3584 = vrot.slane %v3374, %v3583
        %v3585 = vlaneseq
        %v3586 = vshrl.u32 %v3585, 7
        %v3587 = vsub.s32 0, %v3586
        %v3588 = vrot.slane %v3375, %v3587
        %v3589 = vlaneseq
        %v3590 = vshrl.u32 %v3589, 7
        %v3591 = vsub.s32 0, %v3590
        %v3592 = vrot.slane %v3376, %v3591
        %v3593 = vlaneseq
        %v3594 = vshrl.u32 %v3593, 7
        %v3595 = vsub.s32 0, %v3594
        %v3596 = vrot.slane %v3377, %v3595
        %v3597 = vlaneseq
        %v3598 = vshrl.u32 %v3597, 7
        %v3599 = vsub.s32 0, %v3598
        %v3600 = vrot.slane %v3378, %v3599
        %v3601 = vlaneseq
        %v3602 = vshrl.u32 %v3601, 7
        %v3603 = vsub.s32 0, %v3602
        %v3604 = vrot.slane %v3379, %v3603
        %v3605 = vlaneseq
        %v3606 = vshrl.u32 %v3605, 7
        %v3607 = vsub.s32 0, %v3606
        %v3608 = vrot.slane %v3380, %v3607
        %v3609 = vlaneseq
        %v3610 = vshrl.u32 %v3609, 7
        %v3611 = vsub.s32 0, %v3610
        %v3612 = vrot.slane %v3381, %v3611
        %v3613 = vlaneseq
        %v3614 = vshrl.u32 %v3613, 7
        %v3615 = vsub.s32 0, %v3614
        %v3616 = vrot.slane %v3382, %v3615
        %v3617 = vlaneseq
        %v3618 = vshrl.u32 %v3617, 7
        %v3619 = vsub.s32 0, %v3618
        %v3620 = vrot.slane %v3383, %v3619
        %v3621 = vlaneseq
        %v3622 = vshrl.u32 %v3621, 7
        %v3623 = vsub.s32 0, %v3622
        %v3624 = vrot.slane %v3384, %v3623
        %v3625 = vlaneseq
        %v3626 = vshrl.u32 %v3625, 7
        %v3627 = vsub.s32 0, %v3626
        %v3628 = vrot.slane %v3385, %v3627
        %v3629 = vlaneseq
        %v3630 = vshrl.u32 %v3629, 7
        %v3631 = vsub.s32 0, %v3630
        %v3632 = vrot.slane %v3386, %v3631
        %v3633 = vlaneseq
        %v3634 = vshrl.u32 %v3633, 7
        %v3635 = vsub.s32 0, %v3634
        %v3636 = vrot.slane %v3387, %v3635
        %v3637 = vlaneseq
        %v3638 = vshrl.u32 %v3637, 7
        %v3639 = vsub.s32 0, %v3638
        %v3640 = vrot.slane %v3388, %v3639
        %v3641 = vlaneseq
        %v3642 = vshrl.u32 %v3641, 7
        %v3643 = vsub.s32 0, %v3642
        %v3644 = vrot.slane %v3389, %v3643
        %v3645 = vlaneseq
        %v3646 = vshrl.u32 %v3645, 7
        %v3647 = vsub.s32 0, %v3646
        %v3648 = vrot.slane %v3390, %v3647
        %v3649 = vlaneseq
        %v3650 = vshrl.u32 %v3649, 7
        %v3651 = vsub.s32 0, %v3650
        %v3652 = vrot.slane %v3391, %v3651
        %v3653 = vlaneseq
        %v3654 = vshrl.u32 %v3653, 7
        %v3655 = vsub.s32 0, %v3654
        %v3656 = vrot.slane %v3392, %v3655
        %v3657 = vlaneseq
        %v3658 = vshrl.u32 %v3657, 7
        %v3659 = vsub.s32 0, %v3658
        %v3660 = vrot.slane %v3393, %v3659
        %v3661 = vlaneseq
        %v3662 = vshrl.u32 %v3661, 7
        %v3663 = vsub.s32 0, %v3662
        %v3664 = vrot.slane %v3394, %v3663
        %v3665 = vlaneseq
        %v3666 = vshrl.u32 %v3665, 7
        %v3667 = vsub.s32 0, %v3666
        %v3668 = vrot.slane %v3395, %v3667
        %v3669 = vlaneseq
        %v3670 = vshrl.u32 %v3669, 7
        %v3671 = vsub.s32 0, %v3670
        %v3672 = vrot.slane %v3396, %v3671
        %v3673 = vlaneseq
        %v3674 = vshrl.u32 %v3673, 7
        %v3675 = vsub.s32 0, %v3674
        %v3676 = vrot.slane %v3397, %v3675
        %v3677 = vlaneseq
        %v3678 = vshrl.u32 %v3677, 7
        %v3679 = vsub.s32 0, %v3678
        %v3680 = vrot.slane %v3398, %v3679
        %v3681 = vlaneseq
        %v3682 = vshrl.u32 %v3681, 7
        %v3683 = vsub.s32 0, %v3682
        %v3684 = vrot.slane %v3399, %v3683
        %v3685 = vlaneseq
        %v3686 = vshrl.u32 %v3685, 7
        %v3687 = vsub.s32 0, %v3686
        %v3688 = vrot.slane %v3400, %v3687
        %v3689 = vlaneseq
        %v3690 = vshrl.u32 %v3689, 7
        %v3691 = vsub.s32 0, %v3690
        %v3692 = vrot.slane %v3401, %v3691
        %v3693 = vlaneseq
        %v3694 = vshrl.u32 %v3693, 7
        %v3695 = vsub.s32 0, %v3694
        %v3696 = vrot.slane %v3402, %v3695
        %v3697 = vlaneseq
        %v3698 = vshrl.u32 %v3697, 7
        %v3699 = vsub.s32 0, %v3698
        %v3700 = vrot.slane %v3403, %v3699
        %v3701 = vlaneseq
        %v3702 = vshrl.u32 %v3701, 7
        %v3703 = vsub.s32 0, %v3702
        %v3704 = vrot.slane %v3404, %v3703
        %v3705 = vlaneseq
        %v3706 = vshrl.u32 %v3705, 7
        %v3707 = vsub.s32 0, %v3706
        %v3708 = vrot.slane %v3405, %v3707
        %v3709 = vlaneseq
        %v3710 = vshrl.u32 %v3709, 7
        %v3711 = vsub.s32 0, %v3710
        %v3712 = vrot.slane %v3406, %v3711
        %v3713 = vlaneseq
        %v3714 = vshrl.u32 %v3713, 7
        %v3715 = vsub.s32 0, %v3714
        %v3716 = vrot.slane %v3407, %v3715
        %v3717 = vlaneseq
        %v3718 = vshrl.u32 %v3717, 7
        %v3719 = vsub.s32 0, %v3718
        %v3720 = vrot.slane %v3408, %v3719
        %v3721 = vlaneseq
        %v3722 = vshrl.u32 %v3721, 7
        %v3723 = vsub.s32 0, %v3722
        %v3724 = vrot.slane %v3409, %v3723
        %v3725 = vlaneseq
        %v3726 = vshrl.u32 %v3725, 7
        %v3727 = vsub.s32 0, %v3726
        %v3728 = vrot.slane %v3410, %v3727
        %v3729 = vlaneseq
        %v3730 = vshrl.u32 %v3729, 7
        %v3731 = vsub.s32 0, %v3730
        %v3732 = vrot.slane %v3411, %v3731
        %v3733 = vlaneseq
        %v3734 = vshrl.u32 %v3733, 7
        %v3735 = vsub.s32 0, %v3734
        %v3736 = vrot.slane %v3412, %v3735
        %v3737 = vlaneseq
        %v3738 = vshrl.u32 %v3737, 7
        %v3739 = vsub.s32 0, %v3738
        %v3740 = vrot.slane %v3413, %v3739
        %v3741 = vlaneseq
        %v3742 = vshrl.u32 %v3741, 7
        %v3743 = vsub.s32 0, %v3742
        %v3744 = vrot.slane %v3414, %v3743
        %v3745 = vlaneseq
        %v3746 = vshrl.u32 %v3745, 7
        %v3747 = vsub.s32 0, %v3746
        %v3748 = vrot.slane %v3415, %v3747
        %v3749 = vlaneseq
        %v3750 = vshrl.u32 %v3749, 7
        %v3751 = vsub.s32 0, %v3750
        %v3752 = vrot.slane %v3416, %v3751
        %v3753 = vlaneseq
        %v3754 = vshrl.u32 %v3753, 7
        %v3755 = vsub.s32 0, %v3754
        %v3756 = vrot.slane %v3417, %v3755
        %v3757 = vlaneseq
        %v3758 = vshrl.u32 %v3757, 7
        %v3759 = vsub.s32 0, %v3758
        %v3760 = vrot.slane %v3418, %v3759
        %vm3761 = vcmask 1041409
        %v3762 = vsel %vm3761, %v3512, %v3508
        %vm3763 = vcmask 1042434
        %v3764 = vsel %vm3763, %v3516, %v3762
        %vm3765 = vcmask 1043459
        %v3766 = vsel %vm3765, %v3520, %v3764
        %vm3767 = vcmask 1044484
        %v3768 = vsel %vm3767, %v3524, %v3766
        %vm3769 = vcmask 1045509
        %v3770 = vsel %vm3769, %v3528, %v3768
        %vm3771 = vcmask 1046534
        %v3772 = vsel %vm3771, %v3532, %v3770
        %vm3773 = vcmask 1047559
        %v3774 = vsel %vm3773, %v3536, %v3772
        %v3775 = vsel %vm3761, %v3544, %v3540
        %v3776 = vsel %vm3763, %v3548, %v3775
        %v3777 = vsel %vm3765, %v3552, %v3776
        %v3778 = vsel %vm3767, %v3556, %v3777
        %v3779 = vsel %vm3769, %v3560, %v3778
        %v3780 = vsel %vm3771, %v3564, %v3779
        %v3781 = vsel %vm3773, %v3568, %v3780
        %v3782 = vsel %vm3761, %v3576, %v3572
        %v3783 = vsel %vm3763, %v3580, %v3782
        %v3784 = vsel %vm3765, %v3584, %v3783
        %v3785 = vsel %vm3767, %v3588, %v3784
        %v3786 = vsel %vm3769, %v3592, %v3785
        %v3787 = vsel %vm3771, %v3596, %v3786
        %v3788 = vsel %vm3773, %v3600, %v3787
        %v3789 = vsel %vm3761, %v3608, %v3604
        %v3790 = vsel %vm3763, %v3612, %v3789
        %v3791 = vsel %vm3765, %v3616, %v3790
        %v3792 = vsel %vm3767, %v3620, %v3791
        %v3793 = vsel %vm3769, %v3624, %v3792
        %v3794 = vsel %vm3771, %v3628, %v3793
        %v3795 = vsel %vm3773, %v3632, %v3794
        %v3796 = vsel %vm3761, %v3640, %v3636
        %v3797 = vsel %vm3763, %v3644, %v3796
        %v3798 = vsel %vm3765, %v3648, %v3797
        %v3799 = vsel %vm3767, %v3652, %v3798
        %v3800 = vsel %vm3769, %v3656, %v3799
        %v3801 = vsel %vm3771, %v3660, %v3800
        %v3802 = vsel %vm3773, %v3664, %v3801
        %v3803 = vsel %vm3761, %v3672, %v3668
        %v3804 = vsel %vm3763, %v3676, %v3803
        %v3805 = vsel %vm3765, %v3680, %v3804
        %v3806 = vsel %vm3767, %v3684, %v3805
        %v3807 = vsel %vm3769, %v3688, %v3806
        %v3808 = vsel %vm3771, %v3692, %v3807
        %v3809 = vsel %vm3773, %v3696, %v3808
        %v3810 = vsel %vm3761, %v3704, %v3700
        %v3811 = vsel %vm3763, %v3708, %v3810
        %v3812 = vsel %vm3765, %v3712, %v3811
        %v3813 = vsel %vm3767, %v3716, %v3812
        %v3814 = vsel %vm3769, %v3720, %v3813
        %v3815 = vsel %vm3771, %v3724, %v3814
        %v3816 = vsel %vm3773, %v3728, %v3815
        %v3817 = vsel %vm3761, %v3736, %v3732
        %v3818 = vsel %vm3763, %v3740, %v3817
        %v3819 = vsel %vm3765, %v3744, %v3818
        %v3820 = vsel %vm3767, %v3748, %v3819
        %v3821 = vsel %vm3769, %v3752, %v3820
        %v3822 = vsel %vm3771, %v3756, %v3821
        %v3823 = vsel %vm3773, %v3760, %v3822
        %s3832 = scalar_lea.vmem [#allocation4], 16
        %3833 = vst.msk [vmem:[%s3832 + $0x1] sm:$0xff] %vm3419, %v3774
        %3834 = vst.msk [vmem:[%s3832 + $0x11] sm:$0xff] %vm3419, %v3781
        %3835 = vst.msk [vmem:[%s3832 + $0x21] sm:$0xff] %vm3419, %v3788
        %3836 = vst.msk [vmem:[%s3832 + $0x31] sm:$0xff] %vm3419, %v3795
        %3837 = vst.msk [vmem:[%s3832 + $0x41] sm:$0xff] %vm3419, %v3802
        %3838 = vst.msk [vmem:[%s3832 + $0x51] sm:$0xff] %vm3419, %v3809
        %3839 = vst.msk [vmem:[%s3832 + $0x61] sm:$0xff] %vm3419, %v3816
        %3840 = vst.msk [vmem:[%s3832 + $0x71] sm:$0xff] %vm3419, %v3823
        %v3841 = vld [vmem:[#allocation4] sm:$0xff]
        %v3842 = vld [vmem:[#allocation4 + $0x8] sm:$0x3]
        %v3843 = vld [vmem:[#allocation4 + $0x10] sm:$0xff]
        %v3844 = vld [vmem:[#allocation4 + $0x18] sm:$0x3]
        %v3845 = vld [vmem:[#allocation4 + $0x20] sm:$0xff]
        %v3846 = vld [vmem:[#allocation4 + $0x28] sm:$0x3]
        %v3847 = vld [vmem:[#allocation4 + $0x30] sm:$0xff]
        %v3848 = vld [vmem:[#allocation4 + $0x38] sm:$0x3]
        %v3849 = vld [vmem:[#allocation4 + $0x40] sm:$0xff]
        %v3850 = vld [vmem:[#allocation4 + $0x48] sm:$0x3]
        %v3851 = vld [vmem:[#allocation4 + $0x50] sm:$0xff]
        %v3852 = vld [vmem:[#allocation4 + $0x58] sm:$0x3]
        %v3853 = vld [vmem:[#allocation4 + $0x60] sm:$0xff]
        %v3854 = vld [vmem:[#allocation4 + $0x68] sm:$0x3]
        %v3855 = vld [vmem:[#allocation4 + $0x70] sm:$0xff]
        %v3856 = vld [vmem:[#allocation4 + $0x78] sm:$0x3]
        %v3857 = vld [vmem:[#allocation4 + $0x80] sm:$0xff]
        %v3858 = vld [vmem:[#allocation4 + $0x88] sm:$0x3]
        %v3859 = vld [vmem:[#allocation4 + $0x90] sm:$0xff]
        %v3860 = vld [vmem:[#allocation4 + $0x98] sm:$0x3]
        %3861 = vst.msk [vmem:[#allocation5] sm:$0xff] %vm3419, %v3841
        %3862 = vst.msk [vmem:[#allocation5 + $0x10] sm:$0xff] %vm3419, %v3843
        %3863 = vst.msk [vmem:[#allocation5 + $0x20] sm:$0xff] %vm3419, %v3845
        %3864 = vst.msk [vmem:[#allocation5 + $0x30] sm:$0xff] %vm3419, %v3847
        %3865 = vst.msk [vmem:[#allocation5 + $0x40] sm:$0xff] %vm3419, %v3849
        %3866 = vst.msk [vmem:[#allocation5 + $0x50] sm:$0xff] %vm3419, %v3851
        %3867 = vst.msk [vmem:[#allocation5 + $0x60] sm:$0xff] %vm3419, %v3853
        %3868 = vst.msk [vmem:[#allocation5 + $0x70] sm:$0xff] %vm3419, %v3855
        %v3885 = vrot.slane %v3841, 1
        %v3886 = vrot.slane %v3842, 1
        %v3887 = vsel %vm601, %v3885, %v3886
        %v3888 = vrot.slane %v3843, 1
        %v3889 = vrot.slane %v3844, 1
        %v3890 = vsel %vm601, %v3888, %v3889
        %v3891 = vrot.slane %v3845, 1
        %v3892 = vrot.slane %v3846, 1
        %v3893 = vsel %vm601, %v3891, %v3892
        %v3894 = vrot.slane %v3847, 1
        %v3895 = vrot.slane %v3848, 1
        %v3896 = vsel %vm601, %v3894, %v3895
        %v3897 = vrot.slane %v3849, 1
        %v3898 = vrot.slane %v3850, 1
        %v3899 = vsel %vm601, %v3897, %v3898
        %v3900 = vrot.slane %v3851, 1
        %v3901 = vrot.slane %v3852, 1
        %v3902 = vsel %vm601, %v3900, %v3901
        %v3903 = vrot.slane %v3853, 1
        %v3904 = vrot.slane %v3854, 1
        %v3905 = vsel %vm601, %v3903, %v3904
        %v3906 = vrot.slane %v3855, 1
        %v3907 = vrot.slane %v3856, 1
        %v3908 = vsel %vm601, %v3906, %v3907
        %3909 = vrot.lane.b32.xlu0 %v3887, 16
        %v3910 = vpop.permute.xlu0 %3909
        %3911 = vrot.lane.b32.xlu0 %v3890, 16
        %v3912 = vpop.permute.xlu0 %3911
        %3913 = vrot.lane.b32.xlu0 %v3893, 16
        %v3914 = vpop.permute.xlu0 %3913
        %3915 = vrot.lane.b32.xlu0 %v3896, 16
        %v3916 = vpop.permute.xlu0 %3915
        %3917 = vrot.lane.b32.xlu0 %v3899, 16
        %v3918 = vpop.permute.xlu0 %3917
        %3919 = vrot.lane.b32.xlu0 %v3902, 16
        %v3920 = vpop.permute.xlu0 %3919
        %3921 = vrot.lane.b32.xlu0 %v3905, 16
        %v3922 = vpop.permute.xlu0 %3921
        %3923 = vrot.lane.b32.xlu0 %v3908, 16
        %v3924 = vpop.permute.xlu0 %3923
        %vm3933 = vcmask 261248
        %3934 = vst.msk [vmem:[#allocation5] sm:$0xff] %vm3933, %v3910
        %3935 = vst.msk [vmem:[#allocation5 + $0x10] sm:$0xff] %vm3933, %v3912
        %3936 = vst.msk [vmem:[#allocation5 + $0x20] sm:$0xff] %vm3933, %v3914
        %3937 = vst.msk [vmem:[#allocation5 + $0x30] sm:$0xff] %vm3933, %v3916
        %3938 = vst.msk [vmem:[#allocation5 + $0x40] sm:$0xff] %vm3933, %v3918
        %3939 = vst.msk [vmem:[#allocation5 + $0x50] sm:$0xff] %vm3933, %v3920
        %3940 = vst.msk [vmem:[#allocation5 + $0x60] sm:$0xff] %vm3933, %v3922
        %3941 = vst.msk [vmem:[#allocation5 + $0x70] sm:$0xff] %vm3933, %v3924
        %v3942 = vrot.slane %v3841, 2
        %v3943 = vrot.slane %v3842, 2
        %v3944 = vsel %vm811, %v3942, %v3943
        %v3945 = vrot.slane %v3843, 2
        %v3946 = vrot.slane %v3844, 2
        %v3947 = vsel %vm811, %v3945, %v3946
        %v3948 = vrot.slane %v3845, 2
        %v3949 = vrot.slane %v3846, 2
        %v3950 = vsel %vm811, %v3948, %v3949
        %v3951 = vrot.slane %v3847, 2
        %v3952 = vrot.slane %v3848, 2
        %v3953 = vsel %vm811, %v3951, %v3952
        %v3954 = vrot.slane %v3849, 2
        %v3955 = vrot.slane %v3850, 2
        %v3956 = vsel %vm811, %v3954, %v3955
        %v3957 = vrot.slane %v3851, 2
        %v3958 = vrot.slane %v3852, 2
        %v3959 = vsel %vm811, %v3957, %v3958
        %v3960 = vrot.slane %v3853, 2
        %v3961 = vrot.slane %v3854, 2
        %v3962 = vsel %vm811, %v3960, %v3961
        %v3963 = vrot.slane %v3855, 2
        %v3964 = vrot.slane %v3856, 2
        %v3965 = vsel %vm811, %v3963, %v3964
        %3966 = vrot.lane.b32.xlu0 %v3944, 32
        %v3967 = vpop.permute.xlu0 %3966
        %3968 = vrot.lane.b32.xlu0 %v3947, 32
        %v3969 = vpop.permute.xlu0 %3968
        %3970 = vrot.lane.b32.xlu0 %v3950, 32
        %v3971 = vpop.permute.xlu0 %3970
        %3972 = vrot.lane.b32.xlu0 %v3953, 32
        %v3973 = vpop.permute.xlu0 %3972
        %3974 = vrot.lane.b32.xlu0 %v3956, 32
        %v3975 = vpop.permute.xlu0 %3974
        %3976 = vrot.lane.b32.xlu0 %v3959, 32
        %v3977 = vpop.permute.xlu0 %3976
        %3978 = vrot.lane.b32.xlu0 %v3962, 32
        %v3979 = vpop.permute.xlu0 %3978
        %3980 = vrot.lane.b32.xlu0 %v3965, 32
        %v3981 = vpop.permute.xlu0 %3980
        %vm3990 = vcmask 392448
        %3991 = vst.msk [vmem:[#allocation5] sm:$0xff] %vm3990, %v3967
        %3992 = vst.msk [vmem:[#allocation5 + $0x10] sm:$0xff] %vm3990, %v3969
        %3993 = vst.msk [vmem:[#allocation5 + $0x20] sm:$0xff] %vm3990, %v3971
        %3994 = vst.msk [vmem:[#allocation5 + $0x30] sm:$0xff] %vm3990, %v3973
        %3995 = vst.msk [vmem:[#allocation5 + $0x40] sm:$0xff] %vm3990, %v3975
        %3996 = vst.msk [vmem:[#allocation5 + $0x50] sm:$0xff] %vm3990, %v3977
        %3997 = vst.msk [vmem:[#allocation5 + $0x60] sm:$0xff] %vm3990, %v3979
        %3998 = vst.msk [vmem:[#allocation5 + $0x70] sm:$0xff] %vm3990, %v3981
        %4000 = vrot.lane.b32.xlu0 %v3843, 48
        %v4001 = vpop.permute.xlu0 %4000
        %4002 = vrot.lane.b32.xlu0 %v3845, 48
        %v4003 = vpop.permute.xlu0 %4002
        %4004 = vrot.lane.b32.xlu0 %v3847, 48
        %v4005 = vpop.permute.xlu0 %4004
        %4006 = vrot.lane.b32.xlu0 %v3849, 48
        %v4007 = vpop.permute.xlu0 %4006
        %4008 = vrot.lane.b32.xlu0 %v3851, 48
        %v4009 = vpop.permute.xlu0 %4008
        %4010 = vrot.lane.b32.xlu0 %v3853, 48
        %v4011 = vpop.permute.xlu0 %4010
        %4012 = vrot.lane.b32.xlu0 %v3855, 48
        %v4013 = vpop.permute.xlu0 %4012
        %4014 = vrot.lane.b32.xlu0 %v3857, 48
        %v4015 = vpop.permute.xlu0 %4014
        %vm4024 = vcmask 523648
        %4025 = vst.msk [vmem:[#allocation5] sm:$0xff] %vm4024, %v4001
        %4026 = vst.msk [vmem:[#allocation5 + $0x10] sm:$0xff] %vm4024, %v4003
        %4027 = vst.msk [vmem:[#allocation5 + $0x20] sm:$0xff] %vm4024, %v4005
        %4028 = vst.msk [vmem:[#allocation5 + $0x30] sm:$0xff] %vm4024, %v4007
        %4029 = vst.msk [vmem:[#allocation5 + $0x40] sm:$0xff] %vm4024, %v4009
        %4030 = vst.msk [vmem:[#allocation5 + $0x50] sm:$0xff] %vm4024, %v4011
        %4031 = vst.msk [vmem:[#allocation5 + $0x60] sm:$0xff] %vm4024, %v4013
        %4032 = vst.msk [vmem:[#allocation5 + $0x70] sm:$0xff] %vm4024, %v4015
        %v4034 = vrot.slane %v3857, 1
        %v4035 = vrot.slane %v3858, 1
        %v4036 = vsel %vm601, %v4034, %v4035
        %4037 = vrot.lane.b32.xlu0 %v3890, 64
        %v4038 = vpop.permute.xlu0 %4037
        %4039 = vrot.lane.b32.xlu0 %v3893, 64
        %v4040 = vpop.permute.xlu0 %4039
        %4041 = vrot.lane.b32.xlu0 %v3896, 64
        %v4042 = vpop.permute.xlu0 %4041
        %4043 = vrot.lane.b32.xlu0 %v3899, 64
        %v4044 = vpop.permute.xlu0 %4043
        %4045 = vrot.lane.b32.xlu0 %v3902, 64
        %v4046 = vpop.permute.xlu0 %4045
        %4047 = vrot.lane.b32.xlu0 %v3905, 64
        %v4048 = vpop.permute.xlu0 %4047
        %4049 = vrot.lane.b32.xlu0 %v3908, 64
        %v4050 = vpop.permute.xlu0 %4049
        %4051 = vrot.lane.b32.xlu0 %v4036, 64
        %v4052 = vpop.permute.xlu0 %4051
        %vm4061 = vcmask 654848
        %4062 = vst.msk [vmem:[#allocation5] sm:$0xff] %vm4061, %v4038
        %4063 = vst.msk [vmem:[#allocation5 + $0x10] sm:$0xff] %vm4061, %v4040
        %4064 = vst.msk [vmem:[#allocation5 + $0x20] sm:$0xff] %vm4061, %v4042
        %4065 = vst.msk [vmem:[#allocation5 + $0x30] sm:$0xff] %vm4061, %v4044
        %4066 = vst.msk [vmem:[#allocation5 + $0x40] sm:$0xff] %vm4061, %v4046
        %4067 = vst.msk [vmem:[#allocation5 + $0x50] sm:$0xff] %vm4061, %v4048
        %4068 = vst.msk [vmem:[#allocation5 + $0x60] sm:$0xff] %vm4061, %v4050
        %4069 = vst.msk [vmem:[#allocation5 + $0x70] sm:$0xff] %vm4061, %v4052
        %v4070 = vrot.slane %v3857, 2
        %v4071 = vrot.slane %v3858, 2
        %v4072 = vsel %vm811, %v4070, %v4071
        %4073 = vrot.lane.b32.xlu0 %v3947, 80
        %v4074 = vpop.permute.xlu0 %4073
        %4075 = vrot.lane.b32.xlu0 %v3950, 80
        %v4076 = vpop.permute.xlu0 %4075
        %4077 = vrot.lane.b32.xlu0 %v3953, 80
        %v4078 = vpop.permute.xlu0 %4077
        %4079 = vrot.lane.b32.xlu0 %v3956, 80
        %v4080 = vpop.permute.xlu0 %4079
        %4081 = vrot.lane.b32.xlu0 %v3959, 80
        %v4082 = vpop.permute.xlu0 %4081
        %4083 = vrot.lane.b32.xlu0 %v3962, 80
        %v4084 = vpop.permute.xlu0 %4083
        %4085 = vrot.lane.b32.xlu0 %v3965, 80
        %v4086 = vpop.permute.xlu0 %4085
        %4087 = vrot.lane.b32.xlu0 %v4072, 80
        %v4088 = vpop.permute.xlu0 %4087
        %vm4097 = vcmask 786048
        %4098 = vst.msk [vmem:[#allocation5] sm:$0xff] %vm4097, %v4074
        %4099 = vst.msk [vmem:[#allocation5 + $0x10] sm:$0xff] %vm4097, %v4076
        %4100 = vst.msk [vmem:[#allocation5 + $0x20] sm:$0xff] %vm4097, %v4078
        %4101 = vst.msk [vmem:[#allocation5 + $0x30] sm:$0xff] %vm4097, %v4080
        %4102 = vst.msk [vmem:[#allocation5 + $0x40] sm:$0xff] %vm4097, %v4082
        %4103 = vst.msk [vmem:[#allocation5 + $0x50] sm:$0xff] %vm4097, %v4084
        %4104 = vst.msk [vmem:[#allocation5 + $0x60] sm:$0xff] %vm4097, %v4086
        %4105 = vst.msk [vmem:[#allocation5 + $0x70] sm:$0xff] %vm4097, %v4088
        %4107 = vrot.lane.b32.xlu0 %v3845, 96
        %v4108 = vpop.permute.xlu0 %4107
        %4109 = vrot.lane.b32.xlu0 %v3847, 96
        %v4110 = vpop.permute.xlu0 %4109
        %4111 = vrot.lane.b32.xlu0 %v3849, 96
        %v4112 = vpop.permute.xlu0 %4111
        %4113 = vrot.lane.b32.xlu0 %v3851, 96
        %v4114 = vpop.permute.xlu0 %4113
        %4115 = vrot.lane.b32.xlu0 %v3853, 96
        %v4116 = vpop.permute.xlu0 %4115
        %4117 = vrot.lane.b32.xlu0 %v3855, 96
        %v4118 = vpop.permute.xlu0 %4117
        %4119 = vrot.lane.b32.xlu0 %v3857, 96
        %v4120 = vpop.permute.xlu0 %4119
        %4121 = vrot.lane.b32.xlu0 %v3859, 96
        %v4122 = vpop.permute.xlu0 %4121
        %vm4131 = vcmask 917248
        %4132 = vst.msk [vmem:[#allocation5] sm:$0xff] %vm4131, %v4108
        %4133 = vst.msk [vmem:[#allocation5 + $0x10] sm:$0xff] %vm4131, %v4110
        %4134 = vst.msk [vmem:[#allocation5 + $0x20] sm:$0xff] %vm4131, %v4112
        %4135 = vst.msk [vmem:[#allocation5 + $0x30] sm:$0xff] %vm4131, %v4114
        %4136 = vst.msk [vmem:[#allocation5 + $0x40] sm:$0xff] %vm4131, %v4116
        %4137 = vst.msk [vmem:[#allocation5 + $0x50] sm:$0xff] %vm4131, %v4118
        %4138 = vst.msk [vmem:[#allocation5 + $0x60] sm:$0xff] %vm4131, %v4120
        %4139 = vst.msk [vmem:[#allocation5 + $0x70] sm:$0xff] %vm4131, %v4122
        %v4141 = vrot.slane %v3859, 1
        %v4142 = vrot.slane %v3860, 1
        %v4143 = vsel %vm601, %v4141, %v4142
        %4144 = vrot.lane.b32.xlu0 %v3893, 112
        %v4145 = vpop.permute.xlu0 %4144
        %4146 = vrot.lane.b32.xlu0 %v3896, 112
        %v4147 = vpop.permute.xlu0 %4146
        %4148 = vrot.lane.b32.xlu0 %v3899, 112
        %v4149 = vpop.permute.xlu0 %4148
        %4150 = vrot.lane.b32.xlu0 %v3902, 112
        %v4151 = vpop.permute.xlu0 %4150
        %4152 = vrot.lane.b32.xlu0 %v3905, 112
        %v4153 = vpop.permute.xlu0 %4152
        %4154 = vrot.lane.b32.xlu0 %v3908, 112
        %v4155 = vpop.permute.xlu0 %4154
        %4156 = vrot.lane.b32.xlu0 %v4036, 112
        %v4157 = vpop.permute.xlu0 %4156
        %4158 = vrot.lane.b32.xlu0 %v4143, 112
        %v4159 = vpop.permute.xlu0 %4158
        %vm4168 = vcmask 1048448
        %4169 = vst.msk [vmem:[#allocation5] sm:$0xff] %vm4168, %v4145
        %4170 = vst.msk [vmem:[#allocation5 + $0x10] sm:$0xff] %vm4168, %v4147
        %4171 = vst.msk [vmem:[#allocation5 + $0x20] sm:$0xff] %vm4168, %v4149
        %4172 = vst.msk [vmem:[#allocation5 + $0x30] sm:$0xff] %vm4168, %v4151
        %4173 = vst.msk [vmem:[#allocation5 + $0x40] sm:$0xff] %vm4168, %v4153
        %4174 = vst.msk [vmem:[#allocation5 + $0x50] sm:$0xff] %vm4168, %v4155
        %4175 = vst.msk [vmem:[#allocation5 + $0x60] sm:$0xff] %vm4168, %v4157
        %4176 = vst.msk [vmem:[#allocation5 + $0x70] sm:$0xff] %vm4168, %v4159
        %v4177 = vrot.slane %v3859, 2
        %v4178 = vrot.slane %v3860, 2
        %v4179 = vsel %vm811, %v4177, %v4178
        %4188 = vst.msk [vmem:[#allocation5 + $0x8] sm:$0xff] %vm3419, %v3950
        %4189 = vst.msk [vmem:[#allocation5 + $0x18] sm:$0xff] %vm3419, %v3953
        %4190 = vst.msk [vmem:[#allocation5 + $0x28] sm:$0xff] %vm3419, %v3956
        %4191 = vst.msk [vmem:[#allocation5 + $0x38] sm:$0xff] %vm3419, %v3959
        %4192 = vst.msk [vmem:[#allocation5 + $0x48] sm:$0xff] %vm3419, %v3962
        %4193 = vst.msk [vmem:[#allocation5 + $0x58] sm:$0xff] %vm3419, %v3965
        %4194 = vst.msk [vmem:[#allocation5 + $0x68] sm:$0xff] %vm3419, %v4072
        %4195 = vst.msk [vmem:[#allocation5 + $0x78] sm:$0xff] %vm3419, %v4179
        %v4196 = vld [vmem:[#allocation5] sm:$0xff]
        %v4197 = vld [vmem:[#allocation5 + $0x8] sm:$0xff]
        %v4198 = vld [vmem:[#allocation5 + $0x10] sm:$0xff]
        %v4199 = vld [vmem:[#allocation5 + $0x18] sm:$0xff]
        %v4200 = vld [vmem:[#allocation5 + $0x20] sm:$0xff]
        %v4201 = vld [vmem:[#allocation5 + $0x28] sm:$0xff]
        %v4202 = vld [vmem:[#allocation5 + $0x30] sm:$0xff]
        %v4203 = vld [vmem:[#allocation5 + $0x38] sm:$0xff]
        %v4204 = vld [vmem:[#allocation5 + $0x40] sm:$0xff]
        %v4205 = vld [vmem:[#allocation5 + $0x48] sm:$0xff]
        %v4206 = vld [vmem:[#allocation5 + $0x50] sm:$0xff]
        %v4207 = vld [vmem:[#allocation5 + $0x58] sm:$0xff]
        %v4208 = vld [vmem:[#allocation5 + $0x60] sm:$0xff]
        %v4209 = vld [vmem:[#allocation5 + $0x68] sm:$0xff]
        %v4210 = vld [vmem:[#allocation5 + $0x70] sm:$0xff]
        %v4211 = vld [vmem:[#allocation5 + $0x78] sm:$0xff]
        %v4212 = vpack.c.bf16 %v4198, %v4196
        %v4213 = vpack.c.bf16 %v4199, %v4197
        %v4214 = vpack.c.bf16 %v4202, %v4200
        %v4215 = vpack.c.bf16 %v4203, %v4201
        %v4216 = vpack.c.bf16 %v4206, %v4204
        %v4217 = vpack.c.bf16 %v4207, %v4205
        %v4218 = vpack.c.bf16 %v4210, %v4208
        %v4219 = vpack.c.bf16 %v4211, %v4209
        %v4220 = vld [vmem:[%s3] sm:$0xf]
        %v4221 = vld [vmem:[%s3 + $0x4] sm:$0xf]
        %v4222 = vld [vmem:[%s3 + $0x8] sm:$0xf]
        %v4223 = vld [vmem:[%s3 + $0xc] sm:$0xf]
        %v4224 = vld [vmem:[%s3 + $0x10] sm:$0xf]
        %v4225 = vld [vmem:[%s3 + $0x14] sm:$0xf]
        %v4226 = vld [vmem:[%s3 + $0x18] sm:$0xf]
        %v4227 = vld [vmem:[%s3 + $0x1c] sm:$0xf]
        %v4228 = vld [vmem:[%s3 + $0x20] sm:$0xf]
        %v4229 = vld [vmem:[%s3 + $0x24] sm:$0xf]
        %v4230 = vld [vmem:[%s3 + $0x28] sm:$0xf]
        %v4231 = vld [vmem:[%s3 + $0x2c] sm:$0xf]
        %v4232 = vld [vmem:[%s3 + $0x30] sm:$0xf]
        %v4233 = vld [vmem:[%s3 + $0x34] sm:$0xf]
        %v4234 = vld [vmem:[%s3 + $0x38] sm:$0xf]
        %v4235 = vld [vmem:[%s3 + $0x3c] sm:$0xf]
        %v4236 = vld [vmem:[%s3 + $0x40] sm:$0xf]
        %v4237 = vld [vmem:[%s3 + $0x44] sm:$0xf]
        %v4238 = vld [vmem:[%s4] sm:$0x1]
        %v4240 = vlaneseq
        %v4241 = vshrl.u32 %v4240, 7
        %v4242 = vsub.s32 0, %v4241
        %v4243 = vrot.slane %v4238, %v4242
        %v4263 = vunpack.c.l.b16 %v4220
        %v4264 = vunpack.c.l.b16 %v4221
        %v4265 = vunpack.c.l.b16 %v4222
        %v4266 = vunpack.c.l.b16 %v4223
        %v4267 = vunpack.c.l.b16 %v4224
        %v4268 = vunpack.c.l.b16 %v4225
        %v4269 = vunpack.c.l.b16 %v4226
        %v4270 = vunpack.c.l.b16 %v4227
        %v4271 = vunpack.c.l.b16 %v4228
        %v4272 = vunpack.c.l.b16 %v4229
        %v4273 = vunpack.c.l.b16 %v4230
        %v4274 = vunpack.c.l.b16 %v4231
        %v4275 = vunpack.c.l.b16 %v4232
        %v4276 = vunpack.c.l.b16 %v4233
        %v4277 = vunpack.c.l.b16 %v4234
        %v4278 = vunpack.c.l.b16 %v4235
        %v4279 = vunpack.c.l.b16 %v4236
        %v4280 = vunpack.c.l.b16 %v4237
        %v4281 = vpack.c.b16 %v4264, %v4263
        %v4282 = vpack.c.b16 %v4266, %v4265
        %v4283 = vpack.c.b16 %v4268, %v4267
        %v4284 = vpack.c.b16 %v4270, %v4269
        %v4285 = vpack.c.b16 %v4272, %v4271
        %v4286 = vpack.c.b16 %v4274, %v4273
        %v4287 = vpack.c.b16 %v4276, %v4275
        %v4288 = vpack.c.b16 %v4278, %v4277
        %v4289 = vpack.c.b16 %v4280, %v4279
        %v4300 = vsel %vm3419, %v4213, 0
        %v4303 = vsel %vm3419, %v4215, 0
        %v4306 = vsel %vm3419, %v4217, 0
        %v4309 = vsel %vm3419, %v4219, 0
        %4311 = vmatprep.subr.bf16.mxu0 0
        %4312 = vmatpush1.bf16.msra.mxu0 %v4288
        %4313 = vmatprep.subr.bf16.mxu0 0
        %4314 = vmatpush1.bf16.msra.mxu0 %v4287
        %4315 = vmatprep.subr.bf16.mxu0 0
        %4316 = vmatpush1.bf16.msra.mxu0 %v4286
        %4317 = vmatprep.subr.bf16.mxu0 0
        %4318 = vmatpush1.bf16.msra.mxu0 %v4285
        %4319 = vmatprep.subr.bf16.mxu0 0
        %4320 = vmatpush1.bf16.msra.mxu0 %v4284
        %4321 = vmatprep.subr.bf16.mxu0 0
        %4322 = vmatpush1.bf16.msra.mxu0 %v4283
        %4323 = vmatprep.subr.bf16.mxu0 0
        %4324 = vmatpush1.bf16.msra.mxu0 %v4282
        %4325 = vmatprep.subr.bf16.mxu0 0
        %4326 = vmatpush1.bf16.msra.mxu0 %v4281
        %4327 = vmatprep.subr.bf16.mxu0 0
        %4328 = vmatpush2.bf16.msra.mxu0 0
        %4329 = vmatprep.subr.bf16.mxu0 0
        %4330 = vmatpush2.bf16.msra.mxu0 0
        %4331 = vmatprep.subr.bf16.mxu0 0
        %4332 = vmatpush2.bf16.msra.mxu0 0
        %4333 = vmatprep.subr.bf16.mxu0 0
        %4334 = vmatpush2.bf16.msra.mxu0 0
        %4335 = vmatprep.subr.bf16.mxu0 0
        %4336 = vmatpush2.bf16.msra.mxu0 0
        %4337 = vmatprep.subr.bf16.mxu0 0
        %4338 = vmatpush2.bf16.msra.mxu0 0
        %4339 = vmatprep.subr.bf16.mxu0 0
        %4340 = vmatpush2.bf16.msra.mxu0 0
        %4341 = vmatprep.subr.bf16.mxu0 0
        %4342 = vmatpush2.bf16.msra.mxu0 %v4289
        %4343 = vmatprep.mubr.bf16.mxu0 %v4300
        %4344 = vmatmul.mubr.bf16.gmra.mxu0 %v4212
        %v4345 = vpop.f32.mrf.mxu0
        %v4346 = vadd.f32 %v4243, %v4345
        %v4347 = vpop.f32.mrf.mxu0
        %v4348 = vpop.f32.mrf.mxu0
        %v4349 = vadd.f32 %v4243, %v4348
        %v4350 = vpop.f32.mrf.mxu0
        %4351 = vmatprep.mubr.bf16.mxu0 %v4303
        %4352 = vmatmul.mubr.bf16.gmra.mxu0 %v4214
        %v4353 = vpop.f32.mrf.mxu0
        %v4354 = vadd.f32 %v4243, %v4353
        %v4355 = vpop.f32.mrf.mxu0
        %v4356 = vpop.f32.mrf.mxu0
        %v4357 = vadd.f32 %v4243, %v4356
        %v4358 = vpop.f32.mrf.mxu0
        %4359 = vmatprep.mubr.bf16.mxu0 %v4306
        %4360 = vmatmul.mubr.bf16.gmra.mxu0 %v4216
        %v4361 = vpop.f32.mrf.mxu0
        %v4362 = vadd.f32 %v4243, %v4361
        %v4363 = vpop.f32.mrf.mxu0
        %v4364 = vpop.f32.mrf.mxu0
        %v4365 = vadd.f32 %v4243, %v4364
        %v4366 = vpop.f32.mrf.mxu0
        %4367 = vmatprep.mubr.bf16.mxu0 %v4309
        %4368 = vmatmul.mubr.bf16.gmra.mxu0 %v4218
        %v4369 = vpop.f32.mrf.mxu0
        %v4370 = vadd.f32 %v4243, %v4369
        %v4371 = vpop.f32.mrf.mxu0
        %v4372 = vpop.f32.mrf.mxu0
        %v4373 = vadd.f32 %v4243, %v4372
        %v4374 = vpop.f32.mrf.mxu0
        %4375 = vdwg.mxu0
        %v4376 = vmax.f32 %v4346, 0.0
        %v4377 = vmax.f32 %v4349, 0.0
        %v4378 = vmax.f32 %v4354, 0.0
        %v4379 = vmax.f32 %v4357, 0.0
        %v4380 = vmax.f32 %v4362, 0.0
        %v4381 = vmax.f32 %v4365, 0.0
        %v4382 = vmax.f32 %v4370, 0.0
        %v4383 = vmax.f32 %v4373, 0.0
        %v4392 = vcombine.high %v4376, %v4376
        %v4394 = vunpack.c.l.s4 1983009808
        %v4395 = vunpack.c.0.s8 %v4394
        %v4396 = vlaneseq
        %v4397 = vshrl.u32 %v4396, 7
        %v4398 = vsub.s32 %v4395, %v4397
        %v4399 = vrot.slane %v4376, %v4398
        %v4401 = vunpack.c.l.s4 1983009808
        %v4402 = vunpack.c.0.s8 %v4401
        %v4403 = vlaneseq
        %v4404 = vshrl.u32 %v4403, 7
        %v4405 = vsub.s32 %v4402, %v4404
        %v4406 = vrot.slane %v4392, %v4405
        %v4407 = vcombine.high %v4399, %v4399
        %v4408 = vcombine.high %v4406, %v4406
        %v4409 = vcombine.high %v4377, %v4377
        %v4411 = vunpack.c.l.s4 1983009808
        %v4412 = vunpack.c.0.s8 %v4411
        %v4413 = vlaneseq
        %v4414 = vshrl.u32 %v4413, 7
        %v4415 = vsub.s32 %v4412, %v4414
        %v4416 = vrot.slane %v4377, %v4415
        %v4418 = vunpack.c.l.s4 1983009808
        %v4419 = vunpack.c.0.s8 %v4418
        %v4420 = vlaneseq
        %v4421 = vshrl.u32 %v4420, 7
        %v4422 = vsub.s32 %v4419, %v4421
        %v4423 = vrot.slane %v4409, %v4422
        %v4424 = vcombine.high %v4416, %v4416
        %v4425 = vcombine.high %v4423, %v4423
        %v4426 = vcombine.high %v4378, %v4378
        %v4428 = vunpack.c.l.s4 1983009808
        %v4429 = vunpack.c.0.s8 %v4428
        %v4430 = vlaneseq
        %v4431 = vshrl.u32 %v4430, 7
        %v4432 = vsub.s32 %v4429, %v4431
        %v4433 = vrot.slane %v4378, %v4432
        %v4435 = vunpack.c.l.s4 1983009808
        %v4436 = vunpack.c.0.s8 %v4435
        %v4437 = vlaneseq
        %v4438 = vshrl.u32 %v4437, 7
        %v4439 = vsub.s32 %v4436, %v4438
        %v4440 = vrot.slane %v4426, %v4439
        %v4441 = vcombine.high %v4433, %v4433
        %v4442 = vcombine.high %v4440, %v4440
        %v4443 = vcombine.high %v4379, %v4379
        %v4445 = vunpack.c.l.s4 1983009808
        %v4446 = vunpack.c.0.s8 %v4445
        %v4447 = vlaneseq
        %v4448 = vshrl.u32 %v4447, 7
        %v4449 = vsub.s32 %v4446, %v4448
        %v4450 = vrot.slane %v4379, %v4449
        %v4452 = vunpack.c.l.s4 1983009808
        %v4453 = vunpack.c.0.s8 %v4452
        %v4454 = vlaneseq
        %v4455 = vshrl.u32 %v4454, 7
        %v4456 = vsub.s32 %v4453, %v4455
        %v4457 = vrot.slane %v4443, %v4456
        %v4458 = vcombine.high %v4450, %v4450
        %v4459 = vcombine.high %v4457, %v4457
        %v4460 = vcombine.high %v4380, %v4380
        %v4462 = vunpack.c.l.s4 1983009808
        %v4463 = vunpack.c.0.s8 %v4462
        %v4464 = vlaneseq
        %v4465 = vshrl.u32 %v4464, 7
        %v4466 = vsub.s32 %v4463, %v4465
        %v4467 = vrot.slane %v4380, %v4466
        %v4469 = vunpack.c.l.s4 1983009808
        %v4470 = vunpack.c.0.s8 %v4469
        %v4471 = vlaneseq
        %v4472 = vshrl.u32 %v4471, 7
        %v4473 = vsub.s32 %v4470, %v4472
        %v4474 = vrot.slane %v4460, %v4473
        %v4475 = vcombine.high %v4467, %v4467
        %v4476 = vcombine.high %v4474, %v4474
        %v4477 = vcombine.high %v4381, %v4381
        %v4479 = vunpack.c.l.s4 1983009808
        %v4480 = vunpack.c.0.s8 %v4479
        %v4481 = vlaneseq
        %v4482 = vshrl.u32 %v4481, 7
        %v4483 = vsub.s32 %v4480, %v4482
        %v4484 = vrot.slane %v4381, %v4483
        %v4486 = vunpack.c.l.s4 1983009808
        %v4487 = vunpack.c.0.s8 %v4486
        %v4488 = vlaneseq
        %v4489 = vshrl.u32 %v4488, 7
        %v4490 = vsub.s32 %v4487, %v4489
        %v4491 = vrot.slane %v4477, %v4490
        %v4492 = vcombine.high %v4484, %v4484
        %v4493 = vcombine.high %v4491, %v4491
        %v4494 = vcombine.high %v4382, %v4382
        %v4496 = vunpack.c.l.s4 1983009808
        %v4497 = vunpack.c.0.s8 %v4496
        %v4498 = vlaneseq
        %v4499 = vshrl.u32 %v4498, 7
        %v4500 = vsub.s32 %v4497, %v4499
        %v4501 = vrot.slane %v4382, %v4500
        %v4503 = vunpack.c.l.s4 1983009808
        %v4504 = vunpack.c.0.s8 %v4503
        %v4505 = vlaneseq
        %v4506 = vshrl.u32 %v4505, 7
        %v4507 = vsub.s32 %v4504, %v4506
        %v4508 = vrot.slane %v4494, %v4507
        %v4509 = vcombine.high %v4501, %v4501
        %v4510 = vcombine.high %v4508, %v4508
        %v4511 = vcombine.high %v4383, %v4383
        %v4513 = vunpack.c.l.s4 1983009808
        %v4514 = vunpack.c.0.s8 %v4513
        %v4515 = vlaneseq
        %v4516 = vshrl.u32 %v4515, 7
        %v4517 = vsub.s32 %v4514, %v4516
        %v4518 = vrot.slane %v4383, %v4517
        %v4520 = vunpack.c.l.s4 1983009808
        %v4521 = vunpack.c.0.s8 %v4520
        %v4522 = vlaneseq
        %v4523 = vshrl.u32 %v4522, 7
        %v4524 = vsub.s32 %v4521, %v4523
        %v4525 = vrot.slane %v4511, %v4524
        %v4526 = vcombine.high %v4518, %v4518
        %v4527 = vcombine.high %v4525, %v4525
        %v4560 = vrot.slane %v4399, 7
        %v4561 = vrot.slane %v4560, 2
        %v4562 = vrot.slane %v4407, 7
        %v4563 = vrot.slane %v4562, 2
        %v4564 = vrot.slane %v4406, 7
        %v4565 = vrot.slane %v4564, 2
        %v4566 = vrot.slane %v4408, 7
        %v4567 = vrot.slane %v4566, 2
        %v4568 = vrot.slane %v4416, 7
        %v4569 = vrot.slane %v4568, 2
        %v4570 = vrot.slane %v4424, 7
        %v4571 = vrot.slane %v4570, 2
        %v4572 = vrot.slane %v4423, 7
        %v4573 = vrot.slane %v4572, 2
        %v4574 = vrot.slane %v4425, 7
        %v4575 = vrot.slane %v4574, 2
        %v4576 = vrot.slane %v4433, 7
        %v4577 = vrot.slane %v4576, 2
        %v4578 = vrot.slane %v4441, 7
        %v4579 = vrot.slane %v4578, 2
        %v4580 = vrot.slane %v4440, 7
        %v4581 = vrot.slane %v4580, 2
        %v4582 = vrot.slane %v4442, 7
        %v4583 = vrot.slane %v4582, 2
        %v4584 = vrot.slane %v4450, 7
        %v4585 = vrot.slane %v4584, 2
        %v4586 = vrot.slane %v4458, 7
        %v4587 = vrot.slane %v4586, 2
        %v4588 = vrot.slane %v4457, 7
        %v4589 = vrot.slane %v4588, 2
        %v4590 = vrot.slane %v4459, 7
        %v4591 = vrot.slane %v4590, 2
        %v4592 = vrot.slane %v4467, 7
        %v4593 = vrot.slane %v4592, 2
        %v4594 = vrot.slane %v4475, 7
        %v4595 = vrot.slane %v4594, 2
        %v4596 = vrot.slane %v4474, 7
        %v4597 = vrot.slane %v4596, 2
        %v4598 = vrot.slane %v4476, 7
        %v4599 = vrot.slane %v4598, 2
        %v4600 = vrot.slane %v4484, 7
        %v4601 = vrot.slane %v4600, 2
        %v4602 = vrot.slane %v4492, 7
        %v4603 = vrot.slane %v4602, 2
        %v4604 = vrot.slane %v4491, 7
        %v4605 = vrot.slane %v4604, 2
        %v4606 = vrot.slane %v4493, 7
        %v4607 = vrot.slane %v4606, 2
        %v4608 = vrot.slane %v4501, 7
        %v4609 = vrot.slane %v4608, 2
        %v4610 = vrot.slane %v4509, 7
        %v4611 = vrot.slane %v4610, 2
        %v4612 = vrot.slane %v4508, 7
        %v4613 = vrot.slane %v4612, 2
        %v4614 = vrot.slane %v4510, 7
        %v4615 = vrot.slane %v4614, 2
        %v4616 = vrot.slane %v4518, 7
        %v4617 = vrot.slane %v4616, 2
        %v4618 = vrot.slane %v4526, 7
        %v4619 = vrot.slane %v4618, 2
        %v4620 = vrot.slane %v4525, 7
        %v4621 = vrot.slane %v4620, 2
        %v4622 = vrot.slane %v4527, 7
        %v4623 = vrot.slane %v4622, 2
        %v4656 = vmax.f32 %v4399, %v4561
        %v4657 = vmax.f32 %v4407, %v4563
        %v4658 = vmax.f32 %v4406, %v4565
        %v4659 = vmax.f32 %v4408, %v4567
        %v4660 = vmax.f32 %v4416, %v4569
        %v4661 = vmax.f32 %v4424, %v4571
        %v4662 = vmax.f32 %v4423, %v4573
        %v4663 = vmax.f32 %v4425, %v4575
        %v4664 = vmax.f32 %v4433, %v4577
        %v4665 = vmax.f32 %v4441, %v4579
        %v4666 = vmax.f32 %v4440, %v4581
        %v4667 = vmax.f32 %v4442, %v4583
        %v4668 = vmax.f32 %v4450, %v4585
        %v4669 = vmax.f32 %v4458, %v4587
        %v4670 = vmax.f32 %v4457, %v4589
        %v4671 = vmax.f32 %v4459, %v4591
        %v4672 = vmax.f32 %v4467, %v4593
        %v4673 = vmax.f32 %v4475, %v4595
        %v4674 = vmax.f32 %v4474, %v4597
        %v4675 = vmax.f32 %v4476, %v4599
        %v4676 = vmax.f32 %v4484, %v4601
        %v4677 = vmax.f32 %v4492, %v4603
        %v4678 = vmax.f32 %v4491, %v4605
        %v4679 = vmax.f32 %v4493, %v4607
        %v4680 = vmax.f32 %v4501, %v4609
        %v4681 = vmax.f32 %v4509, %v4611
        %v4682 = vmax.f32 %v4508, %v4613
        %v4683 = vmax.f32 %v4510, %v4615
        %v4684 = vmax.f32 %v4518, %v4617
        %v4685 = vmax.f32 %v4526, %v4619
        %v4686 = vmax.f32 %v4525, %v4621
        %v4687 = vmax.f32 %v4527, %v4623
        %v4688 = vmax.f32 %v4656, %v4660
        %v4689 = vmax.f32 %v4657, %v4661
        %v4690 = vmax.f32 %v4658, %v4662
        %v4691 = vmax.f32 %v4659, %v4663
        %v4692 = vmax.f32 %v4664, %v4668
        %v4693 = vmax.f32 %v4665, %v4669
        %v4694 = vmax.f32 %v4666, %v4670
        %v4695 = vmax.f32 %v4667, %v4671
        %v4696 = vmax.f32 %v4672, %v4676
        %v4697 = vmax.f32 %v4673, %v4677
        %v4698 = vmax.f32 %v4674, %v4678
        %v4699 = vmax.f32 %v4675, %v4679
        %v4700 = vmax.f32 %v4680, %v4684
        %v4701 = vmax.f32 %v4681, %v4685
        %v4702 = vmax.f32 %v4682, %v4686
        %v4703 = vmax.f32 %v4683, %v4687
        %v4704 = vlaneseq
        %vm4705 = vcmp.ge.s32.totalorder %v4704, 0
        %vm4706 = vcmp.lt.s32.totalorder %v4704, 32
        %vm4707 = vmand %vm4705, %vm4706
        %4708 = vst.msk [vmem:[#allocation6] sm:$0x1] %vm4707, %v4688
        %v4711 = vunpack.c.l.s4 1966171168
        %v4712 = vunpack.c.0.s8 %v4711
        %v4713 = vlaneseq
        %v4714 = vshrl.u32 %v4713, 7
        %v4715 = vsub.s32 %v4712, %v4714
        %v4716 = vrot.slane %v4689, %v4715
        %4717 = vrot.lane.b32.xlu0 %v4716, 32
        %v4718 = vpop.permute.xlu0 %4717
        %vm4720 = vcmp.ge.s32.totalorder %v4704, 32
        %vm4721 = vcmp.lt.s32.totalorder %v4704, 64
        %vm4722 = vmand %vm4720, %vm4721
        %4723 = vst.msk [vmem:[#allocation6] sm:$0x1] %vm4722, %v4718
        %v4726 = vunpack.c.l.s4 1966171168
        %v4727 = vunpack.c.0.s8 %v4726
        %v4728 = vlaneseq
        %v4729 = vshrl.u32 %v4728, 7
        %v4730 = vsub.s32 %v4727, %v4729
        %v4731 = vrot.slane %v4690, %v4730
        %4732 = vrot.lane.b32.xlu0 %v4731, 64
        %v4733 = vpop.permute.xlu0 %4732
        %vm4735 = vcmp.ge.s32.totalorder %v4704, 64
        %vm4736 = vcmp.lt.s32.totalorder %v4704, 96
        %vm4737 = vmand %vm4735, %vm4736
        %4738 = vst.msk [vmem:[#allocation6] sm:$0x1] %vm4737, %v4733
        %v4741 = vunpack.c.l.s4 1966171168
        %v4742 = vunpack.c.0.s8 %v4741
        %v4743 = vlaneseq
        %v4744 = vshrl.u32 %v4743, 7
        %v4745 = vsub.s32 %v4742, %v4744
        %v4746 = vrot.slane %v4691, %v4745
        %4747 = vrot.lane.b32.xlu0 %v4746, 96
        %v4748 = vpop.permute.xlu0 %4747
        %vm4750 = vcmp.ge.s32.totalorder %v4704, 96
        %vm4751 = vcmp.lt.s32.totalorder %v4704, 128
        %vm4752 = vmand %vm4750, %vm4751
        %4753 = vst.msk [vmem:[#allocation6] sm:$0x1] %vm4752, %v4748
        %4754 = vst.msk [vmem:[#allocation6 + $0x1] sm:$0x1] %vm4707, %v4692
        %v4757 = vunpack.c.l.s4 1966171168
        %v4758 = vunpack.c.0.s8 %v4757
        %v4759 = vlaneseq
        %v4760 = vshrl.u32 %v4759, 7
        %v4761 = vsub.s32 %v4758, %v4760
        %v4762 = vrot.slane %v4693, %v4761
        %4763 = vrot.lane.b32.xlu0 %v4762, 32
        %v4764 = vpop.permute.xlu0 %4763
        %4766 = vst.msk [vmem:[#allocation6 + $0x1] sm:$0x1] %vm4722, %v4764
        %v4769 = vunpack.c.l.s4 1966171168
        %v4770 = vunpack.c.0.s8 %v4769
        %v4771 = vlaneseq
        %v4772 = vshrl.u32 %v4771, 7
        %v4773 = vsub.s32 %v4770, %v4772
        %v4774 = vrot.slane %v4694, %v4773
        %4775 = vrot.lane.b32.xlu0 %v4774, 64
        %v4776 = vpop.permute.xlu0 %4775
        %4778 = vst.msk [vmem:[#allocation6 + $0x1] sm:$0x1] %vm4737, %v4776
        %v4781 = vunpack.c.l.s4 1966171168
        %v4782 = vunpack.c.0.s8 %v4781
        %v4783 = vlaneseq
        %v4784 = vshrl.u32 %v4783, 7
        %v4785 = vsub.s32 %v4782, %v4784
        %v4786 = vrot.slane %v4695, %v4785
        %4787 = vrot.lane.b32.xlu0 %v4786, 96
        %v4788 = vpop.permute.xlu0 %4787
        %4790 = vst.msk [vmem:[#allocation6 + $0x1] sm:$0x1] %vm4752, %v4788
        %4791 = vst.msk [vmem:[#allocation6 + $0x2] sm:$0x1] %vm4707, %v4696
        %v4794 = vunpack.c.l.s4 1966171168
        %v4795 = vunpack.c.0.s8 %v4794
        %v4796 = vlaneseq
        %v4797 = vshrl.u32 %v4796, 7
        %v4798 = vsub.s32 %v4795, %v4797
        %v4799 = vrot.slane %v4697, %v4798
        %4800 = vrot.lane.b32.xlu0 %v4799, 32
        %v4801 = vpop.permute.xlu0 %4800
        %4803 = vst.msk [vmem:[#allocation6 + $0x2] sm:$0x1] %vm4722, %v4801
        %v4806 = vunpack.c.l.s4 1966171168
        %v4807 = vunpack.c.0.s8 %v4806
        %v4808 = vlaneseq
        %v4809 = vshrl.u32 %v4808, 7
        %v4810 = vsub.s32 %v4807, %v4809
        %v4811 = vrot.slane %v4698, %v4810
        %4812 = vrot.lane.b32.xlu0 %v4811, 64
        %v4813 = vpop.permute.xlu0 %4812
        %4815 = vst.msk [vmem:[#allocation6 + $0x2] sm:$0x1] %vm4737, %v4813
        %v4818 = vunpack.c.l.s4 1966171168
        %v4819 = vunpack.c.0.s8 %v4818
        %v4820 = vlaneseq
        %v4821 = vshrl.u32 %v4820, 7
        %v4822 = vsub.s32 %v4819, %v4821
        %v4823 = vrot.slane %v4699, %v4822
        %4824 = vrot.lane.b32.xlu0 %v4823, 96
        %v4825 = vpop.permute.xlu0 %4824
        %4827 = vst.msk [vmem:[#allocation6 + $0x2] sm:$0x1] %vm4752, %v4825
        %4828 = vst.msk [vmem:[#allocation6 + $0x3] sm:$0x1] %vm4707, %v4700
        %v4831 = vunpack.c.l.s4 1966171168
        %v4832 = vunpack.c.0.s8 %v4831
        %v4833 = vlaneseq
        %v4834 = vshrl.u32 %v4833, 7
        %v4835 = vsub.s32 %v4832, %v4834
        %v4836 = vrot.slane %v4701, %v4835
        %4837 = vrot.lane.b32.xlu0 %v4836, 32
        %v4838 = vpop.permute.xlu0 %4837
        %4840 = vst.msk [vmem:[#allocation6 + $0x3] sm:$0x1] %vm4722, %v4838
        %v4843 = vunpack.c.l.s4 1966171168
        %v4844 = vunpack.c.0.s8 %v4843
        %v4845 = vlaneseq
        %v4846 = vshrl.u32 %v4845, 7
        %v4847 = vsub.s32 %v4844, %v4846
        %v4848 = vrot.slane %v4702, %v4847
        %4849 = vrot.lane.b32.xlu0 %v4848, 64
        %v4850 = vpop.permute.xlu0 %4849
        %4852 = vst.msk [vmem:[#allocation6 + $0x3] sm:$0x1] %vm4737, %v4850
        %v4855 = vunpack.c.l.s4 1966171168
        %v4856 = vunpack.c.0.s8 %v4855
        %v4857 = vlaneseq
        %v4858 = vshrl.u32 %v4857, 7
        %v4859 = vsub.s32 %v4856, %v4858
        %v4860 = vrot.slane %v4703, %v4859
        %4861 = vrot.lane.b32.xlu0 %v4860, 96
        %v4862 = vpop.permute.xlu0 %4861
        %4864 = vst.msk [vmem:[#allocation6 + $0x3] sm:$0x1] %vm4752, %v4862
        %v4865 = vld [vmem:[#allocation6] sm:$0xf]
        %v4867 = vlaneseq
        %v4868 = vshrl.u32 %v4867, 7
        %v4869 = vsub.s32 0, %v4868
        %v4870 = vrot.slane %v4865, %v4869
        %v4871 = vlaneseq
        %v4872 = vshrl.u32 %v4871, 7
        %v4873 = vsub.s32 1, %v4872
        %v4874 = vrot.slane %v4865, %v4873
        %v4875 = vlaneseq
        %v4876 = vshrl.u32 %v4875, 7
        %v4877 = vsub.s32 2, %v4876
        %v4878 = vrot.slane %v4865, %v4877
        %v4879 = vlaneseq
        %v4880 = vshrl.u32 %v4879, 7
        %v4881 = vsub.s32 3, %v4880
        %v4882 = vrot.slane %v4865, %v4881
        %v4887 = vpack.c.bf16 %v4870, %v4870
        %v4888 = vpack.c.bf16 %v4874, %v4874
        %v4889 = vpack.c.bf16 %v4878, %v4878
        %v4890 = vpack.c.bf16 %v4882, %v4882
        %v4891 = vld [vmem:[#allocation7] sm:$0xff]
        %v4892 = vld [vmem:[#allocation7 + $0x8] sm:$0xff]
        %v4893 = vld [vmem:[#allocation7 + $0x10] sm:$0xff]
        %v4894 = vld [vmem:[#allocation7 + $0x18] sm:$0xff]
        %v4895 = vld [vmem:[#allocation7 + $0x20] sm:$0xff]
        %v4896 = vld [vmem:[#allocation7 + $0x28] sm:$0xff]
        %v4897 = vld [vmem:[#allocation7 + $0x30] sm:$0xff]
        %v4898 = vld [vmem:[#allocation7 + $0x38] sm:$0xff]
        %v4899 = vld [vmem:[#allocation7 + $0x40] sm:$0xff]
        %v4900 = vld [vmem:[#allocation7 + $0x48] sm:$0xff]
        %v4901 = vld [vmem:[#allocation7 + $0x50] sm:$0xff]
        %v4902 = vld [vmem:[#allocation7 + $0x58] sm:$0xff]
        %v4903 = vld [vmem:[#allocation7 + $0x60] sm:$0xff]
        %v4904 = vld [vmem:[#allocation7 + $0x68] sm:$0xff]
        %v4905 = vld [vmem:[#allocation7 + $0x70] sm:$0xff]
        %v4906 = vld [vmem:[#allocation7 + $0x78] sm:$0xff]
        %v4907 = vld [vmem:[#allocation7 + $0x80] sm:$0xff]
        %v4908 = vld [vmem:[#allocation7 + $0x88] sm:$0xff]
        %v4909 = vld [vmem:[#allocation7 + $0x90] sm:$0xff]
        %v4910 = vld [vmem:[#allocation7 + $0x98] sm:$0xff]
        %v4911 = vld [vmem:[#allocation7 + $0xa0] sm:$0xff]
        %v4912 = vld [vmem:[#allocation7 + $0xa8] sm:$0xff]
        %v4913 = vld [vmem:[#allocation7 + $0xb0] sm:$0xff]
        %v4914 = vld [vmem:[#allocation7 + $0xb8] sm:$0xff]
        %v4915 = vld [vmem:[#allocation7 + $0xc0] sm:$0xff]
        %v4916 = vld [vmem:[#allocation7 + $0xc8] sm:$0xff]
        %v4917 = vld [vmem:[#allocation7 + $0xd0] sm:$0xff]
        %v4918 = vld [vmem:[#allocation7 + $0xd8] sm:$0xff]
        %v4919 = vld [vmem:[#allocation7 + $0xe0] sm:$0xff]
        %v4920 = vld [vmem:[#allocation7 + $0xe8] sm:$0xff]
        %v4921 = vld [vmem:[#allocation7 + $0xf0] sm:$0xff]
        %v4922 = vld [vmem:[#allocation7 + $0xf8] sm:$0xff]
        %v4923 = vld [vmem:[#allocation7 + $0x100] sm:$0xff]
        %v4924 = vld [vmem:[#allocation7 + $0x108] sm:$0xff]
        %v4925 = vld [vmem:[#allocation7 + $0x110] sm:$0xff]
        %v4926 = vld [vmem:[#allocation7 + $0x118] sm:$0xff]
        %v4927 = vld [vmem:[#allocation7 + $0x120] sm:$0xff]
        %v4928 = vld [vmem:[#allocation7 + $0x128] sm:$0xff]
        %v4929 = vld [vmem:[#allocation7 + $0x130] sm:$0xff]
        %v4930 = vld [vmem:[#allocation7 + $0x138] sm:$0xff]
        %v4931 = vld [vmem:[#allocation7 + $0x140] sm:$0xff]
        %v4932 = vld [vmem:[#allocation7 + $0x148] sm:$0xff]
        %v4933 = vld [vmem:[#allocation7 + $0x150] sm:$0xff]
        %v4934 = vld [vmem:[#allocation7 + $0x158] sm:$0xff]
        %v4935 = vld [vmem:[#allocation7 + $0x160] sm:$0xff]
        %v4936 = vld [vmem:[#allocation7 + $0x168] sm:$0xff]
        %v4937 = vld [vmem:[#allocation7 + $0x170] sm:$0xff]
        %v4938 = vld [vmem:[#allocation7 + $0x178] sm:$0xff]
        %v4939 = vld [vmem:[#allocation7 + $0x180] sm:$0xff]
        %v4940 = vld [vmem:[#allocation7 + $0x188] sm:$0xff]
        %v4941 = vld [vmem:[#allocation7 + $0x190] sm:$0xff]
        %v4942 = vld [vmem:[#allocation7 + $0x198] sm:$0xff]
        %v4943 = vld [vmem:[#allocation7 + $0x1a0] sm:$0xff]
        %v4944 = vld [vmem:[#allocation7 + $0x1a8] sm:$0xff]
        %v4945 = vld [vmem:[#allocation7 + $0x1b0] sm:$0xff]
        %v4946 = vld [vmem:[#allocation7 + $0x1b8] sm:$0xff]
        %v4947 = vld [vmem:[#allocation7 + $0x1c0] sm:$0xff]
        %v4948 = vld [vmem:[#allocation7 + $0x1c8] sm:$0xff]
        %v4949 = vld [vmem:[#allocation7 + $0x1d0] sm:$0xff]
        %v4950 = vld [vmem:[#allocation7 + $0x1d8] sm:$0xff]
        %v4951 = vld [vmem:[#allocation7 + $0x1e0] sm:$0xff]
        %v4952 = vld [vmem:[#allocation7 + $0x1e8] sm:$0xff]
        %v4953 = vld [vmem:[#allocation7 + $0x1f0] sm:$0xff]
        %v4954 = vld [vmem:[#allocation7 + $0x1f8] sm:$0xff]
        %v4955 = vld [vmem:[#allocation7 + $0x200] sm:$0xff]
        %v4956 = vld [vmem:[#allocation7 + $0x208] sm:$0xff]
        %v4957 = vld [vmem:[#allocation7 + $0x210] sm:$0xff]
        %v4958 = vld [vmem:[#allocation7 + $0x218] sm:$0xff]
        %v4959 = vld [vmem:[#allocation7 + $0x220] sm:$0xff]
        %v4960 = vld [vmem:[#allocation7 + $0x228] sm:$0xff]
        %v4961 = vld [vmem:[#allocation7 + $0x230] sm:$0xff]
        %v4962 = vld [vmem:[#allocation7 + $0x238] sm:$0xff]
        %v4963 = vld [vmem:[#allocation7 + $0x240] sm:$0xff]
        %v4964 = vld [vmem:[#allocation7 + $0x248] sm:$0xff]
        %v4965 = vld [vmem:[#allocation7 + $0x250] sm:$0xff]
        %v4966 = vld [vmem:[#allocation7 + $0x258] sm:$0xff]
        %v4967 = vld [vmem:[#allocation7 + $0x260] sm:$0xff]
        %v4968 = vld [vmem:[#allocation7 + $0x268] sm:$0xff]
        %v4969 = vld [vmem:[#allocation7 + $0x270] sm:$0xff]
        %v4970 = vld [vmem:[#allocation7 + $0x278] sm:$0xff]
        %v4971 = vld [vmem:[#allocation7 + $0x280] sm:$0xff]
        %v4972 = vld [vmem:[#allocation7 + $0x288] sm:$0xff]
        %v4973 = vld [vmem:[#allocation7 + $0x290] sm:$0xff]
        %v4974 = vld [vmem:[#allocation7 + $0x298] sm:$0xff]
        %v4975 = vld [vmem:[#allocation7 + $0x2a0] sm:$0xff]
        %v4976 = vld [vmem:[#allocation7 + $0x2a8] sm:$0xff]
        %v4977 = vld [vmem:[#allocation7 + $0x2b0] sm:$0xff]
        %v4978 = vld [vmem:[#allocation7 + $0x2b8] sm:$0xff]
        %v4979 = vld [vmem:[#allocation7 + $0x2c0] sm:$0xff]
        %v4980 = vld [vmem:[#allocation7 + $0x2c8] sm:$0xff]
        %v4981 = vld [vmem:[#allocation7 + $0x2d0] sm:$0xff]
        %v4982 = vld [vmem:[#allocation7 + $0x2d8] sm:$0xff]
        %v4983 = vld [vmem:[#allocation7 + $0x2e0] sm:$0xff]
        %v4984 = vld [vmem:[#allocation7 + $0x2e8] sm:$0xff]
        %v4985 = vld [vmem:[#allocation7 + $0x2f0] sm:$0xff]
        %v4986 = vld [vmem:[#allocation7 + $0x2f8] sm:$0xff]
        %v4987 = vld [vmem:[#allocation7 + $0x300] sm:$0xff]
        %v4988 = vld [vmem:[#allocation7 + $0x308] sm:$0xff]
        %v4989 = vld [vmem:[#allocation7 + $0x310] sm:$0xff]
        %v4990 = vld [vmem:[#allocation7 + $0x318] sm:$0xff]
        %v4991 = vld [vmem:[#allocation7 + $0x320] sm:$0xff]
        %v4992 = vld [vmem:[#allocation7 + $0x328] sm:$0xff]
        %v4993 = vld [vmem:[#allocation7 + $0x330] sm:$0xff]
        %v4994 = vld [vmem:[#allocation7 + $0x338] sm:$0xff]
        %v4995 = vld [vmem:[#allocation7 + $0x340] sm:$0xff]
        %v4996 = vld [vmem:[#allocation7 + $0x348] sm:$0xff]
        %v4997 = vld [vmem:[#allocation7 + $0x350] sm:$0xff]
        %v4998 = vld [vmem:[#allocation7 + $0x358] sm:$0xff]
        %v4999 = vld [vmem:[#allocation7 + $0x360] sm:$0xff]
        %v5000 = vld [vmem:[#allocation7 + $0x368] sm:$0xff]
        %v5001 = vld [vmem:[#allocation7 + $0x370] sm:$0xff]
        %v5002 = vld [vmem:[#allocation7 + $0x378] sm:$0xff]
        %v5003 = vld [vmem:[#allocation7 + $0x380] sm:$0xff]
        %v5004 = vld [vmem:[#allocation7 + $0x388] sm:$0xff]
        %v5005 = vld [vmem:[#allocation7 + $0x390] sm:$0xff]
        %v5006 = vld [vmem:[#allocation7 + $0x398] sm:$0xff]
        %v5007 = vld [vmem:[#allocation7 + $0x3a0] sm:$0xff]
        %v5008 = vld [vmem:[#allocation7 + $0x3a8] sm:$0xff]
        %v5009 = vld [vmem:[#allocation7 + $0x3b0] sm:$0xff]
        %v5010 = vld [vmem:[#allocation7 + $0x3b8] sm:$0xff]
        %v5011 = vld [vmem:[#allocation7 + $0x3c0] sm:$0xff]
        %v5012 = vld [vmem:[#allocation7 + $0x3c8] sm:$0xff]
        %v5013 = vld [vmem:[#allocation7 + $0x3d0] sm:$0xff]
        %v5014 = vld [vmem:[#allocation7 + $0x3d8] sm:$0xff]
        %v5015 = vld [vmem:[#allocation7 + $0x3e0] sm:$0xff]
        %v5016 = vld [vmem:[#allocation7 + $0x3e8] sm:$0xff]
        %v5017 = vld [vmem:[#allocation7 + $0x3f0] sm:$0xff]
        %v5018 = vld [vmem:[#allocation7 + $0x3f8] sm:$0xff]
        %v5019 = vld [vmem:[%s6] sm:$0xf]
        %v5148 = vunpack.c.l.b16 %v4891
        %v5149 = vunpack.c.h.b16 %v4891
        %v5150 = vunpack.c.l.b16 %v4892
        %v5151 = vunpack.c.h.b16 %v4892
        %v5152 = vunpack.c.l.b16 %v4893
        %v5153 = vunpack.c.h.b16 %v4893
        %v5154 = vunpack.c.l.b16 %v4894
        %v5155 = vunpack.c.h.b16 %v4894
        %v5156 = vunpack.c.l.b16 %v4895
        %v5157 = vunpack.c.h.b16 %v4895
        %v5158 = vunpack.c.l.b16 %v4896
        %v5159 = vunpack.c.h.b16 %v4896
        %v5160 = vunpack.c.l.b16 %v4897
        %v5161 = vunpack.c.h.b16 %v4897
        %v5162 = vunpack.c.l.b16 %v4898
        %v5163 = vunpack.c.h.b16 %v4898
        %v5164 = vunpack.c.l.b16 %v4899
        %v5165 = vunpack.c.h.b16 %v4899
        %v5166 = vunpack.c.l.b16 %v4900
        %v5167 = vunpack.c.h.b16 %v4900
        %v5168 = vunpack.c.l.b16 %v4901
        %v5169 = vunpack.c.h.b16 %v4901
        %v5170 = vunpack.c.l.b16 %v4902
        %v5171 = vunpack.c.h.b16 %v4902
        %v5172 = vunpack.c.l.b16 %v4903
        %v5173 = vunpack.c.h.b16 %v4903
        %v5174 = vunpack.c.l.b16 %v4904
        %v5175 = vunpack.c.h.b16 %v4904
        %v5176 = vunpack.c.l.b16 %v4905
        %v5177 = vunpack.c.h.b16 %v4905
        %v5178 = vunpack.c.l.b16 %v4906
        %v5179 = vunpack.c.h.b16 %v4906
        %v5180 = vunpack.c.l.b16 %v4907
        %v5181 = vunpack.c.h.b16 %v4907
        %v5182 = vunpack.c.l.b16 %v4908
        %v5183 = vunpack.c.h.b16 %v4908
        %v5184 = vunpack.c.l.b16 %v4909
        %v5185 = vunpack.c.h.b16 %v4909
        %v5186 = vunpack.c.l.b16 %v4910
        %v5187 = vunpack.c.h.b16 %v4910
        %v5188 = vunpack.c.l.b16 %v4911
        %v5189 = vunpack.c.h.b16 %v4911
        %v5190 = vunpack.c.l.b16 %v4912
        %v5191 = vunpack.c.h.b16 %v4912
        %v5192 = vunpack.c.l.b16 %v4913
        %v5193 = vunpack.c.h.b16 %v4913
        %v5194 = vunpack.c.l.b16 %v4914
        %v5195 = vunpack.c.h.b16 %v4914
        %v5196 = vunpack.c.l.b16 %v4915
        %v5197 = vunpack.c.h.b16 %v4915
        %v5198 = vunpack.c.l.b16 %v4916
        %v5199 = vunpack.c.h.b16 %v4916
        %v5200 = vunpack.c.l.b16 %v4917
        %v5201 = vunpack.c.h.b16 %v4917
        %v5202 = vunpack.c.l.b16 %v4918
        %v5203 = vunpack.c.h.b16 %v4918
        %v5204 = vunpack.c.l.b16 %v4919
        %v5205 = vunpack.c.h.b16 %v4919
        %v5206 = vunpack.c.l.b16 %v4920
        %v5207 = vunpack.c.h.b16 %v4920
        %v5208 = vunpack.c.l.b16 %v4921
        %v5209 = vunpack.c.h.b16 %v4921
        %v5210 = vunpack.c.l.b16 %v4922
        %v5211 = vunpack.c.h.b16 %v4922
        %v5212 = vunpack.c.l.b16 %v4923
        %v5213 = vunpack.c.h.b16 %v4923
        %v5214 = vunpack.c.l.b16 %v4924
        %v5215 = vunpack.c.h.b16 %v4924
        %v5216 = vunpack.c.l.b16 %v4925
        %v5217 = vunpack.c.h.b16 %v4925
        %v5218 = vunpack.c.l.b16 %v4926
        %v5219 = vunpack.c.h.b16 %v4926
        %v5220 = vunpack.c.l.b16 %v4927
        %v5221 = vunpack.c.h.b16 %v4927
        %v5222 = vunpack.c.l.b16 %v4928
        %v5223 = vunpack.c.h.b16 %v4928
        %v5224 = vunpack.c.l.b16 %v4929
        %v5225 = vunpack.c.h.b16 %v4929
        %v5226 = vunpack.c.l.b16 %v4930
        %v5227 = vunpack.c.h.b16 %v4930
        %v5228 = vunpack.c.l.b16 %v4931
        %v5229 = vunpack.c.h.b16 %v4931
        %v5230 = vunpack.c.l.b16 %v4932
        %v5231 = vunpack.c.h.b16 %v4932
        %v5232 = vunpack.c.l.b16 %v4933
        %v5233 = vunpack.c.h.b16 %v4933
        %v5234 = vunpack.c.l.b16 %v4934
        %v5235 = vunpack.c.h.b16 %v4934
        %v5236 = vunpack.c.l.b16 %v4935
        %v5237 = vunpack.c.h.b16 %v4935
        %v5238 = vunpack.c.l.b16 %v4936
        %v5239 = vunpack.c.h.b16 %v4936
        %v5240 = vunpack.c.l.b16 %v4937
        %v5241 = vunpack.c.h.b16 %v4937
        %v5242 = vunpack.c.l.b16 %v4938
        %v5243 = vunpack.c.h.b16 %v4938
        %v5244 = vunpack.c.l.b16 %v4939
        %v5245 = vunpack.c.h.b16 %v4939
        %v5246 = vunpack.c.l.b16 %v4940
        %v5247 = vunpack.c.h.b16 %v4940
        %v5248 = vunpack.c.l.b16 %v4941
        %v5249 = vunpack.c.h.b16 %v4941
        %v5250 = vunpack.c.l.b16 %v4942
        %v5251 = vunpack.c.h.b16 %v4942
        %v5252 = vunpack.c.l.b16 %v4943
        %v5253 = vunpack.c.h.b16 %v4943
        %v5254 = vunpack.c.l.b16 %v4944
        %v5255 = vunpack.c.h.b16 %v4944
        %v5256 = vunpack.c.l.b16 %v4945
        %v5257 = vunpack.c.h.b16 %v4945
        %v5258 = vunpack.c.l.b16 %v4946
        %v5259 = vunpack.c.h.b16 %v4946
        %v5260 = vunpack.c.l.b16 %v4947
        %v5261 = vunpack.c.h.b16 %v4947
        %v5262 = vunpack.c.l.b16 %v4948
        %v5263 = vunpack.c.h.b16 %v4948
        %v5264 = vunpack.c.l.b16 %v4949
        %v5265 = vunpack.c.h.b16 %v4949
        %v5266 = vunpack.c.l.b16 %v4950
        %v5267 = vunpack.c.h.b16 %v4950
        %v5268 = vunpack.c.l.b16 %v4951
        %v5269 = vunpack.c.h.b16 %v4951
        %v5270 = vunpack.c.l.b16 %v4952
        %v5271 = vunpack.c.h.b16 %v4952
        %v5272 = vunpack.c.l.b16 %v4953
        %v5273 = vunpack.c.h.b16 %v4953
        %v5274 = vunpack.c.l.b16 %v4954
        %v5275 = vunpack.c.h.b16 %v4954
        %v5276 = vunpack.c.l.b16 %v4955
        %v5277 = vunpack.c.h.b16 %v4955
        %v5278 = vunpack.c.l.b16 %v4956
        %v5279 = vunpack.c.h.b16 %v4956
        %v5280 = vunpack.c.l.b16 %v4957
        %v5281 = vunpack.c.h.b16 %v4957
        %v5282 = vunpack.c.l.b16 %v4958
        %v5283 = vunpack.c.h.b16 %v4958
        %v5284 = vunpack.c.l.b16 %v4959
        %v5285 = vunpack.c.h.b16 %v4959
        %v5286 = vunpack.c.l.b16 %v4960
        %v5287 = vunpack.c.h.b16 %v4960
        %v5288 = vunpack.c.l.b16 %v4961
        %v5289 = vunpack.c.h.b16 %v4961
        %v5290 = vunpack.c.l.b16 %v4962
        %v5291 = vunpack.c.h.b16 %v4962
        %v5292 = vunpack.c.l.b16 %v4963
        %v5293 = vunpack.c.h.b16 %v4963
        %v5294 = vunpack.c.l.b16 %v4964
        %v5295 = vunpack.c.h.b16 %v4964
        %v5296 = vunpack.c.l.b16 %v4965
        %v5297 = vunpack.c.h.b16 %v4965
        %v5298 = vunpack.c.l.b16 %v4966
        %v5299 = vunpack.c.h.b16 %v4966
        %v5300 = vunpack.c.l.b16 %v4967
        %v5301 = vunpack.c.h.b16 %v4967
        %v5302 = vunpack.c.l.b16 %v4968
        %v5303 = vunpack.c.h.b16 %v4968
        %v5304 = vunpack.c.l.b16 %v4969
        %v5305 = vunpack.c.h.b16 %v4969
        %v5306 = vunpack.c.l.b16 %v4970
        %v5307 = vunpack.c.h.b16 %v4970
        %v5308 = vunpack.c.l.b16 %v4971
        %v5309 = vunpack.c.h.b16 %v4971
        %v5310 = vunpack.c.l.b16 %v4972
        %v5311 = vunpack.c.h.b16 %v4972
        %v5312 = vunpack.c.l.b16 %v4973
        %v5313 = vunpack.c.h.b16 %v4973
        %v5314 = vunpack.c.l.b16 %v4974
        %v5315 = vunpack.c.h.b16 %v4974
        %v5316 = vunpack.c.l.b16 %v4975
        %v5317 = vunpack.c.h.b16 %v4975
        %v5318 = vunpack.c.l.b16 %v4976
        %v5319 = vunpack.c.h.b16 %v4976
        %v5320 = vunpack.c.l.b16 %v4977
        %v5321 = vunpack.c.h.b16 %v4977
        %v5322 = vunpack.c.l.b16 %v4978
        %v5323 = vunpack.c.h.b16 %v4978
        %v5324 = vunpack.c.l.b16 %v4979
        %v5325 = vunpack.c.h.b16 %v4979
        %v5326 = vunpack.c.l.b16 %v4980
        %v5327 = vunpack.c.h.b16 %v4980
        %v5328 = vunpack.c.l.b16 %v4981
        %v5329 = vunpack.c.h.b16 %v4981
        %v5330 = vunpack.c.l.b16 %v4982
        %v5331 = vunpack.c.h.b16 %v4982
        %v5332 = vunpack.c.l.b16 %v4983
        %v5333 = vunpack.c.h.b16 %v4983
        %v5334 = vunpack.c.l.b16 %v4984
        %v5335 = vunpack.c.h.b16 %v4984
        %v5336 = vunpack.c.l.b16 %v4985
        %v5337 = vunpack.c.h.b16 %v4985
        %v5338 = vunpack.c.l.b16 %v4986
        %v5339 = vunpack.c.h.b16 %v4986
        %v5340 = vunpack.c.l.b16 %v4987
        %v5341 = vunpack.c.h.b16 %v4987
        %v5342 = vunpack.c.l.b16 %v4988
        %v5343 = vunpack.c.h.b16 %v4988
        %v5344 = vunpack.c.l.b16 %v4989
        %v5345 = vunpack.c.h.b16 %v4989
        %v5346 = vunpack.c.l.b16 %v4990
        %v5347 = vunpack.c.h.b16 %v4990
        %v5348 = vunpack.c.l.b16 %v4991
        %v5349 = vunpack.c.h.b16 %v4991
        %v5350 = vunpack.c.l.b16 %v4992
        %v5351 = vunpack.c.h.b16 %v4992
        %v5352 = vunpack.c.l.b16 %v4993
        %v5353 = vunpack.c.h.b16 %v4993
        %v5354 = vunpack.c.l.b16 %v4994
        %v5355 = vunpack.c.h.b16 %v4994
        %v5356 = vunpack.c.l.b16 %v4995
        %v5357 = vunpack.c.h.b16 %v4995
        %v5358 = vunpack.c.l.b16 %v4996
        %v5359 = vunpack.c.h.b16 %v4996
        %v5360 = vunpack.c.l.b16 %v4997
        %v5361 = vunpack.c.h.b16 %v4997
        %v5362 = vunpack.c.l.b16 %v4998
        %v5363 = vunpack.c.h.b16 %v4998
        %v5364 = vunpack.c.l.b16 %v4999
        %v5365 = vunpack.c.h.b16 %v4999
        %v5366 = vunpack.c.l.b16 %v5000
        %v5367 = vunpack.c.h.b16 %v5000
        %v5368 = vunpack.c.l.b16 %v5001
        %v5369 = vunpack.c.h.b16 %v5001
        %v5370 = vunpack.c.l.b16 %v5002
        %v5371 = vunpack.c.h.b16 %v5002
        %v5372 = vunpack.c.l.b16 %v5003
        %v5373 = vunpack.c.h.b16 %v5003
        %v5374 = vunpack.c.l.b16 %v5004
        %v5375 = vunpack.c.h.b16 %v5004
        %v5376 = vunpack.c.l.b16 %v5005
        %v5377 = vunpack.c.h.b16 %v5005
        %v5378 = vunpack.c.l.b16 %v5006
        %v5379 = vunpack.c.h.b16 %v5006
        %v5380 = vunpack.c.l.b16 %v5007
        %v5381 = vunpack.c.h.b16 %v5007
        %v5382 = vunpack.c.l.b16 %v5008
        %v5383 = vunpack.c.h.b16 %v5008
        %v5384 = vunpack.c.l.b16 %v5009
        %v5385 = vunpack.c.h.b16 %v5009
        %v5386 = vunpack.c.l.b16 %v5010
        %v5387 = vunpack.c.h.b16 %v5010
        %v5388 = vunpack.c.l.b16 %v5011
        %v5389 = vunpack.c.h.b16 %v5011
        %v5390 = vunpack.c.l.b16 %v5012
        %v5391 = vunpack.c.h.b16 %v5012
        %v5392 = vunpack.c.l.b16 %v5013
        %v5393 = vunpack.c.h.b16 %v5013
        %v5394 = vunpack.c.l.b16 %v5014
        %v5395 = vunpack.c.h.b16 %v5014
        %v5396 = vunpack.c.l.b16 %v5015
        %v5397 = vunpack.c.h.b16 %v5015
        %v5398 = vunpack.c.l.b16 %v5016
        %v5399 = vunpack.c.h.b16 %v5016
        %v5400 = vunpack.c.l.b16 %v5017
        %v5401 = vunpack.c.h.b16 %v5017
        %v5402 = vunpack.c.l.b16 %v5018
        %v5403 = vunpack.c.h.b16 %v5018
        %v5404 = vpack.c.b16 %v5152, %v5148
        %v5405 = vpack.c.b16 %v5153, %v5149
        %v5406 = vpack.c.b16 %v5154, %v5150
        %v5407 = vpack.c.b16 %v5155, %v5151
        %v5408 = vpack.c.b16 %v5160, %v5156
        %v5409 = vpack.c.b16 %v5161, %v5157
        %v5410 = vpack.c.b16 %v5162, %v5158
        %v5411 = vpack.c.b16 %v5163, %v5159
        %v5412 = vpack.c.b16 %v5168, %v5164
        %v5413 = vpack.c.b16 %v5169, %v5165
        %v5414 = vpack.c.b16 %v5170, %v5166
        %v5415 = vpack.c.b16 %v5171, %v5167
        %v5416 = vpack.c.b16 %v5176, %v5172
        %v5417 = vpack.c.b16 %v5177, %v5173
        %v5418 = vpack.c.b16 %v5178, %v5174
        %v5419 = vpack.c.b16 %v5179, %v5175
        %v5420 = vpack.c.b16 %v5184, %v5180
        %v5421 = vpack.c.b16 %v5185, %v5181
        %v5422 = vpack.c.b16 %v5186, %v5182
        %v5423 = vpack.c.b16 %v5187, %v5183
        %v5424 = vpack.c.b16 %v5192, %v5188
        %v5425 = vpack.c.b16 %v5193, %v5189
        %v5426 = vpack.c.b16 %v5194, %v5190
        %v5427 = vpack.c.b16 %v5195, %v5191
        %v5428 = vpack.c.b16 %v5200, %v5196
        %v5429 = vpack.c.b16 %v5201, %v5197
        %v5430 = vpack.c.b16 %v5202, %v5198
        %v5431 = vpack.c.b16 %v5203, %v5199
        %v5432 = vpack.c.b16 %v5208, %v5204
        %v5433 = vpack.c.b16 %v5209, %v5205
        %v5434 = vpack.c.b16 %v5210, %v5206
        %v5435 = vpack.c.b16 %v5211, %v5207
        %v5436 = vpack.c.b16 %v5216, %v5212
        %v5437 = vpack.c.b16 %v5217, %v5213
        %v5438 = vpack.c.b16 %v5218, %v5214
        %v5439 = vpack.c.b16 %v5219, %v5215
        %v5440 = vpack.c.b16 %v5224, %v5220
        %v5441 = vpack.c.b16 %v5225, %v5221
        %v5442 = vpack.c.b16 %v5226, %v5222
        %v5443 = vpack.c.b16 %v5227, %v5223
        %v5444 = vpack.c.b16 %v5232, %v5228
        %v5445 = vpack.c.b16 %v5233, %v5229
        %v5446 = vpack.c.b16 %v5234, %v5230
        %v5447 = vpack.c.b16 %v5235, %v5231
        %v5448 = vpack.c.b16 %v5240, %v5236
        %v5449 = vpack.c.b16 %v5241, %v5237
        %v5450 = vpack.c.b16 %v5242, %v5238
        %v5451 = vpack.c.b16 %v5243, %v5239
        %v5452 = vpack.c.b16 %v5248, %v5244
        %v5453 = vpack.c.b16 %v5249, %v5245
        %v5454 = vpack.c.b16 %v5250, %v5246
        %v5455 = vpack.c.b16 %v5251, %v5247
        %v5456 = vpack.c.b16 %v5256, %v5252
        %v5457 = vpack.c.b16 %v5257, %v5253
        %v5458 = vpack.c.b16 %v5258, %v5254
        %v5459 = vpack.c.b16 %v5259, %v5255
        %v5460 = vpack.c.b16 %v5264, %v5260
        %v5461 = vpack.c.b16 %v5265, %v5261
        %v5462 = vpack.c.b16 %v5266, %v5262
        %v5463 = vpack.c.b16 %v5267, %v5263
        %v5464 = vpack.c.b16 %v5272, %v5268
        %v5465 = vpack.c.b16 %v5273, %v5269
        %v5466 = vpack.c.b16 %v5274, %v5270
        %v5467 = vpack.c.b16 %v5275, %v5271
        %v5468 = vpack.c.b16 %v5280, %v5276
        %v5469 = vpack.c.b16 %v5281, %v5277
        %v5470 = vpack.c.b16 %v5282, %v5278
        %v5471 = vpack.c.b16 %v5283, %v5279
        %v5472 = vpack.c.b16 %v5288, %v5284
        %v5473 = vpack.c.b16 %v5289, %v5285
        %v5474 = vpack.c.b16 %v5290, %v5286
        %v5475 = vpack.c.b16 %v5291, %v5287
        %v5476 = vpack.c.b16 %v5296, %v5292
        %v5477 = vpack.c.b16 %v5297, %v5293
        %v5478 = vpack.c.b16 %v5298, %v5294
        %v5479 = vpack.c.b16 %v5299, %v5295
        %v5480 = vpack.c.b16 %v5304, %v5300
        %v5481 = vpack.c.b16 %v5305, %v5301
        %v5482 = vpack.c.b16 %v5306, %v5302
        %v5483 = vpack.c.b16 %v5307, %v5303
        %v5484 = vpack.c.b16 %v5312, %v5308
        %v5485 = vpack.c.b16 %v5313, %v5309
        %v5486 = vpack.c.b16 %v5314, %v5310
        %v5487 = vpack.c.b16 %v5315, %v5311
        %v5488 = vpack.c.b16 %v5320, %v5316
        %v5489 = vpack.c.b16 %v5321, %v5317
        %v5490 = vpack.c.b16 %v5322, %v5318
        %v5491 = vpack.c.b16 %v5323, %v5319
        %v5492 = vpack.c.b16 %v5328, %v5324
        %v5493 = vpack.c.b16 %v5329, %v5325
        %v5494 = vpack.c.b16 %v5330, %v5326
        %v5495 = vpack.c.b16 %v5331, %v5327
        %v5496 = vpack.c.b16 %v5336, %v5332
        %v5497 = vpack.c.b16 %v5337, %v5333
        %v5498 = vpack.c.b16 %v5338, %v5334
        %v5499 = vpack.c.b16 %v5339, %v5335
        %v5500 = vpack.c.b16 %v5344, %v5340
        %v5501 = vpack.c.b16 %v5345, %v5341
        %v5502 = vpack.c.b16 %v5346, %v5342
        %v5503 = vpack.c.b16 %v5347, %v5343
        %v5504 = vpack.c.b16 %v5352, %v5348
        %v5505 = vpack.c.b16 %v5353, %v5349
        %v5506 = vpack.c.b16 %v5354, %v5350
        %v5507 = vpack.c.b16 %v5355, %v5351
        %v5508 = vpack.c.b16 %v5360, %v5356
        %v5509 = vpack.c.b16 %v5361, %v5357
        %v5510 = vpack.c.b16 %v5362, %v5358
        %v5511 = vpack.c.b16 %v5363, %v5359
        %v5512 = vpack.c.b16 %v5368, %v5364
        %v5513 = vpack.c.b16 %v5369, %v5365
        %v5514 = vpack.c.b16 %v5370, %v5366
        %v5515 = vpack.c.b16 %v5371, %v5367
        %v5516 = vpack.c.b16 %v5376, %v5372
        %v5517 = vpack.c.b16 %v5377, %v5373
        %v5518 = vpack.c.b16 %v5378, %v5374
        %v5519 = vpack.c.b16 %v5379, %v5375
        %v5520 = vpack.c.b16 %v5384, %v5380
        %v5521 = vpack.c.b16 %v5385, %v5381
        %v5522 = vpack.c.b16 %v5386, %v5382
        %v5523 = vpack.c.b16 %v5387, %v5383
        %v5524 = vpack.c.b16 %v5392, %v5388
        %v5525 = vpack.c.b16 %v5393, %v5389
        %v5526 = vpack.c.b16 %v5394, %v5390
        %v5527 = vpack.c.b16 %v5395, %v5391
        %v5528 = vpack.c.b16 %v5400, %v5396
        %v5529 = vpack.c.b16 %v5401, %v5397
        %v5530 = vpack.c.b16 %v5402, %v5398
        %v5531 = vpack.c.b16 %v5403, %v5399
        %v5661 = vlaneseq
        %v5662 = vshrl.u32 %v5661, 7
        %v5663 = vsub.s32 0, %v5662
        %v5664 = vrot.slane %v5019, %v5663
        %v5665 = vlaneseq
        %v5666 = vshrl.u32 %v5665, 7
        %v5667 = vsub.s32 1, %v5666
        %v5668 = vrot.slane %v5019, %v5667
        %v5669 = vlaneseq
        %v5670 = vshrl.u32 %v5669, 7
        %v5671 = vsub.s32 2, %v5670
        %v5672 = vrot.slane %v5019, %v5671
        %v5673 = vlaneseq
        %v5674 = vshrl.u32 %v5673, 7
        %v5675 = vsub.s32 3, %v5674
        %v5676 = vrot.slane %v5019, %v5675
        %5681 = vmatprep.subr.bf16.mxu0 %v5433
        %5682 = vmatpush1.bf16.msra.mxu0 %v5432
        %5683 = vmatprep.subr.bf16.mxu0 %v5429
        %5684 = vmatpush1.bf16.msra.mxu0 %v5428
        %5685 = vmatprep.subr.bf16.mxu0 %v5425
        %5686 = vmatpush1.bf16.msra.mxu0 %v5424
        %5687 = vmatprep.subr.bf16.mxu0 %v5421
        %5688 = vmatpush1.bf16.msra.mxu0 %v5420
        %5689 = vmatprep.subr.bf16.mxu0 %v5417
        %5690 = vmatpush1.bf16.msra.mxu0 %v5416
        %5691 = vmatprep.subr.bf16.mxu0 %v5413
        %5692 = vmatpush1.bf16.msra.mxu0 %v5412
        %5693 = vmatprep.subr.bf16.mxu0 %v5409
        %5694 = vmatpush1.bf16.msra.mxu0 %v5408
        %5695 = vmatprep.subr.bf16.mxu0 %v5405
        %5696 = vmatpush1.bf16.msra.mxu0 %v5404
        %5697 = vmatprep.subr.bf16.mxu0 %v5465
        %5698 = vmatpush2.bf16.msra.mxu0 %v5464
        %5699 = vmatprep.subr.bf16.mxu0 %v5461
        %5700 = vmatpush2.bf16.msra.mxu0 %v5460
        %5701 = vmatprep.subr.bf16.mxu0 %v5457
        %5702 = vmatpush2.bf16.msra.mxu0 %v5456
        %5703 = vmatprep.subr.bf16.mxu0 %v5453
        %5704 = vmatpush2.bf16.msra.mxu0 %v5452
        %5705 = vmatprep.subr.bf16.mxu0 %v5449
        %5706 = vmatpush2.bf16.msra.mxu0 %v5448
        %5707 = vmatprep.subr.bf16.mxu0 %v5445
        %5708 = vmatpush2.bf16.msra.mxu0 %v5444
        %5709 = vmatprep.subr.bf16.mxu0 %v5441
        %5710 = vmatpush2.bf16.msra.mxu0 %v5440
        %5711 = vmatprep.subr.bf16.mxu0 %v5437
        %5712 = vmatpush2.bf16.msra.mxu0 %v5436
        %5713 = vmatprep.mubr.bf16.mxu0 %v4888
        %5714 = vmatmul.mubr.bf16.gmra.mxu0 %v4887
        %v5715 = vpop.f32.mrf.mxu0
        %v5716 = vadd.f32 %v5664, %v5715
        %v5717 = vpop.f32.mrf.mxu0
        %v5718 = vadd.f32 %v5668, %v5717
        %v5719 = vpop.f32.mrf.mxu0
        %v5720 = vpop.f32.mrf.mxu0
        %5721 = vdwg.mxu0
        %5722 = vmatprep.subr.bf16.mxu0 %v5497
        %5723 = vmatpush1.bf16.msra.mxu0 %v5496
        %5724 = vmatprep.subr.bf16.mxu0 %v5493
        %5725 = vmatpush1.bf16.msra.mxu0 %v5492
        %5726 = vmatprep.subr.bf16.mxu0 %v5489
        %5727 = vmatpush1.bf16.msra.mxu0 %v5488
        %5728 = vmatprep.subr.bf16.mxu0 %v5485
        %5729 = vmatpush1.bf16.msra.mxu0 %v5484
        %5730 = vmatprep.subr.bf16.mxu0 %v5481
        %5731 = vmatpush1.bf16.msra.mxu0 %v5480
        %5732 = vmatprep.subr.bf16.mxu0 %v5477
        %5733 = vmatpush1.bf16.msra.mxu0 %v5476
        %5734 = vmatprep.subr.bf16.mxu0 %v5473
        %5735 = vmatpush1.bf16.msra.mxu0 %v5472
        %5736 = vmatprep.subr.bf16.mxu0 %v5469
        %5737 = vmatpush1.bf16.msra.mxu0 %v5468
        %5738 = vmatprep.subr.bf16.mxu0 %v5529
        %5739 = vmatpush2.bf16.msra.mxu0 %v5528
        %5740 = vmatprep.subr.bf16.mxu0 %v5525
        %5741 = vmatpush2.bf16.msra.mxu0 %v5524
        %5742 = vmatprep.subr.bf16.mxu0 %v5521
        %5743 = vmatpush2.bf16.msra.mxu0 %v5520
        %5744 = vmatprep.subr.bf16.mxu0 %v5517
        %5745 = vmatpush2.bf16.msra.mxu0 %v5516
        %5746 = vmatprep.subr.bf16.mxu0 %v5513
        %5747 = vmatpush2.bf16.msra.mxu0 %v5512
        %5748 = vmatprep.subr.bf16.mxu0 %v5509
        %5749 = vmatpush2.bf16.msra.mxu0 %v5508
        %5750 = vmatprep.subr.bf16.mxu0 %v5505
        %5751 = vmatpush2.bf16.msra.mxu0 %v5504
        %5752 = vmatprep.subr.bf16.mxu0 %v5501
        %5753 = vmatpush2.bf16.msra.mxu0 %v5500
        %5754 = vmatprep.mubr.bf16.mxu0 %v4890
        %5755 = vmatmul.mubr.bf16.gmra.mxu0 %v4889
        %v5756 = vpop.f32.mrf.mxu0
        %v5757 = vadd.f32 %v5716, %v5756
        %v5758 = vpop.f32.mrf.mxu0
        %v5759 = vadd.f32 %v5718, %v5758
        %v5760 = vpop.f32.mrf.mxu0
        %v5761 = vpop.f32.mrf.mxu0
        %5762 = vdwg.mxu0
        %5763 = vmatprep.subr.bf16.mxu0 %v5435
        %5764 = vmatpush1.bf16.msra.mxu0 %v5434
        %5765 = vmatprep.subr.bf16.mxu0 %v5431
        %5766 = vmatpush1.bf16.msra.mxu0 %v5430
        %5767 = vmatprep.subr.bf16.mxu0 %v5427
        %5768 = vmatpush1.bf16.msra.mxu0 %v5426
        %5769 = vmatprep.subr.bf16.mxu0 %v5423
        %5770 = vmatpush1.bf16.msra.mxu0 %v5422
        %5771 = vmatprep.subr.bf16.mxu0 %v5419
        %5772 = vmatpush1.bf16.msra.mxu0 %v5418
        %5773 = vmatprep.subr.bf16.mxu0 %v5415
        %5774 = vmatpush1.bf16.msra.mxu0 %v5414
        %5775 = vmatprep.subr.bf16.mxu0 %v5411
        %5776 = vmatpush1.bf16.msra.mxu0 %v5410
        %5777 = vmatprep.subr.bf16.mxu0 %v5407
        %5778 = vmatpush1.bf16.msra.mxu0 %v5406
        %5779 = vmatprep.subr.bf16.mxu0 %v5467
        %5780 = vmatpush2.bf16.msra.mxu0 %v5466
        %5781 = vmatprep.subr.bf16.mxu0 %v5463
        %5782 = vmatpush2.bf16.msra.mxu0 %v5462
        %5783 = vmatprep.subr.bf16.mxu0 %v5459
        %5784 = vmatpush2.bf16.msra.mxu0 %v5458
        %5785 = vmatprep.subr.bf16.mxu0 %v5455
        %5786 = vmatpush2.bf16.msra.mxu0 %v5454
        %5787 = vmatprep.subr.bf16.mxu0 %v5451
        %5788 = vmatpush2.bf16.msra.mxu0 %v5450
        %5789 = vmatprep.subr.bf16.mxu0 %v5447
        %5790 = vmatpush2.bf16.msra.mxu0 %v5446
        %5791 = vmatprep.subr.bf16.mxu0 %v5443
        %5792 = vmatpush2.bf16.msra.mxu0 %v5442
        %5793 = vmatprep.subr.bf16.mxu0 %v5439
        %5794 = vmatpush2.bf16.msra.mxu0 %v5438
        %5795 = vmatprep.mubr.bf16.mxu0 %v4888
        %5796 = vmatmul.mubr.bf16.gmra.mxu0 %v4887
        %v5797 = vpop.f32.mrf.mxu0
        %v5798 = vadd.f32 %v5672, %v5797
        %v5799 = vpop.f32.mrf.mxu0
        %v5800 = vadd.f32 %v5676, %v5799
        %v5801 = vpop.f32.mrf.mxu0
        %v5802 = vpop.f32.mrf.mxu0
        %5803 = vdwg.mxu0
        %5804 = vmatprep.subr.bf16.mxu0 %v5499
        %5805 = vmatpush1.bf16.msra.mxu0 %v5498
        %5806 = vmatprep.subr.bf16.mxu0 %v5495
        %5807 = vmatpush1.bf16.msra.mxu0 %v5494
        %5808 = vmatprep.subr.bf16.mxu0 %v5491
        %5809 = vmatpush1.bf16.msra.mxu0 %v5490
        %5810 = vmatprep.subr.bf16.mxu0 %v5487
        %5811 = vmatpush1.bf16.msra.mxu0 %v5486
        %5812 = vmatprep.subr.bf16.mxu0 %v5483
        %5813 = vmatpush1.bf16.msra.mxu0 %v5482
        %5814 = vmatprep.subr.bf16.mxu0 %v5479
        %5815 = vmatpush1.bf16.msra.mxu0 %v5478
        %5816 = vmatprep.subr.bf16.mxu0 %v5475
        %5817 = vmatpush1.bf16.msra.mxu0 %v5474
        %5818 = vmatprep.subr.bf16.mxu0 %v5471
        %5819 = vmatpush1.bf16.msra.mxu0 %v5470
        %5820 = vmatprep.subr.bf16.mxu0 %v5531
        %5821 = vmatpush2.bf16.msra.mxu0 %v5530
        %5822 = vmatprep.subr.bf16.mxu0 %v5527
        %5823 = vmatpush2.bf16.msra.mxu0 %v5526
        %5824 = vmatprep.subr.bf16.mxu0 %v5523
        %5825 = vmatpush2.bf16.msra.mxu0 %v5522
        %5826 = vmatprep.subr.bf16.mxu0 %v5519
        %5827 = vmatpush2.bf16.msra.mxu0 %v5518
        %5828 = vmatprep.subr.bf16.mxu0 %v5515
        %5829 = vmatpush2.bf16.msra.mxu0 %v5514
        %5830 = vmatprep.subr.bf16.mxu0 %v5511
        %5831 = vmatpush2.bf16.msra.mxu0 %v5510
        %5832 = vmatprep.subr.bf16.mxu0 %v5507
        %5833 = vmatpush2.bf16.msra.mxu0 %v5506
        %5834 = vmatprep.subr.bf16.mxu0 %v5503
        %5835 = vmatpush2.bf16.msra.mxu0 %v5502
        %5836 = vmatprep.mubr.bf16.mxu0 %v4890
        %5837 = vmatmul.mubr.bf16.gmra.mxu0 %v4889
        %v5838 = vpop.f32.mrf.mxu0
        %v5839 = vadd.f32 %v5798, %v5838
        %v5840 = vpop.f32.mrf.mxu0
        %v5841 = vadd.f32 %v5800, %v5840
        %v5842 = vpop.f32.mrf.mxu0
        %v5843 = vpop.f32.mrf.mxu0
        %5844 = vdwg.mxu0
        %v5845 = vmax.f32 %v5757, 0.0
        %v5846 = vmax.f32 %v5759, 0.0
        %v5847 = vmax.f32 %v5839, 0.0
        %v5848 = vmax.f32 %v5841, 0.0
        %v5849 = vpack.c.bf16 %v5845, %v5845
        %v5850 = vpack.c.bf16 %v5846, %v5846
        %v5851 = vpack.c.bf16 %v5847, %v5847
        %v5852 = vpack.c.bf16 %v5848, %v5848
        %v5853 = vld [vmem:[%s7] sm:$0xf]
        %v5854 = vld [vmem:[%s7 + $0x4] sm:$0xf]
        %v5855 = vld [vmem:[%s7 + $0x8] sm:$0xf]
        %v5856 = vld [vmem:[%s7 + $0xc] sm:$0xf]
        %v5857 = vld [vmem:[%s7 + $0x10] sm:$0xf]
        %v5858 = vld [vmem:[%s7 + $0x14] sm:$0xf]
        %v5859 = vld [vmem:[%s7 + $0x18] sm:$0xf]
        %v5860 = vld [vmem:[%s7 + $0x1c] sm:$0xf]
        %v5861 = vld [vmem:[%s7 + $0x20] sm:$0xf]
        %v5862 = vld [vmem:[%s7 + $0x24] sm:$0xf]
        %v5863 = vld [vmem:[%s7 + $0x28] sm:$0xf]
        %v5864 = vld [vmem:[%s7 + $0x2c] sm:$0xf]
        %v5865 = vld [vmem:[%s7 + $0x30] sm:$0xf]
        %v5866 = vld [vmem:[%s7 + $0x34] sm:$0xf]
        %v5867 = vld [vmem:[%s7 + $0x38] sm:$0xf]
        %v5868 = vld [vmem:[%s7 + $0x3c] sm:$0xf]
        %v5869 = vld [vmem:[%s7 + $0x40] sm:$0xf]
        %v5870 = vld [vmem:[%s7 + $0x44] sm:$0xf]
        %v5871 = vld [vmem:[%s7 + $0x48] sm:$0xf]
        %v5872 = vld [vmem:[%s7 + $0x4c] sm:$0xf]
        %v5873 = vld [vmem:[%s7 + $0x50] sm:$0xf]
        %v5874 = vld [vmem:[%s7 + $0x54] sm:$0xf]
        %v5875 = vld [vmem:[%s7 + $0x58] sm:$0xf]
        %v5876 = vld [vmem:[%s7 + $0x5c] sm:$0xf]
        %v5877 = vld [vmem:[%s7 + $0x60] sm:$0xf]
        %v5878 = vld [vmem:[%s7 + $0x64] sm:$0xf]
        %v5879 = vld [vmem:[%s7 + $0x68] sm:$0xf]
        %v5880 = vld [vmem:[%s7 + $0x6c] sm:$0xf]
        %v5881 = vld [vmem:[%s7 + $0x70] sm:$0xf]
        %v5882 = vld [vmem:[%s7 + $0x74] sm:$0xf]
        %v5883 = vld [vmem:[%s7 + $0x78] sm:$0xf]
        %v5884 = vld [vmem:[%s7 + $0x7c] sm:$0xf]
        %v5885 = vld [vmem:[%s7 + $0x80] sm:$0xf]
        %v5886 = vld [vmem:[%s7 + $0x84] sm:$0xf]
        %v5887 = vld [vmem:[%s7 + $0x88] sm:$0xf]
        %v5888 = vld [vmem:[%s7 + $0x8c] sm:$0xf]
        %v5889 = vld [vmem:[%s7 + $0x90] sm:$0xf]
        %v5890 = vld [vmem:[%s7 + $0x94] sm:$0xf]
        %v5891 = vld [vmem:[%s7 + $0x98] sm:$0xf]
        %v5892 = vld [vmem:[%s7 + $0x9c] sm:$0xf]
        %v5893 = vld [vmem:[%s7 + $0xa0] sm:$0xf]
        %v5894 = vld [vmem:[%s7 + $0xa4] sm:$0xf]
        %v5895 = vld [vmem:[%s7 + $0xa8] sm:$0xf]
        %v5896 = vld [vmem:[%s7 + $0xac] sm:$0xf]
        %v5897 = vld [vmem:[%s7 + $0xb0] sm:$0xf]
        %v5898 = vld [vmem:[%s7 + $0xb4] sm:$0xf]
        %v5899 = vld [vmem:[%s7 + $0xb8] sm:$0xf]
        %v5900 = vld [vmem:[%s7 + $0xbc] sm:$0xf]
        %v5901 = vld [vmem:[%s7 + $0xc0] sm:$0xf]
        %v5902 = vld [vmem:[%s7 + $0xc4] sm:$0xf]
        %v5903 = vld [vmem:[%s7 + $0xc8] sm:$0xf]
        %v5904 = vld [vmem:[%s7 + $0xcc] sm:$0xf]
        %v5905 = vld [vmem:[%s7 + $0xd0] sm:$0xf]
        %v5906 = vld [vmem:[%s7 + $0xd4] sm:$0xf]
        %v5907 = vld [vmem:[%s7 + $0xd8] sm:$0xf]
        %v5908 = vld [vmem:[%s7 + $0xdc] sm:$0xf]
        %v5909 = vld [vmem:[%s7 + $0xe0] sm:$0xf]
        %v5910 = vld [vmem:[%s7 + $0xe4] sm:$0xf]
        %v5911 = vld [vmem:[%s7 + $0xe8] sm:$0xf]
        %v5912 = vld [vmem:[%s7 + $0xec] sm:$0xf]
        %v5913 = vld [vmem:[%s7 + $0xf0] sm:$0xf]
        %v5914 = vld [vmem:[%s7 + $0xf4] sm:$0xf]
        %v5915 = vld [vmem:[%s7 + $0xf8] sm:$0xf]
        %v5916 = vld [vmem:[%s7 + $0xfc] sm:$0xf]
        %v5917 = vld [vmem:[%s8] sm:$0x1]
        %v5982 = vunpack.c.l.b16 %v5853
        %v5983 = vunpack.c.l.b16 %v5854
        %v5984 = vunpack.c.l.b16 %v5855
        %v5985 = vunpack.c.l.b16 %v5856
        %v5986 = vunpack.c.l.b16 %v5857
        %v5987 = vunpack.c.l.b16 %v5858
        %v5988 = vunpack.c.l.b16 %v5859
        %v5989 = vunpack.c.l.b16 %v5860
        %v5990 = vunpack.c.l.b16 %v5861
        %v5991 = vunpack.c.l.b16 %v5862
        %v5992 = vunpack.c.l.b16 %v5863
        %v5993 = vunpack.c.l.b16 %v5864
        %v5994 = vunpack.c.l.b16 %v5865
        %v5995 = vunpack.c.l.b16 %v5866
        %v5996 = vunpack.c.l.b16 %v5867
        %v5997 = vunpack.c.l.b16 %v5868
        %v5998 = vunpack.c.l.b16 %v5869
        %v5999 = vunpack.c.l.b16 %v5870
        %v6000 = vunpack.c.l.b16 %v5871
        %v6001 = vunpack.c.l.b16 %v5872
        %v6002 = vunpack.c.l.b16 %v5873
        %v6003 = vunpack.c.l.b16 %v5874
        %v6004 = vunpack.c.l.b16 %v5875
        %v6005 = vunpack.c.l.b16 %v5876
        %v6006 = vunpack.c.l.b16 %v5877
        %v6007 = vunpack.c.l.b16 %v5878
        %v6008 = vunpack.c.l.b16 %v5879
        %v6009 = vunpack.c.l.b16 %v5880
        %v6010 = vunpack.c.l.b16 %v5881
        %v6011 = vunpack.c.l.b16 %v5882
        %v6012 = vunpack.c.l.b16 %v5883
        %v6013 = vunpack.c.l.b16 %v5884
        %v6014 = vunpack.c.l.b16 %v5885
        %v6015 = vunpack.c.l.b16 %v5886
        %v6016 = vunpack.c.l.b16 %v5887
        %v6017 = vunpack.c.l.b16 %v5888
        %v6018 = vunpack.c.l.b16 %v5889
        %v6019 = vunpack.c.l.b16 %v5890
        %v6020 = vunpack.c.l.b16 %v5891
        %v6021 = vunpack.c.l.b16 %v5892
        %v6022 = vunpack.c.l.b16 %v5893
        %v6023 = vunpack.c.l.b16 %v5894
        %v6024 = vunpack.c.l.b16 %v5895
        %v6025 = vunpack.c.l.b16 %v5896
        %v6026 = vunpack.c.l.b16 %v5897
        %v6027 = vunpack.c.l.b16 %v5898
        %v6028 = vunpack.c.l.b16 %v5899
        %v6029 = vunpack.c.l.b16 %v5900
        %v6030 = vunpack.c.l.b16 %v5901
        %v6031 = vunpack.c.l.b16 %v5902
        %v6032 = vunpack.c.l.b16 %v5903
        %v6033 = vunpack.c.l.b16 %v5904
        %v6034 = vunpack.c.l.b16 %v5905
        %v6035 = vunpack.c.l.b16 %v5906
        %v6036 = vunpack.c.l.b16 %v5907
        %v6037 = vunpack.c.l.b16 %v5908
        %v6038 = vunpack.c.l.b16 %v5909
        %v6039 = vunpack.c.l.b16 %v5910
        %v6040 = vunpack.c.l.b16 %v5911
        %v6041 = vunpack.c.l.b16 %v5912
        %v6042 = vunpack.c.l.b16 %v5913
        %v6043 = vunpack.c.l.b16 %v5914
        %v6044 = vunpack.c.l.b16 %v5915
        %v6045 = vunpack.c.l.b16 %v5916
        %v6046 = vpack.c.b16 %v5983, %v5982
        %v6047 = vpack.c.b16 %v5985, %v5984
        %v6048 = vpack.c.b16 %v5987, %v5986
        %v6049 = vpack.c.b16 %v5989, %v5988
        %v6050 = vpack.c.b16 %v5991, %v5990
        %v6051 = vpack.c.b16 %v5993, %v5992
        %v6052 = vpack.c.b16 %v5995, %v5994
        %v6053 = vpack.c.b16 %v5997, %v5996
        %v6054 = vpack.c.b16 %v5999, %v5998
        %v6055 = vpack.c.b16 %v6001, %v6000
        %v6056 = vpack.c.b16 %v6003, %v6002
        %v6057 = vpack.c.b16 %v6005, %v6004
        %v6058 = vpack.c.b16 %v6007, %v6006
        %v6059 = vpack.c.b16 %v6009, %v6008
        %v6060 = vpack.c.b16 %v6011, %v6010
        %v6061 = vpack.c.b16 %v6013, %v6012
        %v6062 = vpack.c.b16 %v6015, %v6014
        %v6063 = vpack.c.b16 %v6017, %v6016
        %v6064 = vpack.c.b16 %v6019, %v6018
        %v6065 = vpack.c.b16 %v6021, %v6020
        %v6066 = vpack.c.b16 %v6023, %v6022
        %v6067 = vpack.c.b16 %v6025, %v6024
        %v6068 = vpack.c.b16 %v6027, %v6026
        %v6069 = vpack.c.b16 %v6029, %v6028
        %v6070 = vpack.c.b16 %v6031, %v6030
        %v6071 = vpack.c.b16 %v6033, %v6032
        %v6072 = vpack.c.b16 %v6035, %v6034
        %v6073 = vpack.c.b16 %v6037, %v6036
        %v6074 = vpack.c.b16 %v6039, %v6038
        %v6075 = vpack.c.b16 %v6041, %v6040
        %v6076 = vpack.c.b16 %v6043, %v6042
        %v6077 = vpack.c.b16 %v6045, %v6044
        %6110 = vmatprep.subr.bf16.mxu0 0
        %6111 = vmatpush1.bf16.msra.mxu0 %v6053
        %6112 = vmatprep.subr.bf16.mxu0 0
        %6113 = vmatpush1.bf16.msra.mxu0 %v6052
        %6114 = vmatprep.subr.bf16.mxu0 0
        %6115 = vmatpush1.bf16.msra.mxu0 %v6051
        %6116 = vmatprep.subr.bf16.mxu0 0
        %6117 = vmatpush1.bf16.msra.mxu0 %v6050
        %6118 = vmatprep.subr.bf16.mxu0 0
        %6119 = vmatpush1.bf16.msra.mxu0 %v6049
        %6120 = vmatprep.subr.bf16.mxu0 0
        %6121 = vmatpush1.bf16.msra.mxu0 %v6048
        %6122 = vmatprep.subr.bf16.mxu0 0
        %6123 = vmatpush1.bf16.msra.mxu0 %v6047
        %6124 = vmatprep.subr.bf16.mxu0 0
        %6125 = vmatpush1.bf16.msra.mxu0 %v6046
        %6126 = vmatprep.subr.bf16.mxu0 0
        %6127 = vmatpush2.bf16.msra.mxu0 %v6061
        %6128 = vmatprep.subr.bf16.mxu0 0
        %6129 = vmatpush2.bf16.msra.mxu0 %v6060
        %6130 = vmatprep.subr.bf16.mxu0 0
        %6131 = vmatpush2.bf16.msra.mxu0 %v6059
        %6132 = vmatprep.subr.bf16.mxu0 0
        %6133 = vmatpush2.bf16.msra.mxu0 %v6058
        %6134 = vmatprep.subr.bf16.mxu0 0
        %6135 = vmatpush2.bf16.msra.mxu0 %v6057
        %6136 = vmatprep.subr.bf16.mxu0 0
        %6137 = vmatpush2.bf16.msra.mxu0 %v6056
        %6138 = vmatprep.subr.bf16.mxu0 0
        %6139 = vmatpush2.bf16.msra.mxu0 %v6055
        %6140 = vmatprep.subr.bf16.mxu0 0
        %6141 = vmatpush2.bf16.msra.mxu0 %v6054
        %6142 = vmatprep.mubr.bf16.mxu0 %v5850
        %6143 = vmatmul.mubr.bf16.gmra.mxu0 %v5849
        %v6144 = vpop.f32.mrf.mxu0
        %v6145 = vadd.f32 %v5917, %v6144
        %v6146 = vpop.f32.mrf.mxu0
        %v6147 = vpop.f32.mrf.mxu0
        %v6148 = vpop.f32.mrf.mxu0
        %6149 = vdwg.mxu0
        %6150 = vmatprep.subr.bf16.mxu0 0
        %6151 = vmatpush1.bf16.msra.mxu0 %v6069
        %6152 = vmatprep.subr.bf16.mxu0 0
        %6153 = vmatpush1.bf16.msra.mxu0 %v6068
        %6154 = vmatprep.subr.bf16.mxu0 0
        %6155 = vmatpush1.bf16.msra.mxu0 %v6067
        %6156 = vmatprep.subr.bf16.mxu0 0
        %6157 = vmatpush1.bf16.msra.mxu0 %v6066
        %6158 = vmatprep.subr.bf16.mxu0 0
        %6159 = vmatpush1.bf16.msra.mxu0 %v6065
        %6160 = vmatprep.subr.bf16.mxu0 0
        %6161 = vmatpush1.bf16.msra.mxu0 %v6064
        %6162 = vmatprep.subr.bf16.mxu0 0
        %6163 = vmatpush1.bf16.msra.mxu0 %v6063
        %6164 = vmatprep.subr.bf16.mxu0 0
        %6165 = vmatpush1.bf16.msra.mxu0 %v6062
        %6166 = vmatprep.subr.bf16.mxu0 0
        %6167 = vmatpush2.bf16.msra.mxu0 %v6077
        %6168 = vmatprep.subr.bf16.mxu0 0
        %6169 = vmatpush2.bf16.msra.mxu0 %v6076
        %6170 = vmatprep.subr.bf16.mxu0 0
        %6171 = vmatpush2.bf16.msra.mxu0 %v6075
        %6172 = vmatprep.subr.bf16.mxu0 0
        %6173 = vmatpush2.bf16.msra.mxu0 %v6074
        %6174 = vmatprep.subr.bf16.mxu0 0
        %6175 = vmatpush2.bf16.msra.mxu0 %v6073
        %6176 = vmatprep.subr.bf16.mxu0 0
        %6177 = vmatpush2.bf16.msra.mxu0 %v6072
        %6178 = vmatprep.subr.bf16.mxu0 0
        %6179 = vmatpush2.bf16.msra.mxu0 %v6071
        %6180 = vmatprep.subr.bf16.mxu0 0
        %6181 = vmatpush2.bf16.msra.mxu0 %v6070
        %6182 = vmatprep.mubr.bf16.mxu0 %v5852
        %6183 = vmatmul.mubr.bf16.gmra.mxu0 %v5851
        %v6184 = vpop.f32.mrf.mxu0
        %v6185 = vadd.f32 %v6145, %v6184
        %v6186 = vpop.f32.mrf.mxu0
        %v6187 = vpop.f32.mrf.mxu0
        %v6188 = vpop.f32.mrf.mxu0
        %6189 = vdwg.mxu0
        %6190 = vst [vmem:[%s339] sm:$0x1] %v6185
        %s6191 = sand.u32 %s226, 1
        %s6192 = scalar_lea.sflag [#allocation9], %s6191
        %s6193 = sand.u32 %s226, 1
        %s6194 = scalar_lea.vmem [#allocation10], %s6193
        // Predicated region
        $region61: #{simple_cnn_forward.1} parent=55 // pred_check
          %p6195 = pneg %p236
        $region62: #{simple_cnn_forward.1} parent=55 // pred_check_branch
          %6197 = sbr.rel (%p6195) target = $region64
        $region63: #{simple_cnn_forward.1} parent=55 // pred_region
          %s6199 = ssub.s32 16, 16
          %6200 = vsyncadd %s6192, %s6199
          %s6201 = smul.addr %s24, 16
          %s6202 = scalar_lea.hbm %s9, %s6201
          %s6204 = sshll.u32 %s6194, 4
          %s6205 = int_to_ptr.vmem [resolvable:$true] %s6204
          %6207 = dma.vmem_to_hbm [thread:$0]  %s6205, 16, %s6202, %s6192
        $region64: #{simple_cnn_forward.1} parent=55 // pred_fallthru
          _
      $region56: #{simple_cnn_forward.1} parent=5 // pred_fallthru
        _
      %p6208 = scmp.le.s32.totalorder 2, %s19
      // Predicated region
      $region65: #{simple_cnn_forward.1} parent=5 // pred_check
        %p6209 = pneg %p6208
      $region66: #{simple_cnn_forward.1} parent=5 // pred_check_branch
        %6211 = sbr.rel (%p6209) target = $region68
      $region67: #{simple_cnn_forward.1} parent=5 // pred_region
        %s6212 = ssub.s32 %s19, 2
        // Predicated region
        $region69: #{simple_cnn_forward.1} parent=67 // pred_check
          %p6213 = pneg %p242
        $region70: #{simple_cnn_forward.1} parent=67 // pred_check_branch
          %6215 = sbr.rel (%p6213) target = $region72
        $region71: #{simple_cnn_forward.1} parent=67 // pred_region
          %s6216 = sand.u32 %s227, 1
          %s6217 = scalar_lea.sflag [#allocation9], %s6216
          %s6218 = sand.u32 %s227, 1
          %s6219 = scalar_lea.vmem [#allocation10], %s6218
          %6220 = dma.done %s6217, 16
        $region72: #{simple_cnn_forward.1} parent=67 // pred_fallthru
          _
      $region68: #{simple_cnn_forward.1} parent=5 // pred_fallthru
        _
    $region6: #{simple_cnn_forward.1} parent=1 // loop_footer
      %s23 = sadd.s32 1, %s19
    $region7: #{simple_cnn_forward.1} parent=1 // loop_footer_branch
      %18 = sbr.rel target = $region3
    $region8: #{simple_cnn_forward.1} parent=1 // loop_exit
      _
    %6221 = vsyncpa [#allocation8], 1
    %s6222 = scalar_lea.sflag [#allocation8], 1
    %6223 = vsyncpa %s6222, 1
    %6224 = vsyncpa [#allocation9], 1
    %s6225 = scalar_lea.sflag [#allocation9], 1
    %6226 = vsyncpa %s6225, 1

</llo_original>
